<compile_context>
chip_gen: v6e
topology: v6e:2x2x1
jax: 0.10.0
libtpu: 0.0.40
codegen_flags: <defaults>
</compile_context>

<pallas_src>
import jax
import jax.numpy as jnp
from jax.experimental import pallas as pl
from jax.experimental.pallas import tpu as pltpu

LN_EPS = 1e-5          # nn.LayerNorm default
ATTN_EPS = 1e-6        # fast_transformers LinearAttention eps
MXU_DTYPE = jnp.bfloat16
N_LAYER_PARAMS = 16    # params per encoder layer (see init_params ordering)


# ----------------------------- shared math ---------------------------------
def _mm(a, b):
    """MXU matmul: bf16 operands, f32 accumulation."""
    return jnp.dot(a.astype(MXU_DTYPE), b.astype(MXU_DTYPE),
                   preferred_element_type=jnp.float32)


def _layernorm(h, gamma, beta):
    d = h.shape[-1]
    s1 = jnp.sum(h, axis=-1, keepdims=True)
    s2 = jnp.sum(h * h, axis=-1, keepdims=True)
    mean = s1 / d
    var = s2 / d - mean * mean
    inv = jax.lax.rsqrt(var + LN_EPS)
    return ((h - mean) * inv) * gamma + beta


def _gelu(x):
    # TODO(synk): F.gelu is exact (erf-based); tanh approximation used here.
    c = 0.7978845608028654
    return 0.5 * x * (1.0 + jnp.tanh(c * (x + 0.044715 * x * x * x)))


def _elu_plus_one(x):
    # elu(x) + 1  (feature map of fast_transformers linear attention)
    return jnp.where(x > 0, x + 1.0, jnp.exp(x))


def _encoder_layer(x, key_valid, head_mask, p):
    (wq, bq, wk, bk, wv, bv, wo, bo,
     g1, be1, w1, b1, w2, b2, g2, be2) = p

    # ---- linear attention --------------------------------------------------
    q = _elu_plus_one(_mm(x, wq) + bq)                 # [L, D]
    k = _elu_plus_one(_mm(x, wk) + bk) * key_valid     # [L, D], padded keys zeroed
    v = _mm(x, wv) + bv                                # [L, D]

    kv = _mm(jnp.transpose(k), v)                      # [D, D]: sum_s K[s,i] V[s,j]
    kv = kv.astype(MXU_DTYPE) * head_mask              # keep per-head diagonal blocks
    num = _mm(q, kv)                                   # [L, D]

    ksum = jnp.sum(k, axis=0, keepdims=True)           # [1, D]
    den = _mm(q * ksum, head_mask) + ATTN_EPS          # [L, D] per-head normaliser
    attn = _mm(num / den, wo) + bo                     # [L, D]

    # TODO(synk): dropout (p=0.5) omitted -- eval-mode forward (identity).
    x = x + attn
    x = _layernorm(x, g1, be1)

    # ---- feed forward (gelu) ------------------------------------------------
    h = _gelu(_mm(x, w1) + b1)                         # [L, d_hid]
    h = _mm(h, w2) + b2                                # [L, D]
    return _layernorm(x + h, g2, be2)


def _encoder_math(x, key_valid, head_mask, layer_params, final_g, final_b):
    for p in layer_params:
        x = _encoder_layer(x, key_valid, head_mask, p)
    return _layernorm(x, final_g, final_b)             # final encoder LayerNorm


# ------------------------------ Pallas kernel -------------------------------
def _make_kernel(nlayers):
    def kernel(*refs):
        out_ref = refs[-1]
        x_ref, valid_ref, hm_ref = refs[0], refs[1], refs[2]
        vals = [r[...] for r in refs[3:-1]]
        layer_params = [tuple(vals[i * N_LAYER_PARAMS:(i + 1) * N_LAYER_PARAMS])
                        for i in range(nlayers)]
        final_g, final_b = vals[nlayers * N_LAYER_PARAMS:]

        x = x_ref[0]                 # [L, D] f32
        key_valid = valid_ref[0]     # [L, 1] f32 (1 = real token, 0 = padding)
        y = _encoder_math(x, key_valid, hm_ref[...], layer_params,
                          final_g, final_b)
        out_ref[0] = y.astype(out_ref.dtype)
    return kernel


def fast_transformer_encoder(src, src_key_padding_mask, params):
    """src: [N, L, d_model] f32; src_key_padding_mask: [N, L] bool (True = pad)."""
    N, L, D = src.shape
    nlayers = len(params["layers"])

    # LengthMask float matrix == ~padding mask (padding is trailing-only).
    key_valid = (~src_key_padding_mask).astype(jnp.float32)[..., None]   # [N, L, 1]

    flat = [params["head_mask"]]
    for lp in params["layers"]:
        flat.extend(lp)
    flat.extend([params["final_g"], params["final_b"]])

    def resident_spec(a):
        ndim = a.ndim
        return pl.BlockSpec(a.shape, lambda n: (0,) * ndim)   # VMEM-resident

    return pl.pallas_call(
        _make_kernel(nlayers),
        out_shape=jax.ShapeDtypeStruct((N, L, D), jnp.float32),
        grid=(N,),
        in_specs=[pl.BlockSpec((1, L, D), lambda n: (n, 0, 0)),
                  pl.BlockSpec((1, L, 1), lambda n: (n, 0, 0))]
                 + [resident_spec(a) for a in flat],
        out_specs=pl.BlockSpec((1, L, D), lambda n: (n, 0, 0)),
        compiler_params=pltpu.CompilerParams(
            dimension_semantics=("parallel",),
            vmem_limit_bytes=48 * 1024 * 1024),
    )(src, key_valid, *flat)


# ------------------------------ params / demo --------------------------------
def init_params(key, d_model, nhead, d_hid, nlayers):
    """Deterministic synthetic params, PyTorch-style init, pre-transposed."""
    dk = d_model // nhead

    def linear(k, fan_in, fan_out):
        kw, kb = jax.random.split(k)
        bound = 1.0 / (fan_in ** 0.5)
        w = jax.random.uniform(kw, (fan_out, fan_in), jnp.float32, -bound, bound)
        b = jax.random.uniform(kb, (fan_out,), jnp.float32, -bound, bound)
        # transpose to [in, out]; bf16 for the MXU; bias as a lane-dense [1, out] row
        return w.T.astype(MXU_DTYPE), b.reshape(1, fan_out)

    ones = jnp.ones((1, d_model), jnp.float32)
    zeros = jnp.zeros((1, d_model), jnp.float32)

    layers = []
    for lk in jax.random.split(key, nlayers):
        k_q, k_k, k_v, k_o, k_1, k_2 = jax.random.split(lk, 6)
        wq, bq = linear(k_q, d_model, d_model)
        wk, bk = linear(k_k, d_model, d_model)
        wv, bv = linear(k_v, d_model, d_model)
        wo, bo = linear(k_o, d_model, d_model)
        w1, b1 = linear(k_1, d_model, d_hid)
        w2, b2 = linear(k_2, d_hid, d_model)
        layers.append((wq, bq, wk, bk, wv, bv, wo, bo,
                       ones, zeros, w1, b1, w2, b2, ones, zeros))

    heads = jnp.arange(d_model) // dk
    head_mask = (heads[:, None] == heads[None, :]).astype(MXU_DTYPE)    # [D, D]

    return {"layers": layers, "head_mask": head_mask,
            "final_g": ones, "final_b": zeros}


def reference_forward(src, src_key_padding_mask, params):
    """Pure-JAX reference using the same math (bf16 MXU operands, f32 accum)."""
    key_valid = (~src_key_padding_mask).astype(jnp.float32)[..., None]
    outs = [_encoder_math(src[n], key_valid[n], params["head_mask"],
                          params["layers"], params["final_g"], params["final_b"])
            for n in range(src.shape[0])]
    return jnp.stack(outs)


if __name__ == "__main__":
    d_model, nhead, d_hid, nlayers = 32, 4, 64, 2
    N, L = 2, 8

    key = jax.random.PRNGKey(0)
    kx, kp = jax.random.split(key)
    src = jax.random.normal(kx, (N, L, d_model), jnp.float32)
    # trailing padding only (the module rejects padding in the middle)
    pad = jnp.array([[False] * L,
                     [False] * (L - 2) + [True] * 2])
    params = init_params(kp, d_model, nhead, d_hid, nlayers)

    out = fast_transformer_encoder(src, pad, params)
    jax.block_until_ready(out)

    ref = reference_forward(src, pad, params)
    assert out.shape == (N, L, d_model)
    err = float(jnp.max(jnp.abs(out - ref)))
    assert jnp.allclose(out, ref, atol=1e-3, rtol=1e-3), err
    print("KERNEL_OK")
</pallas_src>

<mosaic_0001>
module attributes {stable_mosaic.version = 11 : i64} {
  func.func @kernel(%arg0: i32, %arg1: memref<1x8x32xf32, #tpu.memory_space<vmem>>, %arg2: memref<1x8x1xf32, #tpu.memory_space<vmem>>, %arg3: memref<32x32xbf16, #tpu.memory_space<vmem>>, %arg4: memref<32x32xbf16, #tpu.memory_space<vmem>>, %arg5: memref<1x32xf32, #tpu.memory_space<vmem>>, %arg6: memref<32x32xbf16, #tpu.memory_space<vmem>>, %arg7: memref<1x32xf32, #tpu.memory_space<vmem>>, %arg8: memref<32x32xbf16, #tpu.memory_space<vmem>>, %arg9: memref<1x32xf32, #tpu.memory_space<vmem>>, %arg10: memref<32x32xbf16, #tpu.memory_space<vmem>>, %arg11: memref<1x32xf32, #tpu.memory_space<vmem>>, %arg12: memref<1x32xf32, #tpu.memory_space<vmem>>, %arg13: memref<1x32xf32, #tpu.memory_space<vmem>>, %arg14: memref<32x64xbf16, #tpu.memory_space<vmem>>, %arg15: memref<1x64xf32, #tpu.memory_space<vmem>>, %arg16: memref<64x32xbf16, #tpu.memory_space<vmem>>, %arg17: memref<1x32xf32, #tpu.memory_space<vmem>>, %arg18: memref<1x32xf32, #tpu.memory_space<vmem>>, %arg19: memref<1x32xf32, #tpu.memory_space<vmem>>, %arg20: memref<32x32xbf16, #tpu.memory_space<vmem>>, %arg21: memref<1x32xf32, #tpu.memory_space<vmem>>, %arg22: memref<32x32xbf16, #tpu.memory_space<vmem>>, %arg23: memref<1x32xf32, #tpu.memory_space<vmem>>, %arg24: memref<32x32xbf16, #tpu.memory_space<vmem>>, %arg25: memref<1x32xf32, #tpu.memory_space<vmem>>, %arg26: memref<32x32xbf16, #tpu.memory_space<vmem>>, %arg27: memref<1x32xf32, #tpu.memory_space<vmem>>, %arg28: memref<1x32xf32, #tpu.memory_space<vmem>>, %arg29: memref<1x32xf32, #tpu.memory_space<vmem>>, %arg30: memref<32x64xbf16, #tpu.memory_space<vmem>>, %arg31: memref<1x64xf32, #tpu.memory_space<vmem>>, %arg32: memref<64x32xbf16, #tpu.memory_space<vmem>>, %arg33: memref<1x32xf32, #tpu.memory_space<vmem>>, %arg34: memref<1x32xf32, #tpu.memory_space<vmem>>, %arg35: memref<1x32xf32, #tpu.memory_space<vmem>>, %arg36: memref<1x32xf32, #tpu.memory_space<vmem>>, %arg37: memref<1x32xf32, #tpu.memory_space<vmem>>, %arg38: memref<1x8x32xf32, #tpu.memory_space<vmem>>) attributes {dimension_semantics = [#tpu.dimension_semantics<parallel>], iteration_bounds = array<i64: 2>, scalar_prefetch = 0 : i64, scratch_operands = 0 : i64, tpu.core_type = #tpu.core_type<tc>, window_params = [{transform_indices = @transform_0, window_bounds = array<i64: 1, 8, 32>}, {transform_indices = @transform_1, window_bounds = array<i64: 1, 8, 1>}, {pipeline_mode = #tpu.pipeline_mode<synchronous>, transform_indices = @transform_2, window_bounds = array<i64: 32, 32>}, {pipeline_mode = #tpu.pipeline_mode<synchronous>, transform_indices = @transform_3, window_bounds = array<i64: 32, 32>}, {pipeline_mode = #tpu.pipeline_mode<synchronous>, transform_indices = @transform_4, window_bounds = array<i64: 1, 32>}, {pipeline_mode = #tpu.pipeline_mode<synchronous>, transform_indices = @transform_5, window_bounds = array<i64: 32, 32>}, {pipeline_mode = #tpu.pipeline_mode<synchronous>, transform_indices = @transform_6, window_bounds = array<i64: 1, 32>}, {pipeline_mode = #tpu.pipeline_mode<synchronous>, transform_indices = @transform_7, window_bounds = array<i64: 32, 32>}, {pipeline_mode = #tpu.pipeline_mode<synchronous>, transform_indices = @transform_8, window_bounds = array<i64: 1, 32>}, {pipeline_mode = #tpu.pipeline_mode<synchronous>, transform_indices = @transform_9, window_bounds = array<i64: 32, 32>}, {pipeline_mode = #tpu.pipeline_mode<synchronous>, transform_indices = @transform_10, window_bounds = array<i64: 1, 32>}, {pipeline_mode = #tpu.pipeline_mode<synchronous>, transform_indices = @transform_11, window_bounds = array<i64: 1, 32>}, {pipeline_mode = #tpu.pipeline_mode<synchronous>, transform_indices = @transform_12, window_bounds = array<i64: 1, 32>}, {pipeline_mode = #tpu.pipeline_mode<synchronous>, transform_indices = @transform_13, window_bounds = array<i64: 32, 64>}, {pipeline_mode = #tpu.pipeline_mode<synchronous>, transform_indices = @transform_14, window_bounds = array<i64: 1, 64>}, {pipeline_mode = #tpu.pipeline_mode<synchronous>, transform_indices = @transform_15, window_bounds = array<i64: 64, 32>}, {pipeline_mode = #tpu.pipeline_mode<synchronous>, transform_indices = @transform_16, window_bounds = array<i64: 1, 32>}, {pipeline_mode = #tpu.pipeline_mode<synchronous>, transform_indices = @transform_17, window_bounds = array<i64: 1, 32>}, {pipeline_mode = #tpu.pipeline_mode<synchronous>, transform_indices = @transform_18, window_bounds = array<i64: 1, 32>}, {pipeline_mode = #tpu.pipeline_mode<synchronous>, transform_indices = @transform_19, window_bounds = array<i64: 32, 32>}, {pipeline_mode = #tpu.pipeline_mode<synchronous>, transform_indices = @transform_20, window_bounds = array<i64: 1, 32>}, {pipeline_mode = #tpu.pipeline_mode<synchronous>, transform_indices = @transform_21, window_bounds = array<i64: 32, 32>}, {pipeline_mode = #tpu.pipeline_mode<synchronous>, transform_indices = @transform_22, window_bounds = array<i64: 1, 32>}, {pipeline_mode = #tpu.pipeline_mode<synchronous>, transform_indices = @transform_23, window_bounds = array<i64: 32, 32>}, {pipeline_mode = #tpu.pipeline_mode<synchronous>, transform_indices = @transform_24, window_bounds = array<i64: 1, 32>}, {pipeline_mode = #tpu.pipeline_mode<synchronous>, transform_indices = @transform_25, window_bounds = array<i64: 32, 32>}, {pipeline_mode = #tpu.pipeline_mode<synchronous>, transform_indices = @transform_26, window_bounds = array<i64: 1, 32>}, {pipeline_mode = #tpu.pipeline_mode<synchronous>, transform_indices = @transform_27, window_bounds = array<i64: 1, 32>}, {pipeline_mode = #tpu.pipeline_mode<synchronous>, transform_indices = @transform_28, window_bounds = array<i64: 1, 32>}, {pipeline_mode = #tpu.pipeline_mode<synchronous>, transform_indices = @transform_29, window_bounds = array<i64: 32, 64>}, {pipeline_mode = #tpu.pipeline_mode<synchronous>, transform_indices = @transform_30, window_bounds = array<i64: 1, 64>}, {pipeline_mode = #tpu.pipeline_mode<synchronous>, transform_indices = @transform_31, window_bounds = array<i64: 64, 32>}, {pipeline_mode = #tpu.pipeline_mode<synchronous>, transform_indices = @transform_32, window_bounds = array<i64: 1, 32>}, {pipeline_mode = #tpu.pipeline_mode<synchronous>, transform_indices = @transform_33, window_bounds = array<i64: 1, 32>}, {pipeline_mode = #tpu.pipeline_mode<synchronous>, transform_indices = @transform_34, window_bounds = array<i64: 1, 32>}, {pipeline_mode = #tpu.pipeline_mode<synchronous>, transform_indices = @transform_35, window_bounds = array<i64: 1, 32>}, {pipeline_mode = #tpu.pipeline_mode<synchronous>, transform_indices = @transform_36, window_bounds = array<i64: 1, 32>}, {transform_indices = @transform_37, window_bounds = array<i64: 1, 8, 32>}]} {
    %c0 = arith.constant 0 : index
    %c0_0 = arith.constant 0 : index
    %0 = vector.load %arg4[%c0, %c0_0] : memref<32x32xbf16, #tpu.memory_space<vmem>>, vector<32x32xbf16>
    %c0_1 = arith.constant 0 : index
    %c0_2 = arith.constant 0 : index
    %1 = vector.load %arg5[%c0_1, %c0_2] : memref<1x32xf32, #tpu.memory_space<vmem>>, vector<1x32xf32>
    %c0_3 = arith.constant 0 : index
    %c0_4 = arith.constant 0 : index
    %2 = vector.load %arg6[%c0_3, %c0_4] : memref<32x32xbf16, #tpu.memory_space<vmem>>, vector<32x32xbf16>
    %c0_5 = arith.constant 0 : index
    %c0_6 = arith.constant 0 : index
    %3 = vector.load %arg7[%c0_5, %c0_6] : memref<1x32xf32, #tpu.memory_space<vmem>>, vector<1x32xf32>
    %c0_7 = arith.constant 0 : index
    %c0_8 = arith.constant 0 : index
    %4 = vector.load %arg8[%c0_7, %c0_8] : memref<32x32xbf16, #tpu.memory_space<vmem>>, vector<32x32xbf16>
    %c0_9 = arith.constant 0 : index
    %c0_10 = arith.constant 0 : index
    %5 = vector.load %arg9[%c0_9, %c0_10] : memref<1x32xf32, #tpu.memory_space<vmem>>, vector<1x32xf32>
    %c0_11 = arith.constant 0 : index
    %c0_12 = arith.constant 0 : index
    %6 = vector.load %arg10[%c0_11, %c0_12] : memref<32x32xbf16, #tpu.memory_space<vmem>>, vector<32x32xbf16>
    %c0_13 = arith.constant 0 : index
    %c0_14 = arith.constant 0 : index
    %7 = vector.load %arg11[%c0_13, %c0_14] : memref<1x32xf32, #tpu.memory_space<vmem>>, vector<1x32xf32>
    %c0_15 = arith.constant 0 : index
    %c0_16 = arith.constant 0 : index
    %8 = vector.load %arg12[%c0_15, %c0_16] : memref<1x32xf32, #tpu.memory_space<vmem>>, vector<1x32xf32>
    %c0_17 = arith.constant 0 : index
    %c0_18 = arith.constant 0 : index
    %9 = vector.load %arg13[%c0_17, %c0_18] : memref<1x32xf32, #tpu.memory_space<vmem>>, vector<1x32xf32>
    %c0_19 = arith.constant 0 : index
    %c0_20 = arith.constant 0 : index
    %10 = vector.load %arg14[%c0_19, %c0_20] : memref<32x64xbf16, #tpu.memory_space<vmem>>, vector<32x64xbf16>
    %c0_21 = arith.constant 0 : index
    %c0_22 = arith.constant 0 : index
    %11 = vector.load %arg15[%c0_21, %c0_22] : memref<1x64xf32, #tpu.memory_space<vmem>>, vector<1x64xf32>
    %c0_23 = arith.constant 0 : index
    %c0_24 = arith.constant 0 : index
    %12 = vector.load %arg16[%c0_23, %c0_24] : memref<64x32xbf16, #tpu.memory_space<vmem>>, vector<64x32xbf16>
    %c0_25 = arith.constant 0 : index
    %c0_26 = arith.constant 0 : index
    %13 = vector.load %arg17[%c0_25, %c0_26] : memref<1x32xf32, #tpu.memory_space<vmem>>, vector<1x32xf32>
    %c0_27 = arith.constant 0 : index
    %c0_28 = arith.constant 0 : index
    %14 = vector.load %arg18[%c0_27, %c0_28] : memref<1x32xf32, #tpu.memory_space<vmem>>, vector<1x32xf32>
    %c0_29 = arith.constant 0 : index
    %c0_30 = arith.constant 0 : index
    %15 = vector.load %arg19[%c0_29, %c0_30] : memref<1x32xf32, #tpu.memory_space<vmem>>, vector<1x32xf32>
    %c0_31 = arith.constant 0 : index
    %c0_32 = arith.constant 0 : index
    %16 = vector.load %arg20[%c0_31, %c0_32] : memref<32x32xbf16, #tpu.memory_space<vmem>>, vector<32x32xbf16>
    %c0_33 = arith.constant 0 : index
    %c0_34 = arith.constant 0 : index
    %17 = vector.load %arg21[%c0_33, %c0_34] : memref<1x32xf32, #tpu.memory_space<vmem>>, vector<1x32xf32>
    %c0_35 = arith.constant 0 : index
    %c0_36 = arith.constant 0 : index
    %18 = vector.load %arg22[%c0_35, %c0_36] : memref<32x32xbf16, #tpu.memory_space<vmem>>, vector<32x32xbf16>
    %c0_37 = arith.constant 0 : index
    %c0_38 = arith.constant 0 : index
    %19 = vector.load %arg23[%c0_37, %c0_38] : memref<1x32xf32, #tpu.memory_space<vmem>>, vector<1x32xf32>
    %c0_39 = arith.constant 0 : index
    %c0_40 = arith.constant 0 : index
    %20 = vector.load %arg24[%c0_39, %c0_40] : memref<32x32xbf16, #tpu.memory_space<vmem>>, vector<32x32xbf16>
    %c0_41 = arith.constant 0 : index
    %c0_42 = arith.constant 0 : index
    %21 = vector.load %arg25[%c0_41, %c0_42] : memref<1x32xf32, #tpu.memory_space<vmem>>, vector<1x32xf32>
    %c0_43 = arith.constant 0 : index
    %c0_44 = arith.constant 0 : index
    %22 = vector.load %arg26[%c0_43, %c0_44] : memref<32x32xbf16, #tpu.memory_space<vmem>>, vector<32x32xbf16>
    %c0_45 = arith.constant 0 : index
    %c0_46 = arith.constant 0 : index
    %23 = vector.load %arg27[%c0_45, %c0_46] : memref<1x32xf32, #tpu.memory_space<vmem>>, vector<1x32xf32>
    %c0_47 = arith.constant 0 : index
    %c0_48 = arith.constant 0 : index
    %24 = vector.load %arg28[%c0_47, %c0_48] : memref<1x32xf32, #tpu.memory_space<vmem>>, vector<1x32xf32>
    %c0_49 = arith.constant 0 : index
    %c0_50 = arith.constant 0 : index
    %25 = vector.load %arg29[%c0_49, %c0_50] : memref<1x32xf32, #tpu.memory_space<vmem>>, vector<1x32xf32>
    %c0_51 = arith.constant 0 : index
    %c0_52 = arith.constant 0 : index
    %26 = vector.load %arg30[%c0_51, %c0_52] : memref<32x64xbf16, #tpu.memory_space<vmem>>, vector<32x64xbf16>
    %c0_53 = arith.constant 0 : index
    %c0_54 = arith.constant 0 : index
    %27 = vector.load %arg31[%c0_53, %c0_54] : memref<1x64xf32, #tpu.memory_space<vmem>>, vector<1x64xf32>
    %c0_55 = arith.constant 0 : index
    %c0_56 = arith.constant 0 : index
    %28 = vector.load %arg32[%c0_55, %c0_56] : memref<64x32xbf16, #tpu.memory_space<vmem>>, vector<64x32xbf16>
    %c0_57 = arith.constant 0 : index
    %c0_58 = arith.constant 0 : index
    %29 = vector.load %arg33[%c0_57, %c0_58] : memref<1x32xf32, #tpu.memory_space<vmem>>, vector<1x32xf32>
    %c0_59 = arith.constant 0 : index
    %c0_60 = arith.constant 0 : index
    %30 = vector.load %arg34[%c0_59, %c0_60] : memref<1x32xf32, #tpu.memory_space<vmem>>, vector<1x32xf32>
    %c0_61 = arith.constant 0 : index
    %c0_62 = arith.constant 0 : index
    %31 = vector.load %arg35[%c0_61, %c0_62] : memref<1x32xf32, #tpu.memory_space<vmem>>, vector<1x32xf32>
    %c0_63 = arith.constant 0 : index
    %c0_64 = arith.constant 0 : index
    %32 = vector.load %arg36[%c0_63, %c0_64] : memref<1x32xf32, #tpu.memory_space<vmem>>, vector<1x32xf32>
    %c0_65 = arith.constant 0 : index
    %c0_66 = arith.constant 0 : index
    %33 = vector.load %arg37[%c0_65, %c0_66] : memref<1x32xf32, #tpu.memory_space<vmem>>, vector<1x32xf32>
    %c0_67 = arith.constant 0 : index
    %c0_68 = arith.constant 0 : index
    %c0_69 = arith.constant 0 : index
    %34 = vector.load %arg1[%c0_67, %c0_68, %c0_69] : memref<1x8x32xf32, #tpu.memory_space<vmem>>, vector<1x8x32xf32>
    %35 = vector.shape_cast %34 : vector<1x8x32xf32> to vector<8x32xf32>
    %c0_70 = arith.constant 0 : index
    %c0_71 = arith.constant 0 : index
    %c0_72 = arith.constant 0 : index
    %36 = vector.load %arg2[%c0_70, %c0_71, %c0_72] : memref<1x8x1xf32, #tpu.memory_space<vmem>>, vector<1x8x1xf32>
    %37 = vector.shape_cast %36 : vector<1x8x1xf32> to vector<8x1xf32>
    %c0_73 = arith.constant 0 : index
    %c0_74 = arith.constant 0 : index
    %38 = vector.load %arg3[%c0_73, %c0_74] : memref<32x32xbf16, #tpu.memory_space<vmem>>, vector<32x32xbf16>
    %39 = arith.truncf %35 : vector<8x32xf32> to vector<8x32xbf16>
    %cst = arith.constant dense<0.000000e+00> : vector<8x32xf32>
    %40 = tpu.matmul %39, %0, %cst {dimension_numbers = #tpu.dot_dimension_numbers<[1], [0], [0], [1], [0, 0, 1, 1], [], []>} : vector<8x32xbf16>, vector<32x32xbf16>, vector<8x32xf32> -> vector<8x32xf32>
    %41 = vector.broadcast %1 : vector<1x32xf32> to vector<8x32xf32>
    %42 = arith.addf %40, %41 : vector<8x32xf32>
    %cst_75 = arith.constant 0.000000e+00 : f32
    %43 = vector.broadcast %cst_75 : f32 to vector<8x32xf32>
    %44 = arith.cmpf ogt, %42, %43 : vector<8x32xf32>
    %cst_76 = arith.constant 1.000000e+00 : f32
    %45 = vector.broadcast %cst_76 : f32 to vector<8x32xf32>
    %46 = arith.addf %42, %45 : vector<8x32xf32>
    %47 = math.exp %42 : vector<8x32xf32>
    %48 = arith.select %44, %46, %47 : vector<8x32xi1>, vector<8x32xf32>
    %49 = arith.truncf %35 : vector<8x32xf32> to vector<8x32xbf16>
    %cst_77 = arith.constant dense<0.000000e+00> : vector<8x32xf32>
    %50 = tpu.matmul %49, %2, %cst_77 {dimension_numbers = #tpu.dot_dimension_numbers<[1], [0], [0], [1], [0, 0, 1, 1], [], []>} : vector<8x32xbf16>, vector<32x32xbf16>, vector<8x32xf32> -> vector<8x32xf32>
    %51 = vector.broadcast %3 : vector<1x32xf32> to vector<8x32xf32>
    %52 = arith.addf %50, %51 : vector<8x32xf32>
    %cst_78 = arith.constant 0.000000e+00 : f32
    %53 = vector.broadcast %cst_78 : f32 to vector<8x32xf32>
    %54 = arith.cmpf ogt, %52, %53 : vector<8x32xf32>
    %cst_79 = arith.constant 1.000000e+00 : f32
    %55 = vector.broadcast %cst_79 : f32 to vector<8x32xf32>
    %56 = arith.addf %52, %55 : vector<8x32xf32>
    %57 = math.exp %52 : vector<8x32xf32>
    %58 = arith.select %54, %56, %57 : vector<8x32xi1>, vector<8x32xf32>
    %59 = vector.broadcast %37 : vector<8x1xf32> to vector<8x32xf32>
    %60 = arith.mulf %58, %59 : vector<8x32xf32>
    %61 = arith.truncf %35 : vector<8x32xf32> to vector<8x32xbf16>
    %cst_80 = arith.constant dense<0.000000e+00> : vector<8x32xf32>
    %62 = tpu.matmul %61, %4, %cst_80 {dimension_numbers = #tpu.dot_dimension_numbers<[1], [0], [0], [1], [0, 0, 1, 1], [], []>} : vector<8x32xbf16>, vector<32x32xbf16>, vector<8x32xf32> -> vector<8x32xf32>
    %63 = vector.broadcast %5 : vector<1x32xf32> to vector<8x32xf32>
    %64 = arith.addf %62, %63 : vector<8x32xf32>
    %65 = tpu.transpose %60, [1, 0] : vector<8x32xf32> -> vector<32x8xf32>
    %66 = arith.truncf %65 : vector<32x8xf32> to vector<32x8xbf16>
    %67 = arith.truncf %64 : vector<8x32xf32> to vector<8x32xbf16>
    %cst_81 = arith.constant dense<0.000000e+00> : vector<32x32xf32>
    %68 = tpu.matmul %66, %67, %cst_81 {dimension_numbers = #tpu.dot_dimension_numbers<[1], [0], [0], [1], [0, 0, 1, 1], [], []>} : vector<32x8xbf16>, vector<8x32xbf16>, vector<32x32xf32> -> vector<32x32xf32>
    %69 = arith.truncf %68 : vector<32x32xf32> to vector<32x32xbf16>
    %70 = arith.mulf %69, %38 : vector<32x32xbf16>
    %71 = arith.truncf %48 : vector<8x32xf32> to vector<8x32xbf16>
    %cst_82 = arith.constant dense<0.000000e+00> : vector<8x32xf32>
    %72 = tpu.matmul %71, %70, %cst_82 {dimension_numbers = #tpu.dot_dimension_numbers<[1], [0], [0], [1], [0, 0, 1, 1], [], []>} : vector<8x32xbf16>, vector<32x32xbf16>, vector<8x32xf32> -> vector<8x32xf32>
    %cst_83 = arith.constant dense<0.000000e+00> : vector<32xf32>
    %73 = vector.multi_reduction <add>, %60, %cst_83 [0] : vector<8x32xf32> to vector<32xf32>
    %74 = vector.shape_cast %73 : vector<32xf32> to vector<1x32xf32>
    %75 = vector.broadcast %74 : vector<1x32xf32> to vector<8x32xf32>
    %76 = arith.mulf %48, %75 : vector<8x32xf32>
    %77 = arith.truncf %76 : vector<8x32xf32> to vector<8x32xbf16>
    %cst_84 = arith.constant dense<0.000000e+00> : vector<8x32xf32>
    %78 = tpu.matmul %77, %38, %cst_84 {dimension_numbers = #tpu.dot_dimension_numbers<[1], [0], [0], [1], [0, 0, 1, 1], [], []>} : vector<8x32xbf16>, vector<32x32xbf16>, vector<8x32xf32> -> vector<8x32xf32>
    %cst_85 = arith.constant 9.99999997E-7 : f32
    %79 = vector.broadcast %cst_85 : f32 to vector<8x32xf32>
    %80 = arith.addf %78, %79 : vector<8x32xf32>
    %81 = arith.divf %72, %80 : vector<8x32xf32>
    %82 = arith.truncf %81 : vector<8x32xf32> to vector<8x32xbf16>
    %cst_86 = arith.constant dense<0.000000e+00> : vector<8x32xf32>
    %83 = tpu.matmul %82, %6, %cst_86 {dimension_numbers = #tpu.dot_dimension_numbers<[1], [0], [0], [1], [0, 0, 1, 1], [], []>} : vector<8x32xbf16>, vector<32x32xbf16>, vector<8x32xf32> -> vector<8x32xf32>
    %84 = vector.broadcast %7 : vector<1x32xf32> to vector<8x32xf32>
    %85 = arith.addf %83, %84 : vector<8x32xf32>
    %86 = arith.addf %35, %85 : vector<8x32xf32>
    %cst_87 = arith.constant dense<0.000000e+00> : vector<8xf32>
    %87 = vector.multi_reduction <add>, %86, %cst_87 [1] : vector<8x32xf32> to vector<8xf32>
    %88 = vector.shape_cast %87 : vector<8xf32> to vector<8x1xf32>
    %89 = arith.mulf %86, %86 : vector<8x32xf32>
    %cst_88 = arith.constant dense<0.000000e+00> : vector<8xf32>
    %90 = vector.multi_reduction <add>, %89, %cst_88 [1] : vector<8x32xf32> to vector<8xf32>
    %91 = vector.shape_cast %90 : vector<8xf32> to vector<8x1xf32>
    %cst_89 = arith.constant 3.200000e+01 : f32
    %92 = vector.broadcast %cst_89 : f32 to vector<8x1xf32>
    %93 = arith.divf %88, %92 : vector<8x1xf32>
    %cst_90 = arith.constant 3.200000e+01 : f32
    %94 = vector.broadcast %cst_90 : f32 to vector<8x1xf32>
    %95 = arith.divf %91, %94 : vector<8x1xf32>
    %96 = arith.mulf %93, %93 : vector<8x1xf32>
    %97 = arith.subf %95, %96 : vector<8x1xf32>
    %cst_91 = arith.constant 9.99999974E-6 : f32
    %98 = vector.broadcast %cst_91 : f32 to vector<8x1xf32>
    %99 = arith.addf %97, %98 : vector<8x1xf32>
    %100 = math.rsqrt %99 : vector<8x1xf32>
    %101 = vector.broadcast %93 : vector<8x1xf32> to vector<8x32xf32>
    %102 = arith.subf %86, %101 : vector<8x32xf32>
    %103 = vector.broadcast %100 : vector<8x1xf32> to vector<8x32xf32>
    %104 = arith.mulf %102, %103 : vector<8x32xf32>
    %105 = vector.broadcast %8 : vector<1x32xf32> to vector<8x32xf32>
    %106 = arith.mulf %104, %105 : vector<8x32xf32>
    %107 = vector.broadcast %9 : vector<1x32xf32> to vector<8x32xf32>
    %108 = arith.addf %106, %107 : vector<8x32xf32>
    %109 = arith.truncf %108 : vector<8x32xf32> to vector<8x32xbf16>
    %cst_92 = arith.constant dense<0.000000e+00> : vector<8x64xf32>
    %110 = tpu.matmul %109, %10, %cst_92 {dimension_numbers = #tpu.dot_dimension_numbers<[1], [0], [0], [1], [0, 0, 1, 1], [], []>} : vector<8x32xbf16>, vector<32x64xbf16>, vector<8x64xf32> -> vector<8x64xf32>
    %111 = vector.broadcast %11 : vector<1x64xf32> to vector<8x64xf32>
    %112 = arith.addf %110, %111 : vector<8x64xf32>
    %cst_93 = arith.constant 5.000000e-01 : f32
    %113 = vector.broadcast %cst_93 : f32 to vector<8x64xf32>
    %114 = arith.mulf %113, %112 : vector<8x64xf32>
    %cst_94 = arith.constant 4.471500e-02 : f32
    %115 = vector.broadcast %cst_94 : f32 to vector<8x64xf32>
    %116 = arith.mulf %115, %112 : vector<8x64xf32>
    %117 = arith.mulf %116, %112 : vector<8x64xf32>
    %118 = arith.mulf %117, %112 : vector<8x64xf32>
    %119 = arith.addf %112, %118 : vector<8x64xf32>
    %cst_95 = arith.constant 0.797884583 : f32
    %120 = vector.broadcast %cst_95 : f32 to vector<8x64xf32>
    %121 = arith.mulf %120, %119 : vector<8x64xf32>
    %122 = math.tanh %121 : vector<8x64xf32>
    %cst_96 = arith.constant 1.000000e+00 : f32
    %123 = vector.broadcast %cst_96 : f32 to vector<8x64xf32>
    %124 = arith.addf %123, %122 : vector<8x64xf32>
    %125 = arith.mulf %114, %124 : vector<8x64xf32>
    %126 = arith.truncf %125 : vector<8x64xf32> to vector<8x64xbf16>
    %cst_97 = arith.constant dense<0.000000e+00> : vector<8x32xf32>
    %127 = tpu.matmul %126, %12, %cst_97 {dimension_numbers = #tpu.dot_dimension_numbers<[1], [0], [0], [1], [0, 0, 1, 1], [], []>} : vector<8x64xbf16>, vector<64x32xbf16>, vector<8x32xf32> -> vector<8x32xf32>
    %128 = vector.broadcast %13 : vector<1x32xf32> to vector<8x32xf32>
    %129 = arith.addf %127, %128 : vector<8x32xf32>
    %130 = arith.addf %108, %129 : vector<8x32xf32>
    %cst_98 = arith.constant dense<0.000000e+00> : vector<8xf32>
    %131 = vector.multi_reduction <add>, %130, %cst_98 [1] : vector<8x32xf32> to vector<8xf32>
    %132 = vector.shape_cast %131 : vector<8xf32> to vector<8x1xf32>
    %133 = arith.mulf %130, %130 : vector<8x32xf32>
    %cst_99 = arith.constant dense<0.000000e+00> : vector<8xf32>
    %134 = vector.multi_reduction <add>, %133, %cst_99 [1] : vector<8x32xf32> to vector<8xf32>
    %135 = vector.shape_cast %134 : vector<8xf32> to vector<8x1xf32>
    %cst_100 = arith.constant 3.200000e+01 : f32
    %136 = vector.broadcast %cst_100 : f32 to vector<8x1xf32>
    %137 = arith.divf %132, %136 : vector<8x1xf32>
    %cst_101 = arith.constant 3.200000e+01 : f32
    %138 = vector.broadcast %cst_101 : f32 to vector<8x1xf32>
    %139 = arith.divf %135, %138 : vector<8x1xf32>
    %140 = arith.mulf %137, %137 : vector<8x1xf32>
    %141 = arith.subf %139, %140 : vector<8x1xf32>
    %cst_102 = arith.constant 9.99999974E-6 : f32
    %142 = vector.broadcast %cst_102 : f32 to vector<8x1xf32>
    %143 = arith.addf %141, %142 : vector<8x1xf32>
    %144 = math.rsqrt %143 : vector<8x1xf32>
    %145 = vector.broadcast %137 : vector<8x1xf32> to vector<8x32xf32>
    %146 = arith.subf %130, %145 : vector<8x32xf32>
    %147 = vector.broadcast %144 : vector<8x1xf32> to vector<8x32xf32>
    %148 = arith.mulf %146, %147 : vector<8x32xf32>
    %149 = vector.broadcast %14 : vector<1x32xf32> to vector<8x32xf32>
    %150 = arith.mulf %148, %149 : vector<8x32xf32>
    %151 = vector.broadcast %15 : vector<1x32xf32> to vector<8x32xf32>
    %152 = arith.addf %150, %151 : vector<8x32xf32>
    %153 = arith.truncf %152 : vector<8x32xf32> to vector<8x32xbf16>
    %cst_103 = arith.constant dense<0.000000e+00> : vector<8x32xf32>
    %154 = tpu.matmul %153, %16, %cst_103 {dimension_numbers = #tpu.dot_dimension_numbers<[1], [0], [0], [1], [0, 0, 1, 1], [], []>} : vector<8x32xbf16>, vector<32x32xbf16>, vector<8x32xf32> -> vector<8x32xf32>
    %155 = vector.broadcast %17 : vector<1x32xf32> to vector<8x32xf32>
    %156 = arith.addf %154, %155 : vector<8x32xf32>
    %cst_104 = arith.constant 0.000000e+00 : f32
    %157 = vector.broadcast %cst_104 : f32 to vector<8x32xf32>
    %158 = arith.cmpf ogt, %156, %157 : vector<8x32xf32>
    %cst_105 = arith.constant 1.000000e+00 : f32
    %159 = vector.broadcast %cst_105 : f32 to vector<8x32xf32>
    %160 = arith.addf %156, %159 : vector<8x32xf32>
    %161 = math.exp %156 : vector<8x32xf32>
    %162 = arith.select %158, %160, %161 : vector<8x32xi1>, vector<8x32xf32>
    %163 = arith.truncf %152 : vector<8x32xf32> to vector<8x32xbf16>
    %cst_106 = arith.constant dense<0.000000e+00> : vector<8x32xf32>
    %164 = tpu.matmul %163, %18, %cst_106 {dimension_numbers = #tpu.dot_dimension_numbers<[1], [0], [0], [1], [0, 0, 1, 1], [], []>} : vector<8x32xbf16>, vector<32x32xbf16>, vector<8x32xf32> -> vector<8x32xf32>
    %165 = vector.broadcast %19 : vector<1x32xf32> to vector<8x32xf32>
    %166 = arith.addf %164, %165 : vector<8x32xf32>
    %cst_107 = arith.constant 0.000000e+00 : f32
    %167 = vector.broadcast %cst_107 : f32 to vector<8x32xf32>
    %168 = arith.cmpf ogt, %166, %167 : vector<8x32xf32>
    %cst_108 = arith.constant 1.000000e+00 : f32
    %169 = vector.broadcast %cst_108 : f32 to vector<8x32xf32>
    %170 = arith.addf %166, %169 : vector<8x32xf32>
    %171 = math.exp %166 : vector<8x32xf32>
    %172 = arith.select %168, %170, %171 : vector<8x32xi1>, vector<8x32xf32>
    %173 = vector.broadcast %37 : vector<8x1xf32> to vector<8x32xf32>
    %174 = arith.mulf %172, %173 : vector<8x32xf32>
    %175 = arith.truncf %152 : vector<8x32xf32> to vector<8x32xbf16>
    %cst_109 = arith.constant dense<0.000000e+00> : vector<8x32xf32>
    %176 = tpu.matmul %175, %20, %cst_109 {dimension_numbers = #tpu.dot_dimension_numbers<[1], [0], [0], [1], [0, 0, 1, 1], [], []>} : vector<8x32xbf16>, vector<32x32xbf16>, vector<8x32xf32> -> vector<8x32xf32>
    %177 = vector.broadcast %21 : vector<1x32xf32> to vector<8x32xf32>
    %178 = arith.addf %176, %177 : vector<8x32xf32>
    %179 = tpu.transpose %174, [1, 0] : vector<8x32xf32> -> vector<32x8xf32>
    %180 = arith.truncf %179 : vector<32x8xf32> to vector<32x8xbf16>
    %181 = arith.truncf %178 : vector<8x32xf32> to vector<8x32xbf16>
    %cst_110 = arith.constant dense<0.000000e+00> : vector<32x32xf32>
    %182 = tpu.matmul %180, %181, %cst_110 {dimension_numbers = #tpu.dot_dimension_numbers<[1], [0], [0], [1], [0, 0, 1, 1], [], []>} : vector<32x8xbf16>, vector<8x32xbf16>, vector<32x32xf32> -> vector<32x32xf32>
    %183 = arith.truncf %182 : vector<32x32xf32> to vector<32x32xbf16>
    %184 = arith.mulf %183, %38 : vector<32x32xbf16>
    %185 = arith.truncf %162 : vector<8x32xf32> to vector<8x32xbf16>
    %cst_111 = arith.constant dense<0.000000e+00> : vector<8x32xf32>
    %186 = tpu.matmul %185, %184, %cst_111 {dimension_numbers = #tpu.dot_dimension_numbers<[1], [0], [0], [1], [0, 0, 1, 1], [], []>} : vector<8x32xbf16>, vector<32x32xbf16>, vector<8x32xf32> -> vector<8x32xf32>
    %cst_112 = arith.constant dense<0.000000e+00> : vector<32xf32>
    %187 = vector.multi_reduction <add>, %174, %cst_112 [0] : vector<8x32xf32> to vector<32xf32>
    %188 = vector.shape_cast %187 : vector<32xf32> to vector<1x32xf32>
    %189 = vector.broadcast %188 : vector<1x32xf32> to vector<8x32xf32>
    %190 = arith.mulf %162, %189 : vector<8x32xf32>
    %191 = arith.truncf %190 : vector<8x32xf32> to vector<8x32xbf16>
    %cst_113 = arith.constant dense<0.000000e+00> : vector<8x32xf32>
    %192 = tpu.matmul %191, %38, %cst_113 {dimension_numbers = #tpu.dot_dimension_numbers<[1], [0], [0], [1], [0, 0, 1, 1], [], []>} : vector<8x32xbf16>, vector<32x32xbf16>, vector<8x32xf32> -> vector<8x32xf32>
    %cst_114 = arith.constant 9.99999997E-7 : f32
    %193 = vector.broadcast %cst_114 : f32 to vector<8x32xf32>
    %194 = arith.addf %192, %193 : vector<8x32xf32>
    %195 = arith.divf %186, %194 : vector<8x32xf32>
    %196 = arith.truncf %195 : vector<8x32xf32> to vector<8x32xbf16>
    %cst_115 = arith.constant dense<0.000000e+00> : vector<8x32xf32>
    %197 = tpu.matmul %196, %22, %cst_115 {dimension_numbers = #tpu.dot_dimension_numbers<[1], [0], [0], [1], [0, 0, 1, 1], [], []>} : vector<8x32xbf16>, vector<32x32xbf16>, vector<8x32xf32> -> vector<8x32xf32>
    %198 = vector.broadcast %23 : vector<1x32xf32> to vector<8x32xf32>
    %199 = arith.addf %197, %198 : vector<8x32xf32>
    %200 = arith.addf %152, %199 : vector<8x32xf32>
    %cst_116 = arith.constant dense<0.000000e+00> : vector<8xf32>
    %201 = vector.multi_reduction <add>, %200, %cst_116 [1] : vector<8x32xf32> to vector<8xf32>
    %202 = vector.shape_cast %201 : vector<8xf32> to vector<8x1xf32>
    %203 = arith.mulf %200, %200 : vector<8x32xf32>
    %cst_117 = arith.constant dense<0.000000e+00> : vector<8xf32>
    %204 = vector.multi_reduction <add>, %203, %cst_117 [1] : vector<8x32xf32> to vector<8xf32>
    %205 = vector.shape_cast %204 : vector<8xf32> to vector<8x1xf32>
    %cst_118 = arith.constant 3.200000e+01 : f32
    %206 = vector.broadcast %cst_118 : f32 to vector<8x1xf32>
    %207 = arith.divf %202, %206 : vector<8x1xf32>
    %cst_119 = arith.constant 3.200000e+01 : f32
    %208 = vector.broadcast %cst_119 : f32 to vector<8x1xf32>
    %209 = arith.divf %205, %208 : vector<8x1xf32>
    %210 = arith.mulf %207, %207 : vector<8x1xf32>
    %211 = arith.subf %209, %210 : vector<8x1xf32>
    %cst_120 = arith.constant 9.99999974E-6 : f32
    %212 = vector.broadcast %cst_120 : f32 to vector<8x1xf32>
    %213 = arith.addf %211, %212 : vector<8x1xf32>
    %214 = math.rsqrt %213 : vector<8x1xf32>
    %215 = vector.broadcast %207 : vector<8x1xf32> to vector<8x32xf32>
    %216 = arith.subf %200, %215 : vector<8x32xf32>
    %217 = vector.broadcast %214 : vector<8x1xf32> to vector<8x32xf32>
    %218 = arith.mulf %216, %217 : vector<8x32xf32>
    %219 = vector.broadcast %24 : vector<1x32xf32> to vector<8x32xf32>
    %220 = arith.mulf %218, %219 : vector<8x32xf32>
    %221 = vector.broadcast %25 : vector<1x32xf32> to vector<8x32xf32>
    %222 = arith.addf %220, %221 : vector<8x32xf32>
    %223 = arith.truncf %222 : vector<8x32xf32> to vector<8x32xbf16>
    %cst_121 = arith.constant dense<0.000000e+00> : vector<8x64xf32>
    %224 = tpu.matmul %223, %26, %cst_121 {dimension_numbers = #tpu.dot_dimension_numbers<[1], [0], [0], [1], [0, 0, 1, 1], [], []>} : vector<8x32xbf16>, vector<32x64xbf16>, vector<8x64xf32> -> vector<8x64xf32>
    %225 = vector.broadcast %27 : vector<1x64xf32> to vector<8x64xf32>
    %226 = arith.addf %224, %225 : vector<8x64xf32>
    %cst_122 = arith.constant 5.000000e-01 : f32
    %227 = vector.broadcast %cst_122 : f32 to vector<8x64xf32>
    %228 = arith.mulf %227, %226 : vector<8x64xf32>
    %cst_123 = arith.constant 4.471500e-02 : f32
    %229 = vector.broadcast %cst_123 : f32 to vector<8x64xf32>
    %230 = arith.mulf %229, %226 : vector<8x64xf32>
    %231 = arith.mulf %230, %226 : vector<8x64xf32>
    %232 = arith.mulf %231, %226 : vector<8x64xf32>
    %233 = arith.addf %226, %232 : vector<8x64xf32>
    %cst_124 = arith.constant 0.797884583 : f32
    %234 = vector.broadcast %cst_124 : f32 to vector<8x64xf32>
    %235 = arith.mulf %234, %233 : vector<8x64xf32>
    %236 = math.tanh %235 : vector<8x64xf32>
    %cst_125 = arith.constant 1.000000e+00 : f32
    %237 = vector.broadcast %cst_125 : f32 to vector<8x64xf32>
    %238 = arith.addf %237, %236 : vector<8x64xf32>
    %239 = arith.mulf %228, %238 : vector<8x64xf32>
    %240 = arith.truncf %239 : vector<8x64xf32> to vector<8x64xbf16>
    %cst_126 = arith.constant dense<0.000000e+00> : vector<8x32xf32>
    %241 = tpu.matmul %240, %28, %cst_126 {dimension_numbers = #tpu.dot_dimension_numbers<[1], [0], [0], [1], [0, 0, 1, 1], [], []>} : vector<8x64xbf16>, vector<64x32xbf16>, vector<8x32xf32> -> vector<8x32xf32>
    %242 = vector.broadcast %29 : vector<1x32xf32> to vector<8x32xf32>
    %243 = arith.addf %241, %242 : vector<8x32xf32>
    %244 = arith.addf %222, %243 : vector<8x32xf32>
    %cst_127 = arith.constant dense<0.000000e+00> : vector<8xf32>
    %245 = vector.multi_reduction <add>, %244, %cst_127 [1] : vector<8x32xf32> to vector<8xf32>
    %246 = vector.shape_cast %245 : vector<8xf32> to vector<8x1xf32>
    %247 = arith.mulf %244, %244 : vector<8x32xf32>
    %cst_128 = arith.constant dense<0.000000e+00> : vector<8xf32>
    %248 = vector.multi_reduction <add>, %247, %cst_128 [1] : vector<8x32xf32> to vector<8xf32>
    %249 = vector.shape_cast %248 : vector<8xf32> to vector<8x1xf32>
    %cst_129 = arith.constant 3.200000e+01 : f32
    %250 = vector.broadcast %cst_129 : f32 to vector<8x1xf32>
    %251 = arith.divf %246, %250 : vector<8x1xf32>
    %cst_130 = arith.constant 3.200000e+01 : f32
    %252 = vector.broadcast %cst_130 : f32 to vector<8x1xf32>
    %253 = arith.divf %249, %252 : vector<8x1xf32>
    %254 = arith.mulf %251, %251 : vector<8x1xf32>
    %255 = arith.subf %253, %254 : vector<8x1xf32>
    %cst_131 = arith.constant 9.99999974E-6 : f32
    %256 = vector.broadcast %cst_131 : f32 to vector<8x1xf32>
    %257 = arith.addf %255, %256 : vector<8x1xf32>
    %258 = math.rsqrt %257 : vector<8x1xf32>
    %259 = vector.broadcast %251 : vector<8x1xf32> to vector<8x32xf32>
    %260 = arith.subf %244, %259 : vector<8x32xf32>
    %261 = vector.broadcast %258 : vector<8x1xf32> to vector<8x32xf32>
    %262 = arith.mulf %260, %261 : vector<8x32xf32>
    %263 = vector.broadcast %30 : vector<1x32xf32> to vector<8x32xf32>
    %264 = arith.mulf %262, %263 : vector<8x32xf32>
    %265 = vector.broadcast %31 : vector<1x32xf32> to vector<8x32xf32>
    %266 = arith.addf %264, %265 : vector<8x32xf32>
    %cst_132 = arith.constant dense<0.000000e+00> : vector<8xf32>
    %267 = vector.multi_reduction <add>, %266, %cst_132 [1] : vector<8x32xf32> to vector<8xf32>
    %268 = vector.shape_cast %267 : vector<8xf32> to vector<8x1xf32>
    %269 = arith.mulf %266, %266 : vector<8x32xf32>
    %cst_133 = arith.constant dense<0.000000e+00> : vector<8xf32>
    %270 = vector.multi_reduction <add>, %269, %cst_133 [1] : vector<8x32xf32> to vector<8xf32>
    %271 = vector.shape_cast %270 : vector<8xf32> to vector<8x1xf32>
    %cst_134 = arith.constant 3.200000e+01 : f32
    %272 = vector.broadcast %cst_134 : f32 to vector<8x1xf32>
    %273 = arith.divf %268, %272 : vector<8x1xf32>
    %cst_135 = arith.constant 3.200000e+01 : f32
    %274 = vector.broadcast %cst_135 : f32 to vector<8x1xf32>
    %275 = arith.divf %271, %274 : vector<8x1xf32>
    %276 = arith.mulf %273, %273 : vector<8x1xf32>
    %277 = arith.subf %275, %276 : vector<8x1xf32>
    %cst_136 = arith.constant 9.99999974E-6 : f32
    %278 = vector.broadcast %cst_136 : f32 to vector<8x1xf32>
    %279 = arith.addf %277, %278 : vector<8x1xf32>
    %280 = math.rsqrt %279 : vector<8x1xf32>
    %281 = vector.broadcast %273 : vector<8x1xf32> to vector<8x32xf32>
    %282 = arith.subf %266, %281 : vector<8x32xf32>
    %283 = vector.broadcast %280 : vector<8x1xf32> to vector<8x32xf32>
    %284 = arith.mulf %282, %283 : vector<8x32xf32>
    %285 = vector.broadcast %32 : vector<1x32xf32> to vector<8x32xf32>
    %286 = arith.mulf %284, %285 : vector<8x32xf32>
    %287 = vector.broadcast %33 : vector<1x32xf32> to vector<8x32xf32>
    %288 = arith.addf %286, %287 : vector<8x32xf32>
    %c0_137 = arith.constant 0 : index
    %c0_138 = arith.constant 0 : index
    %c0_139 = arith.constant 0 : index
    %289 = vector.load %arg38[%c0_137, %c0_138, %c0_139] : memref<1x8x32xf32, #tpu.memory_space<vmem>>, vector<1x8x32xf32>
    %290 = vector.shape_cast %289 : vector<1x8x32xf32> to vector<8x32xf32>
    %291 = vector.shape_cast %288 : vector<8x32xf32> to vector<1x8x32xf32>
    tpu.vector_store %arg38[%c0_137, %c0_138, %c0_139], %291 {strides = array<i32>} : memref<1x8x32xf32, #tpu.memory_space<vmem>>, vector<1x8x32xf32>,
    return
  }
  func.func @transform_0(%arg0: i32) -> (i32, i32, i32) {
    %c0_i32 = arith.constant 0 : i32
    %c0_i32_0 = arith.constant 0 : i32
    %c0_i32_1 = arith.constant 0 : i32
    return %arg0, %c0_i32, %c0_i32_0 : i32, i32, i32
  }
  func.func @transform_1(%arg0: i32) -> (i32, i32, i32) {
    %c0_i32 = arith.constant 0 : i32
    %c0_i32_0 = arith.constant 0 : i32
    %c0_i32_1 = arith.constant 0 : i32
    return %arg0, %c0_i32, %c0_i32_0 : i32, i32, i32
  }
  func.func @transform_2(%arg0: i32) -> (i32, i32) {
    %c0_i32 = arith.constant 0 : i32
    %c0_i32_0 = arith.constant 0 : i32
    %c0_i32_1 = arith.constant 0 : i32
    return %c0_i32, %c0_i32_0 : i32, i32
  }
  func.func @transform_3(%arg0: i32) -> (i32, i32) {
    %c0_i32 = arith.constant 0 : i32
    %c0_i32_0 = arith.constant 0 : i32
    %c0_i32_1 = arith.constant 0 : i32
    return %c0_i32, %c0_i32_0 : i32, i32
  }
  func.func @transform_4(%arg0: i32) -> (i32, i32) {
    %c0_i32 = arith.constant 0 : i32
    %c0_i32_0 = arith.constant 0 : i32
    %c0_i32_1 = arith.constant 0 : i32
    return %c0_i32, %c0_i32_0 : i32, i32
  }
  func.func @transform_5(%arg0: i32) -> (i32, i32) {
    %c0_i32 = arith.constant 0 : i32
    %c0_i32_0 = arith.constant 0 : i32
    %c0_i32_1 = arith.constant 0 : i32
    return %c0_i32, %c0_i32_0 : i32, i32
  }
  func.func @transform_6(%arg0: i32) -> (i32, i32) {
    %c0_i32 = arith.constant 0 : i32
    %c0_i32_0 = arith.constant 0 : i32
    %c0_i32_1 = arith.constant 0 : i32
    return %c0_i32, %c0_i32_0 : i32, i32
  }
  func.func @transform_7(%arg0: i32) -> (i32, i32) {
    %c0_i32 = arith.constant 0 : i32
    %c0_i32_0 = arith.constant 0 : i32
    %c0_i32_1 = arith.constant 0 : i32
    return %c0_i32, %c0_i32_0 : i32, i32
  }
  func.func @transform_8(%arg0: i32) -> (i32, i32) {
    %c0_i32 = arith.constant 0 : i32
    %c0_i32_0 = arith.constant 0 : i32
    %c0_i32_1 = arith.constant 0 : i32
    return %c0_i32, %c0_i32_0 : i32, i32
  }
  func.func @transform_9(%arg0: i32) -> (i32, i32) {
    %c0_i32 = arith.constant 0 : i32
    %c0_i32_0 = arith.constant 0 : i32
    %c0_i32_1 = arith.constant 0 : i32
    return %c0_i32, %c0_i32_0 : i32, i32
  }
  func.func @transform_10(%arg0: i32) -> (i32, i32) {
    %c0_i32 = arith.constant 0 : i32
    %c0_i32_0 = arith.constant 0 : i32
    %c0_i32_1 = arith.constant 0 : i32
    return %c0_i32, %c0_i32_0 : i32, i32
  }
  func.func @transform_11(%arg0: i32) -> (i32, i32) {
    %c0_i32 = arith.constant 0 : i32
    %c0_i32_0 = arith.constant 0 : i32
    %c0_i32_1 = arith.constant 0 : i32
    return %c0_i32, %c0_i32_0 : i32, i32
  }
  func.func @transform_12(%arg0: i32) -> (i32, i32) {
    %c0_i32 = arith.constant 0 : i32
    %c0_i32_0 = arith.constant 0 : i32
    %c0_i32_1 = arith.constant 0 : i32
    return %c0_i32, %c0_i32_0 : i32, i32
  }
  func.func @transform_13(%arg0: i32) -> (i32, i32) {
    %c0_i32 = arith.constant 0 : i32
    %c0_i32_0 = arith.constant 0 : i32
    %c0_i32_1 = arith.constant 0 : i32
    return %c0_i32, %c0_i32_0 : i32, i32
  }
  func.func @transform_14(%arg0: i32) -> (i32, i32) {
    %c0_i32 = arith.constant 0 : i32
    %c0_i32_0 = arith.constant 0 : i32
    %c0_i32_1 = arith.constant 0 : i32
    return %c0_i32, %c0_i32_0 : i32, i32
  }
  func.func @transform_15(%arg0: i32) -> (i32, i32) {
    %c0_i32 = arith.constant 0 : i32
    %c0_i32_0 = arith.constant 0 : i32
    %c0_i32_1 = arith.constant 0 : i32
    return %c0_i32, %c0_i32_0 : i32, i32
  }
  func.func @transform_16(%arg0: i32) -> (i32, i32) {
    %c0_i32 = arith.constant 0 : i32
    %c0_i32_0 = arith.constant 0 : i32
    %c0_i32_1 = arith.constant 0 : i32
    return %c0_i32, %c0_i32_0 : i32, i32
  }
  func.func @transform_17(%arg0: i32) -> (i32, i32) {
    %c0_i32 = arith.constant 0 : i32
    %c0_i32_0 = arith.constant 0 : i32
    %c0_i32_1 = arith.constant 0 : i32
    return %c0_i32, %c0_i32_0 : i32, i32
  }
  func.func @transform_18(%arg0: i32) -> (i32, i32) {
    %c0_i32 = arith.constant 0 : i32
    %c0_i32_0 = arith.constant 0 : i32
    %c0_i32_1 = arith.constant 0 : i32
    return %c0_i32, %c0_i32_0 : i32, i32
  }
  func.func @transform_19(%arg0: i32) -> (i32, i32) {
    %c0_i32 = arith.constant 0 : i32
    %c0_i32_0 = arith.constant 0 : i32
    %c0_i32_1 = arith.constant 0 : i32
    return %c0_i32, %c0_i32_0 : i32, i32
  }
  func.func @transform_20(%arg0: i32) -> (i32, i32) {
    %c0_i32 = arith.constant 0 : i32
    %c0_i32_0 = arith.constant 0 : i32
    %c0_i32_1 = arith.constant 0 : i32
    return %c0_i32, %c0_i32_0 : i32, i32
  }
  func.func @transform_21(%arg0: i32) -> (i32, i32) {
    %c0_i32 = arith.constant 0 : i32
    %c0_i32_0 = arith.constant 0 : i32
    %c0_i32_1 = arith.constant 0 : i32
    return %c0_i32, %c0_i32_0 : i32, i32
  }
  func.func @transform_22(%arg0: i32) -> (i32, i32) {
    %c0_i32 = arith.constant 0 : i32
    %c0_i32_0 = arith.constant 0 : i32
    %c0_i32_1 = arith.constant 0 : i32
    return %c0_i32, %c0_i32_0 : i32, i32
  }
  func.func @transform_23(%arg0: i32) -> (i32, i32) {
    %c0_i32 = arith.constant 0 : i32
    %c0_i32_0 = arith.constant 0 : i32
    %c0_i32_1 = arith.constant 0 : i32
    return %c0_i32, %c0_i32_0 : i32, i32
  }
  func.func @transform_24(%arg0: i32) -> (i32, i32) {
    %c0_i32 = arith.constant 0 : i32
    %c0_i32_0 = arith.constant 0 : i32
    %c0_i32_1 = arith.constant 0 : i32
    return %c0_i32, %c0_i32_0 : i32, i32
  }
  func.func @transform_25(%arg0: i32) -> (i32, i32) {
    %c0_i32 = arith.constant 0 : i32
    %c0_i32_0 = arith.constant 0 : i32
    %c0_i32_1 = arith.constant 0 : i32
    return %c0_i32, %c0_i32_0 : i32, i32
  }
  func.func @transform_26(%arg0: i32) -> (i32, i32) {
    %c0_i32 = arith.constant 0 : i32
    %c0_i32_0 = arith.constant 0 : i32
    %c0_i32_1 = arith.constant 0 : i32
    return %c0_i32, %c0_i32_0 : i32, i32
  }
  func.func @transform_27(%arg0: i32) -> (i32, i32) {
    %c0_i32 = arith.constant 0 : i32
    %c0_i32_0 = arith.constant 0 : i32
    %c0_i32_1 = arith.constant 0 : i32
    return %c0_i32, %c0_i32_0 : i32, i32
  }
  func.func @transform_28(%arg0: i32) -> (i32, i32) {
    %c0_i32 = arith.constant 0 : i32
    %c0_i32_0 = arith.constant 0 : i32
    %c0_i32_1 = arith.constant 0 : i32
    return %c0_i32, %c0_i32_0 : i32, i32
  }
  func.func @transform_29(%arg0: i32) -> (i32, i32) {
    %c0_i32 = arith.constant 0 : i32
    %c0_i32_0 = arith.constant 0 : i32
    %c0_i32_1 = arith.constant 0 : i32
    return %c0_i32, %c0_i32_0 : i32, i32
  }
  func.func @transform_30(%arg0: i32) -> (i32, i32) {
    %c0_i32 = arith.constant 0 : i32
    %c0_i32_0 = arith.constant 0 : i32
    %c0_i32_1 = arith.constant 0 : i32
    return %c0_i32, %c0_i32_0 : i32, i32
  }
  func.func @transform_31(%arg0: i32) -> (i32, i32) {
    %c0_i32 = arith.constant 0 : i32
    %c0_i32_0 = arith.constant 0 : i32
    %c0_i32_1 = arith.constant 0 : i32
    return %c0_i32, %c0_i32_0 : i32, i32
  }
  func.func @transform_32(%arg0: i32) -> (i32, i32) {
    %c0_i32 = arith.constant 0 : i32
    %c0_i32_0 = arith.constant 0 : i32
    %c0_i32_1 = arith.constant 0 : i32
    return %c0_i32, %c0_i32_0 : i32, i32
  }
  func.func @transform_33(%arg0: i32) -> (i32, i32) {
    %c0_i32 = arith.constant 0 : i32
    %c0_i32_0 = arith.constant 0 : i32
    %c0_i32_1 = arith.constant 0 : i32
    return %c0_i32, %c0_i32_0 : i32, i32
  }
  func.func @transform_34(%arg0: i32) -> (i32, i32) {
    %c0_i32 = arith.constant 0 : i32
    %c0_i32_0 = arith.constant 0 : i32
    %c0_i32_1 = arith.constant 0 : i32
    return %c0_i32, %c0_i32_0 : i32, i32
  }
  func.func @transform_35(%arg0: i32) -> (i32, i32) {
    %c0_i32 = arith.constant 0 : i32
    %c0_i32_0 = arith.constant 0 : i32
    %c0_i32_1 = arith.constant 0 : i32
    return %c0_i32, %c0_i32_0 : i32, i32
  }
  func.func @transform_36(%arg0: i32) -> (i32, i32) {
    %c0_i32 = arith.constant 0 : i32
    %c0_i32_0 = arith.constant 0 : i32
    %c0_i32_1 = arith.constant 0 : i32
    return %c0_i32, %c0_i32_0 : i32, i32
  }
  func.func @transform_37(%arg0: i32) -> (i32, i32, i32) {
    %c0_i32 = arith.constant 0 : i32
    %c0_i32_0 = arith.constant 0 : i32
    %c0_i32_1 = arith.constant 0 : i32
    return %arg0, %c0_i32, %c0_i32_0 : i32, i32, i32
  }
}

</mosaic_0001>

<llo_original>
// kernel: tpu_custom_call.1
$region0: #{tpu_custom_call.1}
  #allocation0 [shape = 'u32[]', space=smem, size = 0x4, offset = 0x4, fixed_abs, tag = 'smem constant byte address 0x4 - core index']
  #allocation1 [shape = 'u32[144,128]{1,0:T(1,128)}', space=vmem, size = 0x12000, scoped, tag = 'internal scratch']
  %s0 = inlined_call_operand.smem [shape: u32[38], index: -1, kind: input, shape index: {}]
  %s1 = sld [smem:[%s0]]
  %s2 = scalar_lea.smem %s0, 1
  %s3 = sld [smem:[%s2]]
  %s4 = scalar_lea.smem %s0, 2
  %s5 = sld [smem:[%s4]]
  %s6 = scalar_lea.smem %s0, 3
  %s7 = sld [smem:[%s6]]
  %s8 = scalar_lea.smem %s0, 4
  %s9 = sld [smem:[%s8]]
  %s10 = scalar_lea.smem %s0, 5
  %s11 = sld [smem:[%s10]]
  %s12 = scalar_lea.smem %s0, 6
  %s13 = sld [smem:[%s12]]
  %s14 = scalar_lea.smem %s0, 7
  %s15 = sld [smem:[%s14]]
  %s16 = scalar_lea.smem %s0, 8
  %s17 = sld [smem:[%s16]]
  %s18 = scalar_lea.smem %s0, 9
  %s19 = sld [smem:[%s18]]
  %s20 = scalar_lea.smem %s0, 10
  %s21 = sld [smem:[%s20]]
  %s22 = scalar_lea.smem %s0, 11
  %s23 = sld [smem:[%s22]]
  %s24 = scalar_lea.smem %s0, 12
  %s25 = sld [smem:[%s24]]
  %s26 = scalar_lea.smem %s0, 13
  %s27 = sld [smem:[%s26]]
  %s28 = scalar_lea.smem %s0, 14
  %s29 = sld [smem:[%s28]]
  %s30 = scalar_lea.smem %s0, 15
  %s31 = sld [smem:[%s30]]
  %s32 = scalar_lea.smem %s0, 16
  %s33 = sld [smem:[%s32]]
  %s34 = scalar_lea.smem %s0, 17
  %s35 = sld [smem:[%s34]]
  %s36 = scalar_lea.smem %s0, 18
  %s37 = sld [smem:[%s36]]
  %s38 = scalar_lea.smem %s0, 19
  %s39 = sld [smem:[%s38]]
  %s40 = scalar_lea.smem %s0, 20
  %s41 = sld [smem:[%s40]]
  %s42 = scalar_lea.smem %s0, 21
  %s43 = sld [smem:[%s42]]
  %s44 = scalar_lea.smem %s0, 22
  %s45 = sld [smem:[%s44]]
  %s46 = scalar_lea.smem %s0, 23
  %s47 = sld [smem:[%s46]]
  %s48 = scalar_lea.smem %s0, 24
  %s49 = sld [smem:[%s48]]
  %s50 = scalar_lea.smem %s0, 25
  %s51 = sld [smem:[%s50]]
  %s52 = scalar_lea.smem %s0, 26
  %s53 = sld [smem:[%s52]]
  %s54 = scalar_lea.smem %s0, 27
  %s55 = sld [smem:[%s54]]
  %s56 = scalar_lea.smem %s0, 28
  %s57 = sld [smem:[%s56]]
  %s58 = scalar_lea.smem %s0, 29
  %s59 = sld [smem:[%s58]]
  %s60 = scalar_lea.smem %s0, 30
  %s61 = sld [smem:[%s60]]
  %s62 = scalar_lea.smem %s0, 31
  %s63 = sld [smem:[%s62]]
  %s64 = scalar_lea.smem %s0, 32
  %s65 = sld [smem:[%s64]]
  %s66 = scalar_lea.smem %s0, 33
  %s67 = sld [smem:[%s66]]
  %s68 = scalar_lea.smem %s0, 34
  %s69 = sld [smem:[%s68]]
  %s70 = scalar_lea.smem %s0, 35
  %s71 = sld [smem:[%s70]]
  %s72 = scalar_lea.smem %s0, 36
  %s73 = sld [smem:[%s72]]
  %s74 = scalar_lea.smem %s0, 37
  %s75 = sld [smem:[%s74]]
  %s76 = sld [smem:[#allocation0]]
  $region241: #{tpu_custom_call.1} parent=0
    _
  %s78 = ssub.s32 1, %s76
  %s79 = scalar_select 0, %s78, %s76
  $region1: #{tpu_custom_call.1} parent=0
    #allocation2 [shape = 'u8[512]{0}', space=vmem, size = 0x400, scoped, tag = 'input window, operand 4, single buffered']
    #allocation3 [shape = 's32[2]{0}', space=sflag, size = 0x8, scoped, tag = 'scoped memory for tpu_custom_call.1']
    #allocation4 [shape = 's32[2]{0}', space=sflag, size = 0x8, scoped, tag = 'scoped memory for tpu_custom_call.1']
    #allocation5 [shape = 'u8[512]{0}', space=vmem, size = 0x400, scoped, tag = 'input window, operand 6, single buffered']
    #allocation6 [shape = 's32[1]{0}', space=sflag, size = 0x4, scoped, tag = 'scoped memory for tpu_custom_call.1']
    #allocation7 [shape = 'u8[512]{0}', space=vmem, size = 0x400, scoped, tag = 'input window, operand 8, single buffered']
    #allocation8 [shape = 'u8[512]{0}', space=vmem, size = 0x400, scoped, tag = 'input window, operand 11, single buffered']
    #allocation9 [shape = 's32[1]{0}', space=sflag, size = 0x4, scoped, tag = 'scoped memory for tpu_custom_call.1']
    #allocation10 [shape = 'u8[512]{0}', space=vmem, size = 0x400, scoped, tag = 'input window, operand 12, single buffered']
    #allocation11 [shape = 'u8[512]{0}', space=vmem, size = 0x400, scoped, tag = 'input window, operand 14, single buffered']
    #allocation12 [shape = 's32[1]{0}', space=sflag, size = 0x4, scoped, tag = 'scoped memory for tpu_custom_call.1']
    #allocation13 [shape = 'u8[512]{0}', space=vmem, size = 0x400, scoped, tag = 'input window, operand 16, single buffered']
    #allocation14 [shape = 'u8[512]{0}', space=vmem, size = 0x400, scoped, tag = 'input window, operand 17, single buffered']
    #allocation15 [shape = 's32[1]{0}', space=sflag, size = 0x4, scoped, tag = 'scoped memory for tpu_custom_call.1']
    #allocation16 [shape = 'u8[512]{0}', space=vmem, size = 0x400, scoped, tag = 'input window, operand 18, single buffered']
    #allocation17 [shape = 'u8[512]{0}', space=vmem, size = 0x400, scoped, tag = 'input window, operand 20, single buffered']
    #allocation18 [shape = 's32[1]{0}', space=sflag, size = 0x4, scoped, tag = 'scoped memory for tpu_custom_call.1']
    #allocation19 [shape = 'u8[512]{0}', space=vmem, size = 0x400, scoped, tag = 'input window, operand 22, single buffered']
    #allocation20 [shape = 'u8[8192]{0}', space=vmem, size = 0x2000, scoped, tag = 'input window, operand 23, single buffered']
    #allocation21 [shape = 's32[1]{0}', space=sflag, size = 0x4, scoped, tag = 'scoped memory for tpu_custom_call.1']
    #allocation22 [shape = 'u8[512]{0}', space=vmem, size = 0x400, scoped, tag = 'input window, operand 24, single buffered']
    #allocation23 [shape = 'u8[8192]{0}', space=vmem, size = 0x2000, scoped, tag = 'input window, operand 25, single buffered']
    #allocation24 [shape = 's32[1]{0}', space=sflag, size = 0x4, scoped, tag = 'scoped memory for tpu_custom_call.1']
    #allocation25 [shape = 'u8[512]{0}', space=vmem, size = 0x400, scoped, tag = 'input window, operand 26, single buffered']
    #allocation26 [shape = 'u8[8192]{0}', space=vmem, size = 0x2000, scoped, tag = 'output window, operand 0']
    %80 = vsyncpa [#allocation3], 0
    %81 = vsyncpa [#allocation6], 0
    %82 = vsyncpa [#allocation9], 0
    %83 = vsyncpa [#allocation12], 0
    %84 = vsyncpa [#allocation15], 0
    %85 = vsyncpa [#allocation18], 0
    %86 = vsyncpa [#allocation21], 0
    %87 = vsyncpa [#allocation24], 0
    %88 = vsyncpa [#allocation4], 0
    %s89 = scalar_lea.sflag [#allocation4], 1
    %90 = vsyncpa %s89, 0
    loop: start=0, step=1, limit=4
    $region2: #{tpu_custom_call.1} parent=1 // loop_pre_header
      _
    $region3: #{tpu_custom_call.1} parent=1 // loop_header
      %s92 = sphi 0, %s96
      %p93 = scmp.ge.s32.totalorder %s92, 4
      %s102 = sphi 0, %s104
      %s105 = sphi 0, %s102
      %s106 = sphi 0, %s105
      %s122 = sphi 0, %s106
      %s128 = sphi 0, %s130
      %s131 = sphi 0, %s128
      %s132 = sphi 0, %s131
      %s148 = sphi 0, %s132
      %s152 = sphi 0, %s152
      %s154 = sphi 0, %s152
      %s155 = sphi 0, %s154
      %s169 = sphi 0, %s155
      %s173 = sphi 0, %s173
      %s175 = sphi 0, %s173
      %s176 = sphi 0, %s175
      %s190 = sphi 0, %s176
      %s194 = sphi 0, %s194
      %s196 = sphi 0, %s194
      %s197 = sphi 0, %s196
      %s211 = sphi 0, %s197
      %s215 = sphi 0, %s215
      %s217 = sphi 0, %s215
      %s218 = sphi 0, %s217
      %s232 = sphi 0, %s218
      %s236 = sphi 0, %s236
      %s238 = sphi 0, %s236
      %s239 = sphi 0, %s238
      %s253 = sphi 0, %s239
      %s257 = sphi 0, %s257
      %s259 = sphi 0, %s257
      %s260 = sphi 0, %s259
      %s274 = sphi 0, %s260
      %s278 = sphi 0, %s278
      %s280 = sphi 0, %s278
      %s281 = sphi 0, %s280
      %s295 = sphi 0, %s281
      %s299 = sphi 0, %s299
      %s301 = sphi 0, %s299
      %s302 = sphi 0, %s301
      %s316 = sphi 0, %s302
      %s320 = sphi 0, %s320
      %s322 = sphi 0, %s320
      %s323 = sphi 0, %s322
      %s337 = sphi 0, %s323
      %s341 = sphi 0, %s341
      %s343 = sphi 0, %s341
      %s344 = sphi 0, %s343
      %s358 = sphi 0, %s344
      %s362 = sphi 0, %s362
      %s364 = sphi 0, %s362
      %s365 = sphi 0, %s364
      %s379 = sphi 0, %s365
      %s383 = sphi 0, %s383
      %s385 = sphi 0, %s383
      %s386 = sphi 0, %s385
      %s400 = sphi 0, %s386
      %s404 = sphi 0, %s404
      %s406 = sphi 0, %s404
      %s407 = sphi 0, %s406
      %s421 = sphi 0, %s407
      %s425 = sphi 0, %s425
      %s427 = sphi 0, %s425
      %s428 = sphi 0, %s427
      %s442 = sphi 0, %s428
      %s446 = sphi 0, %s446
      %s448 = sphi 0, %s446
      %s449 = sphi 0, %s448
      %s463 = sphi 0, %s449
      %s467 = sphi 0, %s467
      %s469 = sphi 0, %s467
      %s470 = sphi 0, %s469
      %s484 = sphi 0, %s470
      %s488 = sphi 0, %s488
      %s490 = sphi 0, %s488
      %s491 = sphi 0, %s490
      %s505 = sphi 0, %s491
      %s509 = sphi 0, %s509
      %s511 = sphi 0, %s509
      %s512 = sphi 0, %s511
      %s526 = sphi 0, %s512
      %s530 = sphi 0, %s530
      %s532 = sphi 0, %s530
      %s533 = sphi 0, %s532
      %s547 = sphi 0, %s533
      %s551 = sphi 0, %s551
      %s553 = sphi 0, %s551
      %s554 = sphi 0, %s553
      %s568 = sphi 0, %s554
      %s572 = sphi 0, %s572
      %s574 = sphi 0, %s572
      %s575 = sphi 0, %s574
      %s589 = sphi 0, %s575
      %s593 = sphi 0, %s593
      %s595 = sphi 0, %s593
      %s596 = sphi 0, %s595
      %s610 = sphi 0, %s596
      %s614 = sphi 0, %s614
      %s616 = sphi 0, %s614
      %s617 = sphi 0, %s616
      %s631 = sphi 0, %s617
      %s635 = sphi 0, %s635
      %s637 = sphi 0, %s635
      %s638 = sphi 0, %s637
      %s652 = sphi 0, %s638
      %s656 = sphi 0, %s656
      %s658 = sphi 0, %s656
      %s659 = sphi 0, %s658
      %s673 = sphi 0, %s659
      %s677 = sphi 0, %s677
      %s679 = sphi 0, %s677
      %s680 = sphi 0, %s679
      %s694 = sphi 0, %s680
      %s698 = sphi 0, %s698
      %s700 = sphi 0, %s698
      %s701 = sphi 0, %s700
      %s715 = sphi 0, %s701
      %s719 = sphi 0, %s719
      %s721 = sphi 0, %s719
      %s722 = sphi 0, %s721
      %s736 = sphi 0, %s722
      %s740 = sphi 0, %s740
      %s742 = sphi 0, %s740
      %s743 = sphi 0, %s742
      %s757 = sphi 0, %s743
      %s761 = sphi 0, %s761
      %s763 = sphi 0, %s761
      %s764 = sphi 0, %s763
      %s778 = sphi 0, %s764
      %s782 = sphi 0, %s782
      %s784 = sphi 0, %s782
      %s785 = sphi 0, %s784
      %s799 = sphi 0, %s785
      %s803 = sphi 0, %s803
      %s805 = sphi 0, %s803
      %s806 = sphi 0, %s805
      %s820 = sphi 0, %s806
      %s824 = sphi 0, %s824
      %s826 = sphi 0, %s824
      %s827 = sphi 0, %s826
      %s841 = sphi 0, %s827
      %s845 = sphi 0, %s845
      %s847 = sphi 0, %s845
      %s848 = sphi 0, %s847
      %s862 = sphi 0, %s848
      %s866 = sphi 0, %s866
      %s868 = sphi 0, %s866
      %s869 = sphi 0, %s868
      %s883 = sphi 0, %s869
      %s889 = sphi 0, %s891
      %s892 = sphi 0, %s889
      %s893 = sphi 0, %s892
      %s909 = sphi 0, %s893
    $region4: #{tpu_custom_call.1} parent=1 // loop_header_branch
      %95 = sbr.rel (%p93) target = $region8
    $region5: #{tpu_custom_call.1} parent=1 // loop_body
      %s97 = ssub.s32 %s92, 1
      %s98 = ssub.s32 %s92, 2
      %s99 = sadd.s32 %s92, 1
      %s100 = ssub.s32 %s92, %s99
      %p101 = scmp.eq.s32.totalorder %s100, 0
      %s103 = sadd.s32 %s102, 1
      %s104 = scalar_select %p101, %s102, %s103
      %p107 = pneg %p101
      %p108 = scmp.eq.s32.totalorder %s92, 1
      %p109 = por %p107, %p108
      %p110 = scmp.ne.s32.totalorder %s102, %s105
      %p111 = scmp.eq.s32.totalorder %s92, 0
      %p112 = por %p110, %p111
      %p113 = scmp.ne.s32.totalorder %s102, %s105
      %p114 = scmp.eq.s32.totalorder %s97, 1
      %p115 = por %p113, %p114
      %p116 = scmp.ne.s32.totalorder %s105, %s106
      %p117 = scmp.eq.s32.totalorder %s97, 0
      %p118 = por %p116, %p117
      %p119 = scmp.ne.s32.totalorder %s105, %s106
      %p120 = scmp.eq.s32.totalorder %s98, 1
      %p121 = por %p119, %p120
      %p123 = scmp.ne.s32.totalorder %s106, %s122
      %p124 = scmp.eq.s32.totalorder %s98, 0
      %p125 = por %p123, %p124
      %s126 = ssub.s32 %s92, %s99
      %p127 = scmp.eq.s32.totalorder %s126, 0
      %s129 = sadd.s32 %s128, 1
      %s130 = scalar_select %p127, %s128, %s129
      %p133 = pneg %p127
      %p134 = scmp.eq.s32.totalorder %s92, 1
      %p135 = por %p133, %p134
      %p136 = scmp.ne.s32.totalorder %s128, %s131
      %p137 = scmp.eq.s32.totalorder %s92, 0
      %p138 = por %p136, %p137
      %p139 = scmp.ne.s32.totalorder %s128, %s131
      %p140 = scmp.eq.s32.totalorder %s97, 1
      %p141 = por %p139, %p140
      %p142 = scmp.ne.s32.totalorder %s131, %s132
      %p143 = scmp.eq.s32.totalorder %s97, 0
      %p144 = por %p142, %p143
      %p145 = scmp.ne.s32.totalorder %s131, %s132
      %p146 = scmp.eq.s32.totalorder %s98, 1
      %p147 = por %p145, %p146
      %p149 = scmp.ne.s32.totalorder %s132, %s148
      %p150 = scmp.eq.s32.totalorder %s98, 0
      %p151 = por %p149, %p150
      %s153 = sadd.s32 %s152, 1
      %p156 = scmp.eq.s32.totalorder %s92, 1
      %p157 = scmp.ne.s32.totalorder %s152, %s154
      %p158 = scmp.eq.s32.totalorder %s92, 0
      %p159 = por %p157, %p158
      %p160 = scmp.ne.s32.totalorder %s152, %s154
      %p161 = scmp.eq.s32.totalorder %s97, 1
      %p162 = por %p160, %p161
      %p163 = scmp.ne.s32.totalorder %s154, %s155
      %p164 = scmp.eq.s32.totalorder %s97, 0
      %p165 = por %p163, %p164
      %p166 = scmp.ne.s32.totalorder %s154, %s155
      %p167 = scmp.eq.s32.totalorder %s98, 1
      %p168 = por %p166, %p167
      %p170 = scmp.ne.s32.totalorder %s155, %s169
      %p171 = scmp.eq.s32.totalorder %s98, 0
      %p172 = por %p170, %p171
      %s174 = sadd.s32 %s173, 1
      %p177 = scmp.eq.s32.totalorder %s92, 1
      %p178 = scmp.ne.s32.totalorder %s173, %s175
      %p179 = scmp.eq.s32.totalorder %s92, 0
      %p180 = por %p178, %p179
      %p181 = scmp.ne.s32.totalorder %s173, %s175
      %p182 = scmp.eq.s32.totalorder %s97, 1
      %p183 = por %p181, %p182
      %p184 = scmp.ne.s32.totalorder %s175, %s176
      %p185 = scmp.eq.s32.totalorder %s97, 0
      %p186 = por %p184, %p185
      %p187 = scmp.ne.s32.totalorder %s175, %s176
      %p188 = scmp.eq.s32.totalorder %s98, 1
      %p189 = por %p187, %p188
      %p191 = scmp.ne.s32.totalorder %s176, %s190
      %p192 = scmp.eq.s32.totalorder %s98, 0
      %p193 = por %p191, %p192
      %s195 = sadd.s32 %s194, 1
      %p198 = scmp.eq.s32.totalorder %s92, 1
      %p199 = scmp.ne.s32.totalorder %s194, %s196
      %p200 = scmp.eq.s32.totalorder %s92, 0
      %p201 = por %p199, %p200
      %p202 = scmp.ne.s32.totalorder %s194, %s196
      %p203 = scmp.eq.s32.totalorder %s97, 1
      %p204 = por %p202, %p203
      %p205 = scmp.ne.s32.totalorder %s196, %s197
      %p206 = scmp.eq.s32.totalorder %s97, 0
      %p207 = por %p205, %p206
      %p208 = scmp.ne.s32.totalorder %s196, %s197
      %p209 = scmp.eq.s32.totalorder %s98, 1
      %p210 = por %p208, %p209
      %p212 = scmp.ne.s32.totalorder %s197, %s211
      %p213 = scmp.eq.s32.totalorder %s98, 0
      %p214 = por %p212, %p213
      %s216 = sadd.s32 %s215, 1
      %p219 = scmp.eq.s32.totalorder %s92, 1
      %p220 = scmp.ne.s32.totalorder %s215, %s217
      %p221 = scmp.eq.s32.totalorder %s92, 0
      %p222 = por %p220, %p221
      %p223 = scmp.ne.s32.totalorder %s215, %s217
      %p224 = scmp.eq.s32.totalorder %s97, 1
      %p225 = por %p223, %p224
      %p226 = scmp.ne.s32.totalorder %s217, %s218
      %p227 = scmp.eq.s32.totalorder %s97, 0
      %p228 = por %p226, %p227
      %p229 = scmp.ne.s32.totalorder %s217, %s218
      %p230 = scmp.eq.s32.totalorder %s98, 1
      %p231 = por %p229, %p230
      %p233 = scmp.ne.s32.totalorder %s218, %s232
      %p234 = scmp.eq.s32.totalorder %s98, 0
      %p235 = por %p233, %p234
      %s237 = sadd.s32 %s236, 1
      %p240 = scmp.eq.s32.totalorder %s92, 1
      %p241 = scmp.ne.s32.totalorder %s236, %s238
      %p242 = scmp.eq.s32.totalorder %s92, 0
      %p243 = por %p241, %p242
      %p244 = scmp.ne.s32.totalorder %s236, %s238
      %p245 = scmp.eq.s32.totalorder %s97, 1
      %p246 = por %p244, %p245
      %p247 = scmp.ne.s32.totalorder %s238, %s239
      %p248 = scmp.eq.s32.totalorder %s97, 0
      %p249 = por %p247, %p248
      %p250 = scmp.ne.s32.totalorder %s238, %s239
      %p251 = scmp.eq.s32.totalorder %s98, 1
      %p252 = por %p250, %p251
      %p254 = scmp.ne.s32.totalorder %s239, %s253
      %p255 = scmp.eq.s32.totalorder %s98, 0
      %p256 = por %p254, %p255
      %s258 = sadd.s32 %s257, 1
      %p261 = scmp.eq.s32.totalorder %s92, 1
      %p262 = scmp.ne.s32.totalorder %s257, %s259
      %p263 = scmp.eq.s32.totalorder %s92, 0
      %p264 = por %p262, %p263
      %p265 = scmp.ne.s32.totalorder %s257, %s259
      %p266 = scmp.eq.s32.totalorder %s97, 1
      %p267 = por %p265, %p266
      %p268 = scmp.ne.s32.totalorder %s259, %s260
      %p269 = scmp.eq.s32.totalorder %s97, 0
      %p270 = por %p268, %p269
      %p271 = scmp.ne.s32.totalorder %s259, %s260
      %p272 = scmp.eq.s32.totalorder %s98, 1
      %p273 = por %p271, %p272
      %p275 = scmp.ne.s32.totalorder %s260, %s274
      %p276 = scmp.eq.s32.totalorder %s98, 0
      %p277 = por %p275, %p276
      %s279 = sadd.s32 %s278, 1
      %p282 = scmp.eq.s32.totalorder %s92, 1
      %p283 = scmp.ne.s32.totalorder %s278, %s280
      %p284 = scmp.eq.s32.totalorder %s92, 0
      %p285 = por %p283, %p284
      %p286 = scmp.ne.s32.totalorder %s278, %s280
      %p287 = scmp.eq.s32.totalorder %s97, 1
      %p288 = por %p286, %p287
      %p289 = scmp.ne.s32.totalorder %s280, %s281
      %p290 = scmp.eq.s32.totalorder %s97, 0
      %p291 = por %p289, %p290
      %p292 = scmp.ne.s32.totalorder %s280, %s281
      %p293 = scmp.eq.s32.totalorder %s98, 1
      %p294 = por %p292, %p293
      %p296 = scmp.ne.s32.totalorder %s281, %s295
      %p297 = scmp.eq.s32.totalorder %s98, 0
      %p298 = por %p296, %p297
      %s300 = sadd.s32 %s299, 1
      %p303 = scmp.eq.s32.totalorder %s92, 1
      %p304 = scmp.ne.s32.totalorder %s299, %s301
      %p305 = scmp.eq.s32.totalorder %s92, 0
      %p306 = por %p304, %p305
      %p307 = scmp.ne.s32.totalorder %s299, %s301
      %p308 = scmp.eq.s32.totalorder %s97, 1
      %p309 = por %p307, %p308
      %p310 = scmp.ne.s32.totalorder %s301, %s302
      %p311 = scmp.eq.s32.totalorder %s97, 0
      %p312 = por %p310, %p311
      %p313 = scmp.ne.s32.totalorder %s301, %s302
      %p314 = scmp.eq.s32.totalorder %s98, 1
      %p315 = por %p313, %p314
      %p317 = scmp.ne.s32.totalorder %s302, %s316
      %p318 = scmp.eq.s32.totalorder %s98, 0
      %p319 = por %p317, %p318
      %s321 = sadd.s32 %s320, 1
      %p324 = scmp.eq.s32.totalorder %s92, 1
      %p325 = scmp.ne.s32.totalorder %s320, %s322
      %p326 = scmp.eq.s32.totalorder %s92, 0
      %p327 = por %p325, %p326
      %p328 = scmp.ne.s32.totalorder %s320, %s322
      %p329 = scmp.eq.s32.totalorder %s97, 1
      %p330 = por %p328, %p329
      %p331 = scmp.ne.s32.totalorder %s322, %s323
      %p332 = scmp.eq.s32.totalorder %s97, 0
      %p333 = por %p331, %p332
      %p334 = scmp.ne.s32.totalorder %s322, %s323
      %p335 = scmp.eq.s32.totalorder %s98, 1
      %p336 = por %p334, %p335
      %p338 = scmp.ne.s32.totalorder %s323, %s337
      %p339 = scmp.eq.s32.totalorder %s98, 0
      %p340 = por %p338, %p339
      %s342 = sadd.s32 %s341, 1
      %p345 = scmp.eq.s32.totalorder %s92, 1
      %p346 = scmp.ne.s32.totalorder %s341, %s343
      %p347 = scmp.eq.s32.totalorder %s92, 0
      %p348 = por %p346, %p347
      %p349 = scmp.ne.s32.totalorder %s341, %s343
      %p350 = scmp.eq.s32.totalorder %s97, 1
      %p351 = por %p349, %p350
      %p352 = scmp.ne.s32.totalorder %s343, %s344
      %p353 = scmp.eq.s32.totalorder %s97, 0
      %p354 = por %p352, %p353
      %p355 = scmp.ne.s32.totalorder %s343, %s344
      %p356 = scmp.eq.s32.totalorder %s98, 1
      %p357 = por %p355, %p356
      %p359 = scmp.ne.s32.totalorder %s344, %s358
      %p360 = scmp.eq.s32.totalorder %s98, 0
      %p361 = por %p359, %p360
      %s363 = sadd.s32 %s362, 1
      %p366 = scmp.eq.s32.totalorder %s92, 1
      %p367 = scmp.ne.s32.totalorder %s362, %s364
      %p368 = scmp.eq.s32.totalorder %s92, 0
      %p369 = por %p367, %p368
      %p370 = scmp.ne.s32.totalorder %s362, %s364
      %p371 = scmp.eq.s32.totalorder %s97, 1
      %p372 = por %p370, %p371
      %p373 = scmp.ne.s32.totalorder %s364, %s365
      %p374 = scmp.eq.s32.totalorder %s97, 0
      %p375 = por %p373, %p374
      %p376 = scmp.ne.s32.totalorder %s364, %s365
      %p377 = scmp.eq.s32.totalorder %s98, 1
      %p378 = por %p376, %p377
      %p380 = scmp.ne.s32.totalorder %s365, %s379
      %p381 = scmp.eq.s32.totalorder %s98, 0
      %p382 = por %p380, %p381
      %s384 = sadd.s32 %s383, 1
      %p387 = scmp.eq.s32.totalorder %s92, 1
      %p388 = scmp.ne.s32.totalorder %s383, %s385
      %p389 = scmp.eq.s32.totalorder %s92, 0
      %p390 = por %p388, %p389
      %p391 = scmp.ne.s32.totalorder %s383, %s385
      %p392 = scmp.eq.s32.totalorder %s97, 1
      %p393 = por %p391, %p392
      %p394 = scmp.ne.s32.totalorder %s385, %s386
      %p395 = scmp.eq.s32.totalorder %s97, 0
      %p396 = por %p394, %p395
      %p397 = scmp.ne.s32.totalorder %s385, %s386
      %p398 = scmp.eq.s32.totalorder %s98, 1
      %p399 = por %p397, %p398
      %p401 = scmp.ne.s32.totalorder %s386, %s400
      %p402 = scmp.eq.s32.totalorder %s98, 0
      %p403 = por %p401, %p402
      %s405 = sadd.s32 %s404, 1
      %p408 = scmp.eq.s32.totalorder %s92, 1
      %p409 = scmp.ne.s32.totalorder %s404, %s406
      %p410 = scmp.eq.s32.totalorder %s92, 0
      %p411 = por %p409, %p410
      %p412 = scmp.ne.s32.totalorder %s404, %s406
      %p413 = scmp.eq.s32.totalorder %s97, 1
      %p414 = por %p412, %p413
      %p415 = scmp.ne.s32.totalorder %s406, %s407
      %p416 = scmp.eq.s32.totalorder %s97, 0
      %p417 = por %p415, %p416
      %p418 = scmp.ne.s32.totalorder %s406, %s407
      %p419 = scmp.eq.s32.totalorder %s98, 1
      %p420 = por %p418, %p419
      %p422 = scmp.ne.s32.totalorder %s407, %s421
      %p423 = scmp.eq.s32.totalorder %s98, 0
      %p424 = por %p422, %p423
      %s426 = sadd.s32 %s425, 1
      %p429 = scmp.eq.s32.totalorder %s92, 1
      %p430 = scmp.ne.s32.totalorder %s425, %s427
      %p431 = scmp.eq.s32.totalorder %s92, 0
      %p432 = por %p430, %p431
      %p433 = scmp.ne.s32.totalorder %s425, %s427
      %p434 = scmp.eq.s32.totalorder %s97, 1
      %p435 = por %p433, %p434
      %p436 = scmp.ne.s32.totalorder %s427, %s428
      %p437 = scmp.eq.s32.totalorder %s97, 0
      %p438 = por %p436, %p437
      %p439 = scmp.ne.s32.totalorder %s427, %s428
      %p440 = scmp.eq.s32.totalorder %s98, 1
      %p441 = por %p439, %p440
      %p443 = scmp.ne.s32.totalorder %s428, %s442
      %p444 = scmp.eq.s32.totalorder %s98, 0
      %p445 = por %p443, %p444
      %s447 = sadd.s32 %s446, 1
      %p450 = scmp.eq.s32.totalorder %s92, 1
      %p451 = scmp.ne.s32.totalorder %s446, %s448
      %p452 = scmp.eq.s32.totalorder %s92, 0
      %p453 = por %p451, %p452
      %p454 = scmp.ne.s32.totalorder %s446, %s448
      %p455 = scmp.eq.s32.totalorder %s97, 1
      %p456 = por %p454, %p455
      %p457 = scmp.ne.s32.totalorder %s448, %s449
      %p458 = scmp.eq.s32.totalorder %s97, 0
      %p459 = por %p457, %p458
      %p460 = scmp.ne.s32.totalorder %s448, %s449
      %p461 = scmp.eq.s32.totalorder %s98, 1
      %p462 = por %p460, %p461
      %p464 = scmp.ne.s32.totalorder %s449, %s463
      %p465 = scmp.eq.s32.totalorder %s98, 0
      %p466 = por %p464, %p465
      %s468 = sadd.s32 %s467, 1
      %p471 = scmp.eq.s32.totalorder %s92, 1
      %p472 = scmp.ne.s32.totalorder %s467, %s469
      %p473 = scmp.eq.s32.totalorder %s92, 0
      %p474 = por %p472, %p473
      %p475 = scmp.ne.s32.totalorder %s467, %s469
      %p476 = scmp.eq.s32.totalorder %s97, 1
      %p477 = por %p475, %p476
      %p478 = scmp.ne.s32.totalorder %s469, %s470
      %p479 = scmp.eq.s32.totalorder %s97, 0
      %p480 = por %p478, %p479
      %p481 = scmp.ne.s32.totalorder %s469, %s470
      %p482 = scmp.eq.s32.totalorder %s98, 1
      %p483 = por %p481, %p482
      %p485 = scmp.ne.s32.totalorder %s470, %s484
      %p486 = scmp.eq.s32.totalorder %s98, 0
      %p487 = por %p485, %p486
      %s489 = sadd.s32 %s488, 1
      %p492 = scmp.eq.s32.totalorder %s92, 1
      %p493 = scmp.ne.s32.totalorder %s488, %s490
      %p494 = scmp.eq.s32.totalorder %s92, 0
      %p495 = por %p493, %p494
      %p496 = scmp.ne.s32.totalorder %s488, %s490
      %p497 = scmp.eq.s32.totalorder %s97, 1
      %p498 = por %p496, %p497
      %p499 = scmp.ne.s32.totalorder %s490, %s491
      %p500 = scmp.eq.s32.totalorder %s97, 0
      %p501 = por %p499, %p500
      %p502 = scmp.ne.s32.totalorder %s490, %s491
      %p503 = scmp.eq.s32.totalorder %s98, 1
      %p504 = por %p502, %p503
      %p506 = scmp.ne.s32.totalorder %s491, %s505
      %p507 = scmp.eq.s32.totalorder %s98, 0
      %p508 = por %p506, %p507
      %s510 = sadd.s32 %s509, 1
      %p513 = scmp.eq.s32.totalorder %s92, 1
      %p514 = scmp.ne.s32.totalorder %s509, %s511
      %p515 = scmp.eq.s32.totalorder %s92, 0
      %p516 = por %p514, %p515
      %p517 = scmp.ne.s32.totalorder %s509, %s511
      %p518 = scmp.eq.s32.totalorder %s97, 1
      %p519 = por %p517, %p518
      %p520 = scmp.ne.s32.totalorder %s511, %s512
      %p521 = scmp.eq.s32.totalorder %s97, 0
      %p522 = por %p520, %p521
      %p523 = scmp.ne.s32.totalorder %s511, %s512
      %p524 = scmp.eq.s32.totalorder %s98, 1
      %p525 = por %p523, %p524
      %p527 = scmp.ne.s32.totalorder %s512, %s526
      %p528 = scmp.eq.s32.totalorder %s98, 0
      %p529 = por %p527, %p528
      %s531 = sadd.s32 %s530, 1
      %p534 = scmp.eq.s32.totalorder %s92, 1
      %p535 = scmp.ne.s32.totalorder %s530, %s532
      %p536 = scmp.eq.s32.totalorder %s92, 0
      %p537 = por %p535, %p536
      %p538 = scmp.ne.s32.totalorder %s530, %s532
      %p539 = scmp.eq.s32.totalorder %s97, 1
      %p540 = por %p538, %p539
      %p541 = scmp.ne.s32.totalorder %s532, %s533
      %p542 = scmp.eq.s32.totalorder %s97, 0
      %p543 = por %p541, %p542
      %p544 = scmp.ne.s32.totalorder %s532, %s533
      %p545 = scmp.eq.s32.totalorder %s98, 1
      %p546 = por %p544, %p545
      %p548 = scmp.ne.s32.totalorder %s533, %s547
      %p549 = scmp.eq.s32.totalorder %s98, 0
      %p550 = por %p548, %p549
      %s552 = sadd.s32 %s551, 1
      %p555 = scmp.eq.s32.totalorder %s92, 1
      %p556 = scmp.ne.s32.totalorder %s551, %s553
      %p557 = scmp.eq.s32.totalorder %s92, 0
      %p558 = por %p556, %p557
      %p559 = scmp.ne.s32.totalorder %s551, %s553
      %p560 = scmp.eq.s32.totalorder %s97, 1
      %p561 = por %p559, %p560
      %p562 = scmp.ne.s32.totalorder %s553, %s554
      %p563 = scmp.eq.s32.totalorder %s97, 0
      %p564 = por %p562, %p563
      %p565 = scmp.ne.s32.totalorder %s553, %s554
      %p566 = scmp.eq.s32.totalorder %s98, 1
      %p567 = por %p565, %p566
      %p569 = scmp.ne.s32.totalorder %s554, %s568
      %p570 = scmp.eq.s32.totalorder %s98, 0
      %p571 = por %p569, %p570
      %s573 = sadd.s32 %s572, 1
      %p576 = scmp.eq.s32.totalorder %s92, 1
      %p577 = scmp.ne.s32.totalorder %s572, %s574
      %p578 = scmp.eq.s32.totalorder %s92, 0
      %p579 = por %p577, %p578
      %p580 = scmp.ne.s32.totalorder %s572, %s574
      %p581 = scmp.eq.s32.totalorder %s97, 1
      %p582 = por %p580, %p581
      %p583 = scmp.ne.s32.totalorder %s574, %s575
      %p584 = scmp.eq.s32.totalorder %s97, 0
      %p585 = por %p583, %p584
      %p586 = scmp.ne.s32.totalorder %s574, %s575
      %p587 = scmp.eq.s32.totalorder %s98, 1
      %p588 = por %p586, %p587
      %p590 = scmp.ne.s32.totalorder %s575, %s589
      %p591 = scmp.eq.s32.totalorder %s98, 0
      %p592 = por %p590, %p591
      %s594 = sadd.s32 %s593, 1
      %p597 = scmp.eq.s32.totalorder %s92, 1
      %p598 = scmp.ne.s32.totalorder %s593, %s595
      %p599 = scmp.eq.s32.totalorder %s92, 0
      %p600 = por %p598, %p599
      %p601 = scmp.ne.s32.totalorder %s593, %s595
      %p602 = scmp.eq.s32.totalorder %s97, 1
      %p603 = por %p601, %p602
      %p604 = scmp.ne.s32.totalorder %s595, %s596
      %p605 = scmp.eq.s32.totalorder %s97, 0
      %p606 = por %p604, %p605
      %p607 = scmp.ne.s32.totalorder %s595, %s596
      %p608 = scmp.eq.s32.totalorder %s98, 1
      %p609 = por %p607, %p608
      %p611 = scmp.ne.s32.totalorder %s596, %s610
      %p612 = scmp.eq.s32.totalorder %s98, 0
      %p613 = por %p611, %p612
      %s615 = sadd.s32 %s614, 1
      %p618 = scmp.eq.s32.totalorder %s92, 1
      %p619 = scmp.ne.s32.totalorder %s614, %s616
      %p620 = scmp.eq.s32.totalorder %s92, 0
      %p621 = por %p619, %p620
      %p622 = scmp.ne.s32.totalorder %s614, %s616
      %p623 = scmp.eq.s32.totalorder %s97, 1
      %p624 = por %p622, %p623
      %p625 = scmp.ne.s32.totalorder %s616, %s617
      %p626 = scmp.eq.s32.totalorder %s97, 0
      %p627 = por %p625, %p626
      %p628 = scmp.ne.s32.totalorder %s616, %s617
      %p629 = scmp.eq.s32.totalorder %s98, 1
      %p630 = por %p628, %p629
      %p632 = scmp.ne.s32.totalorder %s617, %s631
      %p633 = scmp.eq.s32.totalorder %s98, 0
      %p634 = por %p632, %p633
      %s636 = sadd.s32 %s635, 1
      %p639 = scmp.eq.s32.totalorder %s92, 1
      %p640 = scmp.ne.s32.totalorder %s635, %s637
      %p641 = scmp.eq.s32.totalorder %s92, 0
      %p642 = por %p640, %p641
      %p643 = scmp.ne.s32.totalorder %s635, %s637
      %p644 = scmp.eq.s32.totalorder %s97, 1
      %p645 = por %p643, %p644
      %p646 = scmp.ne.s32.totalorder %s637, %s638
      %p647 = scmp.eq.s32.totalorder %s97, 0
      %p648 = por %p646, %p647
      %p649 = scmp.ne.s32.totalorder %s637, %s638
      %p650 = scmp.eq.s32.totalorder %s98, 1
      %p651 = por %p649, %p650
      %p653 = scmp.ne.s32.totalorder %s638, %s652
      %p654 = scmp.eq.s32.totalorder %s98, 0
      %p655 = por %p653, %p654
      %s657 = sadd.s32 %s656, 1
      %p660 = scmp.eq.s32.totalorder %s92, 1
      %p661 = scmp.ne.s32.totalorder %s656, %s658
      %p662 = scmp.eq.s32.totalorder %s92, 0
      %p663 = por %p661, %p662
      %p664 = scmp.ne.s32.totalorder %s656, %s658
      %p665 = scmp.eq.s32.totalorder %s97, 1
      %p666 = por %p664, %p665
      %p667 = scmp.ne.s32.totalorder %s658, %s659
      %p668 = scmp.eq.s32.totalorder %s97, 0
      %p669 = por %p667, %p668
      %p670 = scmp.ne.s32.totalorder %s658, %s659
      %p671 = scmp.eq.s32.totalorder %s98, 1
      %p672 = por %p670, %p671
      %p674 = scmp.ne.s32.totalorder %s659, %s673
      %p675 = scmp.eq.s32.totalorder %s98, 0
      %p676 = por %p674, %p675
      %s678 = sadd.s32 %s677, 1
      %p681 = scmp.eq.s32.totalorder %s92, 1
      %p682 = scmp.ne.s32.totalorder %s677, %s679
      %p683 = scmp.eq.s32.totalorder %s92, 0
      %p684 = por %p682, %p683
      %p685 = scmp.ne.s32.totalorder %s677, %s679
      %p686 = scmp.eq.s32.totalorder %s97, 1
      %p687 = por %p685, %p686
      %p688 = scmp.ne.s32.totalorder %s679, %s680
      %p689 = scmp.eq.s32.totalorder %s97, 0
      %p690 = por %p688, %p689
      %p691 = scmp.ne.s32.totalorder %s679, %s680
      %p692 = scmp.eq.s32.totalorder %s98, 1
      %p693 = por %p691, %p692
      %p695 = scmp.ne.s32.totalorder %s680, %s694
      %p696 = scmp.eq.s32.totalorder %s98, 0
      %p697 = por %p695, %p696
      %s699 = sadd.s32 %s698, 1
      %p702 = scmp.eq.s32.totalorder %s92, 1
      %p703 = scmp.ne.s32.totalorder %s698, %s700
      %p704 = scmp.eq.s32.totalorder %s92, 0
      %p705 = por %p703, %p704
      %p706 = scmp.ne.s32.totalorder %s698, %s700
      %p707 = scmp.eq.s32.totalorder %s97, 1
      %p708 = por %p706, %p707
      %p709 = scmp.ne.s32.totalorder %s700, %s701
      %p710 = scmp.eq.s32.totalorder %s97, 0
      %p711 = por %p709, %p710
      %p712 = scmp.ne.s32.totalorder %s700, %s701
      %p713 = scmp.eq.s32.totalorder %s98, 1
      %p714 = por %p712, %p713
      %p716 = scmp.ne.s32.totalorder %s701, %s715
      %p717 = scmp.eq.s32.totalorder %s98, 0
      %p718 = por %p716, %p717
      %s720 = sadd.s32 %s719, 1
      %p723 = scmp.eq.s32.totalorder %s92, 1
      %p724 = scmp.ne.s32.totalorder %s719, %s721
      %p725 = scmp.eq.s32.totalorder %s92, 0
      %p726 = por %p724, %p725
      %p727 = scmp.ne.s32.totalorder %s719, %s721
      %p728 = scmp.eq.s32.totalorder %s97, 1
      %p729 = por %p727, %p728
      %p730 = scmp.ne.s32.totalorder %s721, %s722
      %p731 = scmp.eq.s32.totalorder %s97, 0
      %p732 = por %p730, %p731
      %p733 = scmp.ne.s32.totalorder %s721, %s722
      %p734 = scmp.eq.s32.totalorder %s98, 1
      %p735 = por %p733, %p734
      %p737 = scmp.ne.s32.totalorder %s722, %s736
      %p738 = scmp.eq.s32.totalorder %s98, 0
      %p739 = por %p737, %p738
      %s741 = sadd.s32 %s740, 1
      %p744 = scmp.eq.s32.totalorder %s92, 1
      %p745 = scmp.ne.s32.totalorder %s740, %s742
      %p746 = scmp.eq.s32.totalorder %s92, 0
      %p747 = por %p745, %p746
      %p748 = scmp.ne.s32.totalorder %s740, %s742
      %p749 = scmp.eq.s32.totalorder %s97, 1
      %p750 = por %p748, %p749
      %p751 = scmp.ne.s32.totalorder %s742, %s743
      %p752 = scmp.eq.s32.totalorder %s97, 0
      %p753 = por %p751, %p752
      %p754 = scmp.ne.s32.totalorder %s742, %s743
      %p755 = scmp.eq.s32.totalorder %s98, 1
      %p756 = por %p754, %p755
      %p758 = scmp.ne.s32.totalorder %s743, %s757
      %p759 = scmp.eq.s32.totalorder %s98, 0
      %p760 = por %p758, %p759
      %s762 = sadd.s32 %s761, 1
      %p765 = scmp.eq.s32.totalorder %s92, 1
      %p766 = scmp.ne.s32.totalorder %s761, %s763
      %p767 = scmp.eq.s32.totalorder %s92, 0
      %p768 = por %p766, %p767
      %p769 = scmp.ne.s32.totalorder %s761, %s763
      %p770 = scmp.eq.s32.totalorder %s97, 1
      %p771 = por %p769, %p770
      %p772 = scmp.ne.s32.totalorder %s763, %s764
      %p773 = scmp.eq.s32.totalorder %s97, 0
      %p774 = por %p772, %p773
      %p775 = scmp.ne.s32.totalorder %s763, %s764
      %p776 = scmp.eq.s32.totalorder %s98, 1
      %p777 = por %p775, %p776
      %p779 = scmp.ne.s32.totalorder %s764, %s778
      %p780 = scmp.eq.s32.totalorder %s98, 0
      %p781 = por %p779, %p780
      %s783 = sadd.s32 %s782, 1
      %p786 = scmp.eq.s32.totalorder %s92, 1
      %p787 = scmp.ne.s32.totalorder %s782, %s784
      %p788 = scmp.eq.s32.totalorder %s92, 0
      %p789 = por %p787, %p788
      %p790 = scmp.ne.s32.totalorder %s782, %s784
      %p791 = scmp.eq.s32.totalorder %s97, 1
      %p792 = por %p790, %p791
      %p793 = scmp.ne.s32.totalorder %s784, %s785
      %p794 = scmp.eq.s32.totalorder %s97, 0
      %p795 = por %p793, %p794
      %p796 = scmp.ne.s32.totalorder %s784, %s785
      %p797 = scmp.eq.s32.totalorder %s98, 1
      %p798 = por %p796, %p797
      %p800 = scmp.ne.s32.totalorder %s785, %s799
      %p801 = scmp.eq.s32.totalorder %s98, 0
      %p802 = por %p800, %p801
      %s804 = sadd.s32 %s803, 1
      %p807 = scmp.eq.s32.totalorder %s92, 1
      %p808 = scmp.ne.s32.totalorder %s803, %s805
      %p809 = scmp.eq.s32.totalorder %s92, 0
      %p810 = por %p808, %p809
      %p811 = scmp.ne.s32.totalorder %s803, %s805
      %p812 = scmp.eq.s32.totalorder %s97, 1
      %p813 = por %p811, %p812
      %p814 = scmp.ne.s32.totalorder %s805, %s806
      %p815 = scmp.eq.s32.totalorder %s97, 0
      %p816 = por %p814, %p815
      %p817 = scmp.ne.s32.totalorder %s805, %s806
      %p818 = scmp.eq.s32.totalorder %s98, 1
      %p819 = por %p817, %p818
      %p821 = scmp.ne.s32.totalorder %s806, %s820
      %p822 = scmp.eq.s32.totalorder %s98, 0
      %p823 = por %p821, %p822
      %s825 = sadd.s32 %s824, 1
      %p828 = scmp.eq.s32.totalorder %s92, 1
      %p829 = scmp.ne.s32.totalorder %s824, %s826
      %p830 = scmp.eq.s32.totalorder %s92, 0
      %p831 = por %p829, %p830
      %p832 = scmp.ne.s32.totalorder %s824, %s826
      %p833 = scmp.eq.s32.totalorder %s97, 1
      %p834 = por %p832, %p833
      %p835 = scmp.ne.s32.totalorder %s826, %s827
      %p836 = scmp.eq.s32.totalorder %s97, 0
      %p837 = por %p835, %p836
      %p838 = scmp.ne.s32.totalorder %s826, %s827
      %p839 = scmp.eq.s32.totalorder %s98, 1
      %p840 = por %p838, %p839
      %p842 = scmp.ne.s32.totalorder %s827, %s841
      %p843 = scmp.eq.s32.totalorder %s98, 0
      %p844 = por %p842, %p843
      %s846 = sadd.s32 %s845, 1
      %p849 = scmp.eq.s32.totalorder %s92, 1
      %p850 = scmp.ne.s32.totalorder %s845, %s847
      %p851 = scmp.eq.s32.totalorder %s92, 0
      %p852 = por %p850, %p851
      %p853 = scmp.ne.s32.totalorder %s845, %s847
      %p854 = scmp.eq.s32.totalorder %s97, 1
      %p855 = por %p853, %p854
      %p856 = scmp.ne.s32.totalorder %s847, %s848
      %p857 = scmp.eq.s32.totalorder %s97, 0
      %p858 = por %p856, %p857
      %p859 = scmp.ne.s32.totalorder %s847, %s848
      %p860 = scmp.eq.s32.totalorder %s98, 1
      %p861 = por %p859, %p860
      %p863 = scmp.ne.s32.totalorder %s848, %s862
      %p864 = scmp.eq.s32.totalorder %s98, 0
      %p865 = por %p863, %p864
      %s867 = sadd.s32 %s866, 1
      %p870 = scmp.eq.s32.totalorder %s92, 1
      %p871 = scmp.ne.s32.totalorder %s866, %s868
      %p872 = scmp.eq.s32.totalorder %s92, 0
      %p873 = por %p871, %p872
      %p874 = scmp.ne.s32.totalorder %s866, %s868
      %p875 = scmp.eq.s32.totalorder %s97, 1
      %p876 = por %p874, %p875
      %p877 = scmp.ne.s32.totalorder %s868, %s869
      %p878 = scmp.eq.s32.totalorder %s97, 0
      %p879 = por %p877, %p878
      %p880 = scmp.ne.s32.totalorder %s868, %s869
      %p881 = scmp.eq.s32.totalorder %s98, 1
      %p882 = por %p880, %p881
      %p884 = scmp.ne.s32.totalorder %s869, %s883
      %p885 = scmp.eq.s32.totalorder %s98, 0
      %p886 = por %p884, %p885
      %s887 = ssub.s32 %s92, %s99
      %p888 = scmp.eq.s32.totalorder %s887, 0
      %s890 = sadd.s32 %s889, 1
      %s891 = scalar_select %p888, %s889, %s890
      %p894 = pneg %p888
      %p895 = scmp.eq.s32.totalorder %s92, 1
      %p896 = por %p894, %p895
      %p897 = scmp.ne.s32.totalorder %s889, %s892
      %p898 = scmp.eq.s32.totalorder %s92, 0
      %p899 = por %p897, %p898
      %p900 = scmp.ne.s32.totalorder %s889, %s892
      %p901 = scmp.eq.s32.totalorder %s97, 1
      %p902 = por %p900, %p901
      %p903 = scmp.ne.s32.totalorder %s892, %s893
      %p904 = scmp.eq.s32.totalorder %s97, 0
      %p905 = por %p903, %p904
      %p906 = scmp.ne.s32.totalorder %s892, %s893
      %p907 = scmp.eq.s32.totalorder %s98, 1
      %p908 = por %p906, %p907
      %p910 = scmp.ne.s32.totalorder %s893, %s909
      %p911 = scmp.eq.s32.totalorder %s98, 0
      %p912 = por %p910, %p911
      %p913 = scmp.le.s32.totalorder 1, %s92
      %p914 = scmp.lt.s32.totalorder %s92, 3
      %p915 = pnand %p913, %p914
      %p916 = pneg %p915
      // Predicated region
      $region9: #{tpu_custom_call.1} parent=5 // pred_check
        _
      $region10: #{tpu_custom_call.1} parent=5 // pred_check_branch
        %918 = sbr.rel (%p915) target = $region12
      $region11: #{tpu_custom_call.1} parent=5 // pred_region
        %s919 = ssub.s32 %s92, 1
        // Predicated region
        $region13: #{tpu_custom_call.1} parent=11 // pred_check
          %p920 = pneg %p165
        $region14: #{tpu_custom_call.1} parent=11 // pred_check_branch
          %922 = sbr.rel (%p920) target = $region16
        $region15: #{tpu_custom_call.1} parent=11 // pred_region
          _
        $region16: #{tpu_custom_call.1} parent=11 // pred_fallthru
          _
        // Predicated region
        $region17: #{tpu_custom_call.1} parent=11 // pred_check
          %p923 = pneg %p186
        $region18: #{tpu_custom_call.1} parent=11 // pred_check_branch
          %925 = sbr.rel (%p923) target = $region20
        $region19: #{tpu_custom_call.1} parent=11 // pred_region
          _
        $region20: #{tpu_custom_call.1} parent=11 // pred_fallthru
          _
        // Predicated region
        $region21: #{tpu_custom_call.1} parent=11 // pred_check
          %p926 = pneg %p207
        $region22: #{tpu_custom_call.1} parent=11 // pred_check_branch
          %928 = sbr.rel (%p926) target = $region24
        $region23: #{tpu_custom_call.1} parent=11 // pred_region
          %s930 = ssub.s32 16, 16
          %931 = vsyncadd [#allocation3], %s930
          %s933 = sshll.u32 [#allocation2], 4
          %s934 = int_to_ptr.vmem [resolvable:$true] %s933
          %936 = dma.hbm_to_vmem [thread:$0]  %s9, 16, %s934, [#allocation3]
        $region24: #{tpu_custom_call.1} parent=11 // pred_fallthru
          _
        // Predicated region
        $region25: #{tpu_custom_call.1} parent=11 // pred_check
          %p937 = pneg %p228
        $region26: #{tpu_custom_call.1} parent=11 // pred_check_branch
          %939 = sbr.rel (%p937) target = $region28
        $region27: #{tpu_custom_call.1} parent=11 // pred_region
          _
        $region28: #{tpu_custom_call.1} parent=11 // pred_fallthru
          _
        // Predicated region
        $region29: #{tpu_custom_call.1} parent=11 // pred_check
          %p940 = pneg %p249
        $region30: #{tpu_custom_call.1} parent=11 // pred_check_branch
          %942 = sbr.rel (%p940) target = $region32
        $region31: #{tpu_custom_call.1} parent=11 // pred_region
          %s944 = ssub.s32 16, 16
          %945 = vsyncadd [#allocation6], %s944
          %s947 = sshll.u32 [#allocation5], 4
          %s948 = int_to_ptr.vmem [resolvable:$true] %s947
          %950 = dma.hbm_to_vmem [thread:$0]  %s13, 16, %s948, [#allocation6]
        $region32: #{tpu_custom_call.1} parent=11 // pred_fallthru
          _
        // Predicated region
        $region33: #{tpu_custom_call.1} parent=11 // pred_check
          %p951 = pneg %p270
        $region34: #{tpu_custom_call.1} parent=11 // pred_check_branch
          %953 = sbr.rel (%p951) target = $region36
        $region35: #{tpu_custom_call.1} parent=11 // pred_region
          _
        $region36: #{tpu_custom_call.1} parent=11 // pred_fallthru
          _
        // Predicated region
        $region37: #{tpu_custom_call.1} parent=11 // pred_check
          %p954 = pneg %p291
        $region38: #{tpu_custom_call.1} parent=11 // pred_check_branch
          %956 = sbr.rel (%p954) target = $region40
        $region39: #{tpu_custom_call.1} parent=11 // pred_region
          %s958 = ssub.s32 16, 16
          %959 = vsyncadd [#allocation6], %s958
          %s961 = sshll.u32 [#allocation7], 4
          %s962 = int_to_ptr.vmem [resolvable:$true] %s961
          %964 = dma.hbm_to_vmem [thread:$0]  %s17, 16, %s962, [#allocation6]
        $region40: #{tpu_custom_call.1} parent=11 // pred_fallthru
          _
        // Predicated region
        $region41: #{tpu_custom_call.1} parent=11 // pred_check
          %p965 = pneg %p312
        $region42: #{tpu_custom_call.1} parent=11 // pred_check_branch
          %967 = sbr.rel (%p965) target = $region44
        $region43: #{tpu_custom_call.1} parent=11 // pred_region
          _
        $region44: #{tpu_custom_call.1} parent=11 // pred_fallthru
          _
        // Predicated region
        $region45: #{tpu_custom_call.1} parent=11 // pred_check
          %p968 = pneg %p333
        $region46: #{tpu_custom_call.1} parent=11 // pred_check_branch
          %970 = sbr.rel (%p968) target = $region48
        $region47: #{tpu_custom_call.1} parent=11 // pred_region
          _
        $region48: #{tpu_custom_call.1} parent=11 // pred_fallthru
          _
        // Predicated region
        $region49: #{tpu_custom_call.1} parent=11 // pred_check
          %p971 = pneg %p354
        $region50: #{tpu_custom_call.1} parent=11 // pred_check_branch
          %973 = sbr.rel (%p971) target = $region52
        $region51: #{tpu_custom_call.1} parent=11 // pred_region
          %s975 = ssub.s32 16, 16
          %976 = vsyncadd [#allocation9], %s975
          %s978 = sshll.u32 [#allocation8], 4
          %s979 = int_to_ptr.vmem [resolvable:$true] %s978
          %981 = dma.hbm_to_vmem [thread:$0]  %s23, 16, %s979, [#allocation9]
        $region52: #{tpu_custom_call.1} parent=11 // pred_fallthru
          _
        // Predicated region
        $region53: #{tpu_custom_call.1} parent=11 // pred_check
          %p982 = pneg %p375
        $region54: #{tpu_custom_call.1} parent=11 // pred_check_branch
          %984 = sbr.rel (%p982) target = $region56
        $region55: #{tpu_custom_call.1} parent=11 // pred_region
          %s986 = ssub.s32 16, 16
          %987 = vsyncadd [#allocation9], %s986
          %s989 = sshll.u32 [#allocation10], 4
          %s990 = int_to_ptr.vmem [resolvable:$true] %s989
          %992 = dma.hbm_to_vmem [thread:$0]  %s25, 16, %s990, [#allocation9]
        $region56: #{tpu_custom_call.1} parent=11 // pred_fallthru
          _
        // Predicated region
        $region57: #{tpu_custom_call.1} parent=11 // pred_check
          %p993 = pneg %p396
        $region58: #{tpu_custom_call.1} parent=11 // pred_check_branch
          %995 = sbr.rel (%p993) target = $region60
        $region59: #{tpu_custom_call.1} parent=11 // pred_region
          _
        $region60: #{tpu_custom_call.1} parent=11 // pred_fallthru
          _
        // Predicated region
        $region61: #{tpu_custom_call.1} parent=11 // pred_check
          %p996 = pneg %p417
        $region62: #{tpu_custom_call.1} parent=11 // pred_check_branch
          %998 = sbr.rel (%p996) target = $region64
        $region63: #{tpu_custom_call.1} parent=11 // pred_region
          %s1000 = ssub.s32 16, 16
          %1001 = vsyncadd [#allocation12], %s1000
          %s1003 = sshll.u32 [#allocation11], 4
          %s1004 = int_to_ptr.vmem [resolvable:$true] %s1003
          %1006 = dma.hbm_to_vmem [thread:$0]  %s29, 16, %s1004, [#allocation12]
        $region64: #{tpu_custom_call.1} parent=11 // pred_fallthru
          _
        // Predicated region
        $region65: #{tpu_custom_call.1} parent=11 // pred_check
          %p1007 = pneg %p438
        $region66: #{tpu_custom_call.1} parent=11 // pred_check_branch
          %1009 = sbr.rel (%p1007) target = $region68
        $region67: #{tpu_custom_call.1} parent=11 // pred_region
          _
        $region68: #{tpu_custom_call.1} parent=11 // pred_fallthru
          _
        // Predicated region
        $region69: #{tpu_custom_call.1} parent=11 // pred_check
          %p1010 = pneg %p459
        $region70: #{tpu_custom_call.1} parent=11 // pred_check_branch
          %1012 = sbr.rel (%p1010) target = $region72
        $region71: #{tpu_custom_call.1} parent=11 // pred_region
          %s1014 = ssub.s32 16, 16
          %1015 = vsyncadd [#allocation12], %s1014
          %s1017 = sshll.u32 [#allocation13], 4
          %s1018 = int_to_ptr.vmem [resolvable:$true] %s1017
          %1020 = dma.hbm_to_vmem [thread:$0]  %s33, 16, %s1018, [#allocation12]
        $region72: #{tpu_custom_call.1} parent=11 // pred_fallthru
          _
        // Predicated region
        $region73: #{tpu_custom_call.1} parent=11 // pred_check
          %p1021 = pneg %p480
        $region74: #{tpu_custom_call.1} parent=11 // pred_check_branch
          %1023 = sbr.rel (%p1021) target = $region76
        $region75: #{tpu_custom_call.1} parent=11 // pred_region
          %s1025 = ssub.s32 16, 16
          %1026 = vsyncadd [#allocation15], %s1025
          %s1028 = sshll.u32 [#allocation14], 4
          %s1029 = int_to_ptr.vmem [resolvable:$true] %s1028
          %1031 = dma.hbm_to_vmem [thread:$0]  %s35, 16, %s1029, [#allocation15]
        $region76: #{tpu_custom_call.1} parent=11 // pred_fallthru
          _
        // Predicated region
        $region77: #{tpu_custom_call.1} parent=11 // pred_check
          %p1032 = pneg %p501
        $region78: #{tpu_custom_call.1} parent=11 // pred_check_branch
          %1034 = sbr.rel (%p1032) target = $region80
        $region79: #{tpu_custom_call.1} parent=11 // pred_region
          %s1036 = ssub.s32 16, 16
          %1037 = vsyncadd [#allocation15], %s1036
          %s1039 = sshll.u32 [#allocation16], 4
          %s1040 = int_to_ptr.vmem [resolvable:$true] %s1039
          %1042 = dma.hbm_to_vmem [thread:$0]  %s37, 16, %s1040, [#allocation15]
        $region80: #{tpu_custom_call.1} parent=11 // pred_fallthru
          _
        // Predicated region
        $region81: #{tpu_custom_call.1} parent=11 // pred_check
          %p1043 = pneg %p522
        $region82: #{tpu_custom_call.1} parent=11 // pred_check_branch
          %1045 = sbr.rel (%p1043) target = $region84
        $region83: #{tpu_custom_call.1} parent=11 // pred_region
          _
        $region84: #{tpu_custom_call.1} parent=11 // pred_fallthru
          _
        // Predicated region
        $region85: #{tpu_custom_call.1} parent=11 // pred_check
          %p1046 = pneg %p543
        $region86: #{tpu_custom_call.1} parent=11 // pred_check_branch
          %1048 = sbr.rel (%p1046) target = $region88
        $region87: #{tpu_custom_call.1} parent=11 // pred_region
          %s1050 = ssub.s32 16, 16
          %1051 = vsyncadd [#allocation18], %s1050
          %s1053 = sshll.u32 [#allocation17], 4
          %s1054 = int_to_ptr.vmem [resolvable:$true] %s1053
          %1056 = dma.hbm_to_vmem [thread:$0]  %s41, 16, %s1054, [#allocation18]
        $region88: #{tpu_custom_call.1} parent=11 // pred_fallthru
          _
        // Predicated region
        $region89: #{tpu_custom_call.1} parent=11 // pred_check
          %p1057 = pneg %p564
        $region90: #{tpu_custom_call.1} parent=11 // pred_check_branch
          %1059 = sbr.rel (%p1057) target = $region92
        $region91: #{tpu_custom_call.1} parent=11 // pred_region
          _
        $region92: #{tpu_custom_call.1} parent=11 // pred_fallthru
          _
        // Predicated region
        $region93: #{tpu_custom_call.1} parent=11 // pred_check
          %p1060 = pneg %p585
        $region94: #{tpu_custom_call.1} parent=11 // pred_check_branch
          %1062 = sbr.rel (%p1060) target = $region96
        $region95: #{tpu_custom_call.1} parent=11 // pred_region
          %s1064 = ssub.s32 16, 16
          %1065 = vsyncadd [#allocation18], %s1064
          %s1067 = sshll.u32 [#allocation19], 4
          %s1068 = int_to_ptr.vmem [resolvable:$true] %s1067
          %1070 = dma.hbm_to_vmem [thread:$0]  %s45, 16, %s1068, [#allocation18]
        $region96: #{tpu_custom_call.1} parent=11 // pred_fallthru
          _
        // Predicated region
        $region97: #{tpu_custom_call.1} parent=11 // pred_check
          %p1071 = pneg %p606
        $region98: #{tpu_custom_call.1} parent=11 // pred_check_branch
          %1073 = sbr.rel (%p1071) target = $region100
        $region99: #{tpu_custom_call.1} parent=11 // pred_region
          %s1075 = ssub.s32 256, 256
          %1076 = vsyncadd [#allocation21], %s1075
          %s1077 = sshll.u32 [#allocation20], 4
          %s1078 = int_to_ptr.vmem [resolvable:$true] %s1077
          %1083 = dma.hbm_to_vmem [thread:$0]  %s47, 256, %s1078, [#allocation21], 64, 64, 4
        $region100: #{tpu_custom_call.1} parent=11 // pred_fallthru
          _
        // Predicated region
        $region101: #{tpu_custom_call.1} parent=11 // pred_check
          %p1084 = pneg %p627
        $region102: #{tpu_custom_call.1} parent=11 // pred_check_branch
          %1086 = sbr.rel (%p1084) target = $region104
        $region103: #{tpu_custom_call.1} parent=11 // pred_region
          %s1088 = ssub.s32 16, 16
          %1089 = vsyncadd [#allocation21], %s1088
          %s1091 = sshll.u32 [#allocation22], 4
          %s1092 = int_to_ptr.vmem [resolvable:$true] %s1091
          %1094 = dma.hbm_to_vmem [thread:$0]  %s49, 16, %s1092, [#allocation21]
        $region104: #{tpu_custom_call.1} parent=11 // pred_fallthru
          _
        // Predicated region
        $region105: #{tpu_custom_call.1} parent=11 // pred_check
          %p1095 = pneg %p648
        $region106: #{tpu_custom_call.1} parent=11 // pred_check_branch
          %1097 = sbr.rel (%p1095) target = $region108
        $region107: #{tpu_custom_call.1} parent=11 // pred_region
          %s1099 = ssub.s32 256, 256
          %1100 = vsyncadd [#allocation24], %s1099
          %s1101 = sshll.u32 [#allocation23], 4
          %s1102 = int_to_ptr.vmem [resolvable:$true] %s1101
          %1107 = dma.hbm_to_vmem [thread:$0]  %s51, 256, %s1102, [#allocation24], 64, 64, 4
        $region108: #{tpu_custom_call.1} parent=11 // pred_fallthru
          _
        // Predicated region
        $region109: #{tpu_custom_call.1} parent=11 // pred_check
          %p1108 = pneg %p669
        $region110: #{tpu_custom_call.1} parent=11 // pred_check_branch
          %1110 = sbr.rel (%p1108) target = $region112
        $region111: #{tpu_custom_call.1} parent=11 // pred_region
          %s1112 = ssub.s32 16, 16
          %1113 = vsyncadd [#allocation24], %s1112
          %s1115 = sshll.u32 [#allocation25], 4
          %s1116 = int_to_ptr.vmem [resolvable:$true] %s1115
          %1118 = dma.hbm_to_vmem [thread:$0]  %s53, 16, %s1116, [#allocation24]
        $region112: #{tpu_custom_call.1} parent=11 // pred_fallthru
          _
        // Predicated region
        $region113: #{tpu_custom_call.1} parent=11 // pred_check
          %p1119 = pneg %p690
        $region114: #{tpu_custom_call.1} parent=11 // pred_check_branch
          %1121 = sbr.rel (%p1119) target = $region116
        $region115: #{tpu_custom_call.1} parent=11 // pred_region
          _
        $region116: #{tpu_custom_call.1} parent=11 // pred_fallthru
          _
        // Predicated region
        $region117: #{tpu_custom_call.1} parent=11 // pred_check
          %p1122 = pneg %p711
        $region118: #{tpu_custom_call.1} parent=11 // pred_check_branch
          %1124 = sbr.rel (%p1122) target = $region120
        $region119: #{tpu_custom_call.1} parent=11 // pred_region
          _
        $region120: #{tpu_custom_call.1} parent=11 // pred_fallthru
          _
        // Predicated region
        $region121: #{tpu_custom_call.1} parent=11 // pred_check
          %p1125 = pneg %p732
        $region122: #{tpu_custom_call.1} parent=11 // pred_check_branch
          %1127 = sbr.rel (%p1125) target = $region124
        $region123: #{tpu_custom_call.1} parent=11 // pred_region
          _
        $region124: #{tpu_custom_call.1} parent=11 // pred_fallthru
          _
        // Predicated region
        $region125: #{tpu_custom_call.1} parent=11 // pred_check
          %p1128 = pneg %p753
        $region126: #{tpu_custom_call.1} parent=11 // pred_check_branch
          %1130 = sbr.rel (%p1128) target = $region128
        $region127: #{tpu_custom_call.1} parent=11 // pred_region
          _
        $region128: #{tpu_custom_call.1} parent=11 // pred_fallthru
          _
        // Predicated region
        $region129: #{tpu_custom_call.1} parent=11 // pred_check
          %p1131 = pneg %p774
        $region130: #{tpu_custom_call.1} parent=11 // pred_check_branch
          %1133 = sbr.rel (%p1131) target = $region132
        $region131: #{tpu_custom_call.1} parent=11 // pred_region
          _
        $region132: #{tpu_custom_call.1} parent=11 // pred_fallthru
          _
        // Predicated region
        $region133: #{tpu_custom_call.1} parent=11 // pred_check
          %p1134 = pneg %p795
        $region134: #{tpu_custom_call.1} parent=11 // pred_check_branch
          %1136 = sbr.rel (%p1134) target = $region136
        $region135: #{tpu_custom_call.1} parent=11 // pred_region
          _
        $region136: #{tpu_custom_call.1} parent=11 // pred_fallthru
          _
        // Predicated region
        $region137: #{tpu_custom_call.1} parent=11 // pred_check
          %p1137 = pneg %p816
        $region138: #{tpu_custom_call.1} parent=11 // pred_check_branch
          %1139 = sbr.rel (%p1137) target = $region140
        $region139: #{tpu_custom_call.1} parent=11 // pred_region
          _
        $region140: #{tpu_custom_call.1} parent=11 // pred_fallthru
          _
        // Predicated region
        $region141: #{tpu_custom_call.1} parent=11 // pred_check
          %p1140 = pneg %p837
        $region142: #{tpu_custom_call.1} parent=11 // pred_check_branch
          %1142 = sbr.rel (%p1140) target = $region144
        $region143: #{tpu_custom_call.1} parent=11 // pred_region
          _
        $region144: #{tpu_custom_call.1} parent=11 // pred_fallthru
          _
        // Predicated region
        $region145: #{tpu_custom_call.1} parent=11 // pred_check
          %p1143 = pneg %p858
        $region146: #{tpu_custom_call.1} parent=11 // pred_check_branch
          %1145 = sbr.rel (%p1143) target = $region148
        $region147: #{tpu_custom_call.1} parent=11 // pred_region
          _
        $region148: #{tpu_custom_call.1} parent=11 // pred_fallthru
          _
        // Predicated region
        $region149: #{tpu_custom_call.1} parent=11 // pred_check
          %p1146 = pneg %p879
        $region150: #{tpu_custom_call.1} parent=11 // pred_check_branch
          %1148 = sbr.rel (%p1146) target = $region152
        $region151: #{tpu_custom_call.1} parent=11 // pred_region
          _
        $region152: #{tpu_custom_call.1} parent=11 // pred_fallthru
          _
      $region12: #{tpu_custom_call.1} parent=5 // pred_fallthru
        _
      %p1149 = scmp.lt.s32.totalorder %s92, 2
      // Predicated region
      $region153: #{tpu_custom_call.1} parent=5 // pred_check
        %p1150 = pneg %p1149
      $region154: #{tpu_custom_call.1} parent=5 // pred_check_branch
        %1152 = sbr.rel (%p1150) target = $region156
      $region155: #{tpu_custom_call.1} parent=5 // pred_region
        // Predicated region
        $region157: #{tpu_custom_call.1} parent=155 // pred_check
          %p1153 = pneg %p112
        $region158: #{tpu_custom_call.1} parent=155 // pred_check_branch
          %1155 = sbr.rel (%p1153) target = $region160
        $region159: #{tpu_custom_call.1} parent=155 // pred_region
          %p1156 = scmp.lt.s32.totalorder %s92, 1
          %s1157 = scalar_select %p1156, %s92, 1
          %s1158 = smul.addr %s1157, 8
          %s1159 = scalar_lea.vmem %s1, %s1158
        $region160: #{tpu_custom_call.1} parent=155 // pred_fallthru
          _
        // Predicated region
        $region161: #{tpu_custom_call.1} parent=155 // pred_check
          %p1160 = pneg %p138
        $region162: #{tpu_custom_call.1} parent=155 // pred_check_branch
          %1162 = sbr.rel (%p1160) target = $region164
        $region163: #{tpu_custom_call.1} parent=155 // pred_region
          %p1163 = scmp.lt.s32.totalorder %s92, 1
          %s1164 = scalar_select %p1163, %s92, 1
          %s1165 = smul.addr %s1164, 8
          %s1166 = scalar_lea.vmem %s3, %s1165
        $region164: #{tpu_custom_call.1} parent=155 // pred_fallthru
          _
      $region156: #{tpu_custom_call.1} parent=5 // pred_fallthru
        _
      %p1167 = scmp.le.s32.totalorder 1, %s92
      %p1168 = scmp.lt.s32.totalorder %s92, 3
      %p1169 = pnand %p1167, %p1168
      %p1170 = pneg %p1169
      // Predicated region
      $region165: #{tpu_custom_call.1} parent=5 // pred_check
        _
      $region166: #{tpu_custom_call.1} parent=5 // pred_check_branch
        %1172 = sbr.rel (%p1169) target = $region168
      $region167: #{tpu_custom_call.1} parent=5 // pred_region
        %s1173 = ssub.s32 %s92, 1
        // Predicated region
        $region169: #{tpu_custom_call.1} parent=167 // pred_check
          %p1174 = pneg %p207
        $region170: #{tpu_custom_call.1} parent=167 // pred_check_branch
          %1176 = sbr.rel (%p1174) target = $region172
        $region171: #{tpu_custom_call.1} parent=167 // pred_region
          %1177 = dma.done [#allocation3], 16
        $region172: #{tpu_custom_call.1} parent=167 // pred_fallthru
          _
        // Predicated region
        $region173: #{tpu_custom_call.1} parent=167 // pred_check
          %p1178 = pneg %p249
        $region174: #{tpu_custom_call.1} parent=167 // pred_check_branch
          %1180 = sbr.rel (%p1178) target = $region176
        $region175: #{tpu_custom_call.1} parent=167 // pred_region
          %1181 = dma.done [#allocation6], 16
        $region176: #{tpu_custom_call.1} parent=167 // pred_fallthru
          _
        // Predicated region
        $region177: #{tpu_custom_call.1} parent=167 // pred_check
          %p1182 = pneg %p291
        $region178: #{tpu_custom_call.1} parent=167 // pred_check_branch
          %1184 = sbr.rel (%p1182) target = $region180
        $region179: #{tpu_custom_call.1} parent=167 // pred_region
          %1185 = dma.done [#allocation6], 16
        $region180: #{tpu_custom_call.1} parent=167 // pred_fallthru
          _
        // Predicated region
        $region181: #{tpu_custom_call.1} parent=167 // pred_check
          %p1186 = pneg %p354
        $region182: #{tpu_custom_call.1} parent=167 // pred_check_branch
          %1188 = sbr.rel (%p1186) target = $region184
        $region183: #{tpu_custom_call.1} parent=167 // pred_region
          %1189 = dma.done [#allocation9], 16
        $region184: #{tpu_custom_call.1} parent=167 // pred_fallthru
          _
        // Predicated region
        $region185: #{tpu_custom_call.1} parent=167 // pred_check
          %p1190 = pneg %p375
        $region186: #{tpu_custom_call.1} parent=167 // pred_check_branch
          %1192 = sbr.rel (%p1190) target = $region188
        $region187: #{tpu_custom_call.1} parent=167 // pred_region
          %1193 = dma.done [#allocation9], 16
        $region188: #{tpu_custom_call.1} parent=167 // pred_fallthru
          _
        // Predicated region
        $region189: #{tpu_custom_call.1} parent=167 // pred_check
          %p1194 = pneg %p417
        $region190: #{tpu_custom_call.1} parent=167 // pred_check_branch
          %1196 = sbr.rel (%p1194) target = $region192
        $region191: #{tpu_custom_call.1} parent=167 // pred_region
          %1197 = dma.done [#allocation12], 16
        $region192: #{tpu_custom_call.1} parent=167 // pred_fallthru
          _
        // Predicated region
        $region193: #{tpu_custom_call.1} parent=167 // pred_check
          %p1198 = pneg %p459
        $region194: #{tpu_custom_call.1} parent=167 // pred_check_branch
          %1200 = sbr.rel (%p1198) target = $region196
        $region195: #{tpu_custom_call.1} parent=167 // pred_region
          %1201 = dma.done [#allocation12], 16
        $region196: #{tpu_custom_call.1} parent=167 // pred_fallthru
          _
        // Predicated region
        $region197: #{tpu_custom_call.1} parent=167 // pred_check
          %p1202 = pneg %p480
        $region198: #{tpu_custom_call.1} parent=167 // pred_check_branch
          %1204 = sbr.rel (%p1202) target = $region200
        $region199: #{tpu_custom_call.1} parent=167 // pred_region
          %1205 = dma.done [#allocation15], 16
        $region200: #{tpu_custom_call.1} parent=167 // pred_fallthru
          _
        // Predicated region
        $region201: #{tpu_custom_call.1} parent=167 // pred_check
          %p1206 = pneg %p501
        $region202: #{tpu_custom_call.1} parent=167 // pred_check_branch
          %1208 = sbr.rel (%p1206) target = $region204
        $region203: #{tpu_custom_call.1} parent=167 // pred_region
          %1209 = dma.done [#allocation15], 16
        $region204: #{tpu_custom_call.1} parent=167 // pred_fallthru
          _
        // Predicated region
        $region205: #{tpu_custom_call.1} parent=167 // pred_check
          %p1210 = pneg %p543
        $region206: #{tpu_custom_call.1} parent=167 // pred_check_branch
          %1212 = sbr.rel (%p1210) target = $region208
        $region207: #{tpu_custom_call.1} parent=167 // pred_region
          %1213 = dma.done [#allocation18], 16
        $region208: #{tpu_custom_call.1} parent=167 // pred_fallthru
          _
        // Predicated region
        $region209: #{tpu_custom_call.1} parent=167 // pred_check
          %p1214 = pneg %p585
        $region210: #{tpu_custom_call.1} parent=167 // pred_check_branch
          %1216 = sbr.rel (%p1214) target = $region212
        $region211: #{tpu_custom_call.1} parent=167 // pred_region
          %1217 = dma.done [#allocation18], 16
        $region212: #{tpu_custom_call.1} parent=167 // pred_fallthru
          _
        // Predicated region
        $region213: #{tpu_custom_call.1} parent=167 // pred_check
          %p1218 = pneg %p606
        $region214: #{tpu_custom_call.1} parent=167 // pred_check_branch
          %1220 = sbr.rel (%p1218) target = $region216
        $region215: #{tpu_custom_call.1} parent=167 // pred_region
          %1221 = dma.done [#allocation21], 256
        $region216: #{tpu_custom_call.1} parent=167 // pred_fallthru
          _
        // Predicated region
        $region217: #{tpu_custom_call.1} parent=167 // pred_check
          %p1222 = pneg %p627
        $region218: #{tpu_custom_call.1} parent=167 // pred_check_branch
          %1224 = sbr.rel (%p1222) target = $region220
        $region219: #{tpu_custom_call.1} parent=167 // pred_region
          %1225 = dma.done [#allocation21], 16
        $region220: #{tpu_custom_call.1} parent=167 // pred_fallthru
          _
        // Predicated region
        $region221: #{tpu_custom_call.1} parent=167 // pred_check
          %p1226 = pneg %p648
        $region222: #{tpu_custom_call.1} parent=167 // pred_check_branch
          %1228 = sbr.rel (%p1226) target = $region224
        $region223: #{tpu_custom_call.1} parent=167 // pred_region
          %1229 = dma.done [#allocation24], 256
        $region224: #{tpu_custom_call.1} parent=167 // pred_fallthru
          _
        // Predicated region
        $region225: #{tpu_custom_call.1} parent=167 // pred_check
          %p1230 = pneg %p669
        $region226: #{tpu_custom_call.1} parent=167 // pred_check_branch
          %1232 = sbr.rel (%p1230) target = $region228
        $region227: #{tpu_custom_call.1} parent=167 // pred_region
          %1233 = dma.done [#allocation24], 16
        $region228: #{tpu_custom_call.1} parent=167 // pred_fallthru
          _
        %p1234 = scmp.lt.s32.totalorder %s97, 1
        %s1235 = scalar_select %p1234, %s97, 1
        %s1236 = smul.addr %s1235, 8
        %s1237 = scalar_lea.vmem %s1, %s1236
        %p1238 = pneg %p118
        %p1239 = pneg %p115
        %p1240 = scmp.lt.s32.totalorder %s97, 1
        %s1241 = scalar_select %p1240, %s97, 1
        %s1242 = smul.addr %s1241, 8
        %s1243 = scalar_lea.vmem %s3, %s1242
        %p1244 = pneg %p144
        %p1245 = pneg %p141
        %p1246 = pneg %p165
        %p1247 = pneg %p162
        %p1248 = pneg %p186
        %p1249 = pneg %p183
        %p1250 = pneg %p207
        %p1251 = pneg %p204
        %p1252 = pneg %p228
        %p1253 = pneg %p225
        %p1254 = pneg %p249
        %p1255 = pneg %p246
        %p1256 = pneg %p270
        %p1257 = pneg %p267
        %p1258 = pneg %p291
        %p1259 = pneg %p288
        %p1260 = pneg %p312
        %p1261 = pneg %p309
        %p1262 = pneg %p333
        %p1263 = pneg %p330
        %p1264 = pneg %p354
        %p1265 = pneg %p351
        %p1266 = pneg %p375
        %p1267 = pneg %p372
        %p1268 = pneg %p396
        %p1269 = pneg %p393
        %p1270 = pneg %p417
        %p1271 = pneg %p414
        %p1272 = pneg %p438
        %p1273 = pneg %p435
        %p1274 = pneg %p459
        %p1275 = pneg %p456
        %p1276 = pneg %p480
        %p1277 = pneg %p477
        %p1278 = pneg %p501
        %p1279 = pneg %p498
        %p1280 = pneg %p522
        %p1281 = pneg %p519
        %p1282 = pneg %p543
        %p1283 = pneg %p540
        %p1284 = pneg %p564
        %p1285 = pneg %p561
        %p1286 = pneg %p585
        %p1287 = pneg %p582
        %p1288 = pneg %p606
        %p1289 = pneg %p603
        %p1290 = pneg %p627
        %p1291 = pneg %p624
        %p1292 = pneg %p648
        %p1293 = pneg %p645
        %p1294 = pneg %p669
        %p1295 = pneg %p666
        %p1296 = pneg %p690
        %p1297 = pneg %p687
        %p1298 = pneg %p711
        %p1299 = pneg %p708
        %p1300 = pneg %p732
        %p1301 = pneg %p729
        %p1302 = pneg %p753
        %p1303 = pneg %p750
        %p1304 = pneg %p774
        %p1305 = pneg %p771
        %p1306 = pneg %p795
        %p1307 = pneg %p792
        %p1308 = pneg %p816
        %p1309 = pneg %p813
        %p1310 = pneg %p837
        %p1311 = pneg %p834
        %p1312 = pneg %p858
        %p1313 = pneg %p855
        %p1314 = pneg %p879
        %p1315 = pneg %p876
        %p1316 = pneg %p905
        %p1317 = pneg %p902
        %s1318 = sand.u32 %s892, 1
        %s1319 = scalar_lea.sflag [#allocation4], %s1318
        %s1320 = sand.u32 %s892, 1
        %s1321 = smul.addr %s1320, 8
        %s1322 = scalar_lea.vmem [#allocation26], %s1321
        %p1323 = scmp.lt.s32.totalorder %s97, 1
        %s1324 = scalar_select %p1323, %s97, 1
        %s1325 = smul.addr %s1324, 8
        %s1326 = scalar_lea.vmem %s1, %s1325
        %p1327 = scmp.lt.s32.totalorder %s97, 1
        %s1328 = scalar_select %p1327, %s97, 1
        %s1329 = smul.addr %s1328, 8
        %s1330 = scalar_lea.vmem %s3, %s1329
        %v1332 = vld [vmem:[%s7] sm:$0xf]
        %v1333 = vld [vmem:[%s7 + $0x4] sm:$0xf]
        %v1334 = vld [vmem:[%s7 + $0x8] sm:$0xf]
        %v1335 = vld [vmem:[%s7 + $0xc] sm:$0xf]
        %v1336 = vld [vmem:[#allocation2] sm:$0x1]
        %v1337 = vld [vmem:[%s11] sm:$0xf]
        %v1338 = vld [vmem:[%s11 + $0x4] sm:$0xf]
        %v1339 = vld [vmem:[%s11 + $0x8] sm:$0xf]
        %v1340 = vld [vmem:[%s11 + $0xc] sm:$0xf]
        %v1341 = vld [vmem:[#allocation5] sm:$0x1]
        %v1342 = vld [vmem:[%s15] sm:$0xf]
        %v1343 = vld [vmem:[%s15 + $0x4] sm:$0xf]
        %v1344 = vld [vmem:[%s15 + $0x8] sm:$0xf]
        %v1345 = vld [vmem:[%s15 + $0xc] sm:$0xf]
        %v1346 = vld [vmem:[#allocation7] sm:$0x1]
        %v1347 = vld [vmem:[%s19] sm:$0xf]
        %v1348 = vld [vmem:[%s19 + $0x4] sm:$0xf]
        %v1349 = vld [vmem:[%s19 + $0x8] sm:$0xf]
        %v1350 = vld [vmem:[%s19 + $0xc] sm:$0xf]
        %v1351 = vld [vmem:[%s21] sm:$0x1]
        %v1352 = vld [vmem:[#allocation8] sm:$0x1]
        %v1353 = vld [vmem:[#allocation10] sm:$0x1]
        %v1354 = vld [vmem:[%s27] sm:$0xf]
        %v1355 = vld [vmem:[%s27 + $0x4] sm:$0xf]
        %v1356 = vld [vmem:[%s27 + $0x8] sm:$0xf]
        %v1357 = vld [vmem:[%s27 + $0xc] sm:$0xf]
        %v1358 = vld [vmem:[#allocation11] sm:$0x1]
        %v1359 = vld [vmem:[%s31] sm:$0xf]
        %v1360 = vld [vmem:[%s31 + $0x4] sm:$0xf]
        %v1361 = vld [vmem:[%s31 + $0x8] sm:$0xf]
        %v1362 = vld [vmem:[%s31 + $0xc] sm:$0xf]
        %v1363 = vld [vmem:[%s31 + $0x10] sm:$0xf]
        %v1364 = vld [vmem:[%s31 + $0x14] sm:$0xf]
        %v1365 = vld [vmem:[%s31 + $0x18] sm:$0xf]
        %v1366 = vld [vmem:[%s31 + $0x1c] sm:$0xf]
        %v1367 = vld [vmem:[#allocation13] sm:$0x1]
        %v1368 = vld [vmem:[#allocation14] sm:$0x1]
        %v1369 = vld [vmem:[#allocation16] sm:$0x1]
        %v1370 = vld [vmem:[%s39] sm:$0xf]
        %v1371 = vld [vmem:[%s39 + $0x4] sm:$0xf]
        %v1372 = vld [vmem:[%s39 + $0x8] sm:$0xf]
        %v1373 = vld [vmem:[%s39 + $0xc] sm:$0xf]
        %v1374 = vld [vmem:[#allocation17] sm:$0x1]
        %v1375 = vld [vmem:[%s43] sm:$0xf]
        %v1376 = vld [vmem:[%s43 + $0x4] sm:$0xf]
        %v1377 = vld [vmem:[%s43 + $0x8] sm:$0xf]
        %v1378 = vld [vmem:[%s43 + $0xc] sm:$0xf]
        %v1379 = vld [vmem:[#allocation19] sm:$0x1]
        %v1380 = vld [vmem:[#allocation20] sm:$0xf]
        %v1381 = vld [vmem:[#allocation20 + $0x4] sm:$0xf]
        %v1382 = vld [vmem:[#allocation20 + $0x8] sm:$0xf]
        %v1383 = vld [vmem:[#allocation20 + $0xc] sm:$0xf]
        %v1384 = vld [vmem:[#allocation22] sm:$0x1]
        %v1385 = vld [vmem:[#allocation23] sm:$0xf]
        %v1386 = vld [vmem:[#allocation23 + $0x4] sm:$0xf]
        %v1387 = vld [vmem:[#allocation23 + $0x8] sm:$0xf]
        %v1388 = vld [vmem:[#allocation23 + $0xc] sm:$0xf]
        %v1389 = vld [vmem:[#allocation25] sm:$0x1]
        %v1390 = vld [vmem:[%s55] sm:$0x1]
        %v1391 = vld [vmem:[%s57] sm:$0x1]
        %v1392 = vld [vmem:[%s59] sm:$0xf]
        %v1393 = vld [vmem:[%s59 + $0x4] sm:$0xf]
        %v1394 = vld [vmem:[%s59 + $0x8] sm:$0xf]
        %v1395 = vld [vmem:[%s59 + $0xc] sm:$0xf]
        %v1396 = vld [vmem:[%s61] sm:$0x1]
        %v1397 = vld [vmem:[%s63] sm:$0xf]
        %v1398 = vld [vmem:[%s63 + $0x4] sm:$0xf]
        %v1399 = vld [vmem:[%s63 + $0x8] sm:$0xf]
        %v1400 = vld [vmem:[%s63 + $0xc] sm:$0xf]
        %v1401 = vld [vmem:[%s63 + $0x10] sm:$0xf]
        %v1402 = vld [vmem:[%s63 + $0x14] sm:$0xf]
        %v1403 = vld [vmem:[%s63 + $0x18] sm:$0xf]
        %v1404 = vld [vmem:[%s63 + $0x1c] sm:$0xf]
        %v1405 = vld [vmem:[%s65] sm:$0x1]
        %v1406 = vld [vmem:[%s67] sm:$0x1]
        %v1407 = vld [vmem:[%s69] sm:$0x1]
        %v1408 = vld [vmem:[%s71] sm:$0x1]
        %v1409 = vld [vmem:[%s73] sm:$0x1]
        %v1410 = vld [vmem:[%s1326] sm:$0xff]
        %v1411 = vld [vmem:[%s1330] sm:$0xff]
        %v1412 = vld [vmem:[%s5] sm:$0xf]
        %v1413 = vld [vmem:[%s5 + $0x4] sm:$0xf]
        %v1414 = vld [vmem:[%s5 + $0x8] sm:$0xf]
        %v1415 = vld [vmem:[%s5 + $0xc] sm:$0xf]
        %v1416 = vpack.c.bf16 %v1410, %v1410
        %v1418 = vlaneseq
        %v1419 = vshrl.u32 %v1418, 7
        %v1420 = vsub.s32 0, %v1419
        %v1421 = vrot.slane %v1336, %v1420
        %v1427 = vunpack.c.l.b16 %v1332
        %v1428 = vunpack.c.l.b16 %v1333
        %v1429 = vunpack.c.l.b16 %v1334
        %v1430 = vunpack.c.l.b16 %v1335
        %v1431 = vpack.c.b16 %v1428, %v1427
        %v1432 = vpack.c.b16 %v1430, %v1429
        %vm1435 = vcmask 261120
        %v1437 = vsel %vm1435, %v1416, 0
        %1439 = vmatprep.subr.bf16.mxu0 0
        %1440 = vmatpush1.bf16.msra.mxu0 0
        %1441 = vmatprep.subr.bf16.mxu0 0
        %1442 = vmatpush1.bf16.msra.mxu0 0
        %1443 = vmatprep.subr.bf16.mxu0 0
        %1444 = vmatpush1.bf16.msra.mxu0 0
        %1445 = vmatprep.subr.bf16.mxu0 0
        %1446 = vmatpush1.bf16.msra.mxu0 0
        %1447 = vmatprep.subr.bf16.mxu0 0
        %1448 = vmatpush1.bf16.msra.mxu0 0
        %1449 = vmatprep.subr.bf16.mxu0 0
        %1450 = vmatpush1.bf16.msra.mxu0 0
        %1451 = vmatprep.subr.bf16.mxu0 0
        %1452 = vmatpush1.bf16.msra.mxu0 %v1432
        %1453 = vmatprep.subr.bf16.mxu0 0
        %1454 = vmatpush1.bf16.msra.mxu0 %v1431
        %1455 = vmatprep.subr.bf16.mxu0 0
        %1456 = vmatpush2.bf16.msra.mxu0 0
        %1457 = vmatprep.subr.bf16.mxu0 0
        %1458 = vmatpush2.bf16.msra.mxu0 0
        %1459 = vmatprep.subr.bf16.mxu0 0
        %1460 = vmatpush2.bf16.msra.mxu0 0
        %1461 = vmatprep.subr.bf16.mxu0 0
        %1462 = vmatpush2.bf16.msra.mxu0 0
        %1463 = vmatprep.subr.bf16.mxu0 0
        %1464 = vmatpush2.bf16.msra.mxu0 0
        %1465 = vmatprep.subr.bf16.mxu0 0
        %1466 = vmatpush2.bf16.msra.mxu0 0
        %1467 = vmatprep.subr.bf16.mxu0 0
        %1468 = vmatpush2.bf16.msra.mxu0 0
        %1469 = vmatprep.subr.bf16.mxu0 0
        %1470 = vmatpush2.bf16.msra.mxu0 0
        %1471 = vmatprep.mubr.bf16.mxu0 0
        %1472 = vmatmul.mubr.bf16.gmra.mxu0 %v1437
        %v1473 = vpop.f32.mrf.mxu0
        %v1474 = vadd.f32 %v1421, %v1473
        %v1475 = vpop.f32.mrf.mxu0
        %v1476 = vpop.f32.mrf.mxu0
        %v1477 = vpop.f32.mrf.mxu0
        %1478 = vdwg.mxu0
        %vm1479 = vcmp.gt.f32.partialorder %v1474, 0.0
        %v1480 = vadd.f32 %v1474, 1.0
        %v1481 = vmul.f32 %v1474, 1.442695
        %v1482 = vpow.pop %v1481
        %v1483 = vsel %vm1479, %v1480, %v1482
        %v1485 = vlaneseq
        %v1486 = vshrl.u32 %v1485, 7
        %v1487 = vsub.s32 0, %v1486
        %v1488 = vrot.slane %v1341, %v1487
        %v1494 = vunpack.c.l.b16 %v1337
        %v1495 = vunpack.c.l.b16 %v1338
        %v1496 = vunpack.c.l.b16 %v1339
        %v1497 = vunpack.c.l.b16 %v1340
        %v1498 = vpack.c.b16 %v1495, %v1494
        %v1499 = vpack.c.b16 %v1497, %v1496
        %1502 = vmatprep.subr.bf16.mxu0 0
        %1503 = vmatpush1.bf16.msra.mxu0 0
        %1504 = vmatprep.subr.bf16.mxu0 0
        %1505 = vmatpush1.bf16.msra.mxu0 0
        %1506 = vmatprep.subr.bf16.mxu0 0
        %1507 = vmatpush1.bf16.msra.mxu0 0
        %1508 = vmatprep.subr.bf16.mxu0 0
        %1509 = vmatpush1.bf16.msra.mxu0 0
        %1510 = vmatprep.subr.bf16.mxu0 0
        %1511 = vmatpush1.bf16.msra.mxu0 0
        %1512 = vmatprep.subr.bf16.mxu0 0
        %1513 = vmatpush1.bf16.msra.mxu0 0
        %1514 = vmatprep.subr.bf16.mxu0 0
        %1515 = vmatpush1.bf16.msra.mxu0 %v1499
        %1516 = vmatprep.subr.bf16.mxu0 0
        %1517 = vmatpush1.bf16.msra.mxu0 %v1498
        %1518 = vmatprep.subr.bf16.mxu0 0
        %1519 = vmatpush2.bf16.msra.mxu0 0
        %1520 = vmatprep.subr.bf16.mxu0 0
        %1521 = vmatpush2.bf16.msra.mxu0 0
        %1522 = vmatprep.subr.bf16.mxu0 0
        %1523 = vmatpush2.bf16.msra.mxu0 0
        %1524 = vmatprep.subr.bf16.mxu0 0
        %1525 = vmatpush2.bf16.msra.mxu0 0
        %1526 = vmatprep.subr.bf16.mxu0 0
        %1527 = vmatpush2.bf16.msra.mxu0 0
        %1528 = vmatprep.subr.bf16.mxu0 0
        %1529 = vmatpush2.bf16.msra.mxu0 0
        %1530 = vmatprep.subr.bf16.mxu0 0
        %1531 = vmatpush2.bf16.msra.mxu0 0
        %1532 = vmatprep.subr.bf16.mxu0 0
        %1533 = vmatpush2.bf16.msra.mxu0 0
        %1534 = vmatprep.mubr.bf16.mxu0 0
        %1535 = vmatmul.mubr.bf16.gmra.mxu0 %v1437
        %v1536 = vpop.f32.mrf.mxu0
        %v1537 = vadd.f32 %v1488, %v1536
        %v1538 = vpop.f32.mrf.mxu0
        %v1539 = vpop.f32.mrf.mxu0
        %v1540 = vpop.f32.mrf.mxu0
        %1541 = vdwg.mxu0
        %vm1542 = vcmp.gt.f32.partialorder %v1537, 0.0
        %v1543 = vadd.f32 %v1537, 1.0
        %v1544 = vmul.f32 %v1537, 1.442695
        %v1545 = vpow.pop %v1544
        %v1546 = vsel %vm1542, %v1543, %v1545
        %1548 = vset.pattern.permute.xlu0 0
        %1549 = vperm.xlu0 %1548, %v1411
        %v1550 = vpop.permute.xlu0 %1549
        %v1552 = vmul.f32 %v1546, %v1550
        %v1554 = vlaneseq
        %v1555 = vshrl.u32 %v1554, 7
        %v1556 = vsub.s32 0, %v1555
        %v1557 = vrot.slane %v1346, %v1556
        %v1563 = vunpack.c.l.b16 %v1342
        %v1564 = vunpack.c.l.b16 %v1343
        %v1565 = vunpack.c.l.b16 %v1344
        %v1566 = vunpack.c.l.b16 %v1345
        %v1567 = vpack.c.b16 %v1564, %v1563
        %v1568 = vpack.c.b16 %v1566, %v1565
        %1571 = vmatprep.subr.bf16.mxu0 0
        %1572 = vmatpush1.bf16.msra.mxu0 0
        %1573 = vmatprep.subr.bf16.mxu0 0
        %1574 = vmatpush1.bf16.msra.mxu0 0
        %1575 = vmatprep.subr.bf16.mxu0 0
        %1576 = vmatpush1.bf16.msra.mxu0 0
        %1577 = vmatprep.subr.bf16.mxu0 0
        %1578 = vmatpush1.bf16.msra.mxu0 0
        %1579 = vmatprep.subr.bf16.mxu0 0
        %1580 = vmatpush1.bf16.msra.mxu0 0
        %1581 = vmatprep.subr.bf16.mxu0 0
        %1582 = vmatpush1.bf16.msra.mxu0 0
        %1583 = vmatprep.subr.bf16.mxu0 0
        %1584 = vmatpush1.bf16.msra.mxu0 %v1568
        %1585 = vmatprep.subr.bf16.mxu0 0
        %1586 = vmatpush1.bf16.msra.mxu0 %v1567
        %1587 = vmatprep.subr.bf16.mxu0 0
        %1588 = vmatpush2.bf16.msra.mxu0 0
        %1589 = vmatprep.subr.bf16.mxu0 0
        %1590 = vmatpush2.bf16.msra.mxu0 0
        %1591 = vmatprep.subr.bf16.mxu0 0
        %1592 = vmatpush2.bf16.msra.mxu0 0
        %1593 = vmatprep.subr.bf16.mxu0 0
        %1594 = vmatpush2.bf16.msra.mxu0 0
        %1595 = vmatprep.subr.bf16.mxu0 0
        %1596 = vmatpush2.bf16.msra.mxu0 0
        %1597 = vmatprep.subr.bf16.mxu0 0
        %1598 = vmatpush2.bf16.msra.mxu0 0
        %1599 = vmatprep.subr.bf16.mxu0 0
        %1600 = vmatpush2.bf16.msra.mxu0 0
        %1601 = vmatprep.subr.bf16.mxu0 0
        %1602 = vmatpush2.bf16.msra.mxu0 0
        %1603 = vmatprep.mubr.bf16.mxu0 0
        %1604 = vmatmul.mubr.bf16.gmra.mxu0 %v1437
        %v1605 = vpop.f32.mrf.mxu0
        %v1606 = vadd.f32 %v1557, %v1605
        %v1607 = vpop.f32.mrf.mxu0
        %v1608 = vpop.f32.mrf.mxu0
        %v1609 = vpop.f32.mrf.mxu0
        %1610 = vdwg.mxu0
        %1611 = vxpose.xlu0.b32.start [1/16] %v1552, 128
        %1612 = vxpose.xlu0.b32.cont [2/16] 0.0, 128
        %1613 = vxpose.xlu0.b32.cont [3/16] 0.0, 128
        %1614 = vxpose.xlu0.b32.cont [4/16] 0.0, 128
        %1615 = vxpose.xlu0.b32.cont [5/16] 0.0, 128
        %1616 = vxpose.xlu0.b32.cont [6/16] 0.0, 128
        %1617 = vxpose.xlu0.b32.cont [7/16] 0.0, 128
        %1618 = vxpose.xlu0.b32.cont [8/16] 0.0, 128
        %1619 = vxpose.xlu0.b32.cont [9/16] 0.0, 128
        %1620 = vxpose.xlu0.b32.cont [10/16] 0.0, 128
        %1621 = vxpose.xlu0.b32.cont [11/16] 0.0, 128
        %1622 = vxpose.xlu0.b32.cont [12/16] 0.0, 128
        %1623 = vxpose.xlu0.b32.cont [13/16] 0.0, 128
        %1624 = vxpose.xlu0.b32.cont [14/16] 0.0, 128
        %1625 = vxpose.xlu0.b32.cont [15/16] 0.0, 128
        %1626 = vxpose.xlu0.b32.end [16/16] 0.0, 128
        %v1627 = vpop.trf.xlu0
        %v1628 = vpop.trf.xlu0
        %v1629 = vpop.trf.xlu0
        %v1630 = vpop.trf.xlu0
        %v1631 = vpop.trf.xlu0
        %v1632 = vpop.trf.xlu0
        %v1633 = vpop.trf.xlu0
        %v1634 = vpop.trf.xlu0
        %v1635 = vpop.trf.xlu0
        %v1636 = vpop.trf.xlu0
        %v1637 = vpop.trf.xlu0
        %v1638 = vpop.trf.xlu0
        %v1639 = vpop.trf.xlu0
        %v1640 = vpop.trf.xlu0
        %v1641 = vpop.trf.xlu0
        %v1642 = vpop.trf.xlu0
        %v1643 = vpack.c.bf16 %v1628, %v1627
        %v1644 = vpack.c.bf16 %v1630, %v1629
        %v1645 = vpack.c.bf16 %v1606, %v1606
        %vm1646 = vcmask 64512
        %v1648 = vsel %vm1646, %v1643, 0
        %v1651 = vsel %vm1646, %v1644, 0
        %vm1653 = vcmask 1043456
        %v1655 = vsel %vm1653, %v1645, 0
        %1657 = vmatprep.subr.bf16.mxu0 0
        %1658 = vmatpush1.bf16.msra.mxu0 0
        %1659 = vmatprep.subr.bf16.mxu0 0
        %1660 = vmatpush1.bf16.msra.mxu0 0
        %1661 = vmatprep.subr.bf16.mxu0 0
        %1662 = vmatpush1.bf16.msra.mxu0 0
        %1663 = vmatprep.subr.bf16.mxu0 0
        %1664 = vmatpush1.bf16.msra.mxu0 0
        %1665 = vmatprep.subr.bf16.mxu0 0
        %1666 = vmatpush1.bf16.msra.mxu0 0
        %1667 = vmatprep.subr.bf16.mxu0 0
        %1668 = vmatpush1.bf16.msra.mxu0 0
        %1669 = vmatprep.subr.bf16.mxu0 0
        %1670 = vmatpush1.bf16.msra.mxu0 0
        %1671 = vmatprep.subr.bf16.mxu0 0
        %1672 = vmatpush1.bf16.msra.mxu0 %v1655
        %1673 = vmatprep.subr.bf16.mxu0 0
        %1674 = vmatpush2.bf16.msra.mxu0 0
        %1675 = vmatprep.subr.bf16.mxu0 0
        %1676 = vmatpush2.bf16.msra.mxu0 0
        %1677 = vmatprep.subr.bf16.mxu0 0
        %1678 = vmatpush2.bf16.msra.mxu0 0
        %1679 = vmatprep.subr.bf16.mxu0 0
        %1680 = vmatpush2.bf16.msra.mxu0 0
        %1681 = vmatprep.subr.bf16.mxu0 0
        %1682 = vmatpush2.bf16.msra.mxu0 0
        %1683 = vmatprep.subr.bf16.mxu0 0
        %1684 = vmatpush2.bf16.msra.mxu0 0
        %1685 = vmatprep.subr.bf16.mxu0 0
        %1686 = vmatpush2.bf16.msra.mxu0 0
        %1687 = vmatprep.subr.bf16.mxu0 0
        %1688 = vmatpush2.bf16.msra.mxu0 0
        %1689 = vmatprep.mubr.bf16.mxu0 0
        %1690 = vmatmul.mubr.bf16.gmra.mxu0 %v1648
        %v1691 = vpop.f32.mrf.mxu0
        %v1692 = vadd.f32 0.0, %v1691
        %v1693 = vpop.f32.mrf.mxu0
        %v1694 = vpop.f32.mrf.mxu0
        %v1695 = vadd.f32 0.0, %v1694
        %v1696 = vpop.f32.mrf.mxu0
        %1697 = vmatprep.mubr.bf16.mxu0 0
        %1698 = vmatmul.mubr.bf16.gmra.mxu0 %v1651
        %v1699 = vpop.f32.mrf.mxu0
        %v1700 = vadd.f32 0.0, %v1699
        %v1701 = vpop.f32.mrf.mxu0
        %v1702 = vpop.f32.mrf.mxu0
        %v1703 = vadd.f32 0.0, %v1702
        %v1704 = vpop.f32.mrf.mxu0
        %1705 = vdwg.mxu0
        %v1706 = vpack.c.bf16 %v1695, %v1692
        %v1707 = vpack.c.bf16 %v1703, %v1700
        %v1712 = vunpack.c.l.b16 %v1412
        %v1713 = vunpack.c.l.b16 %v1413
        %v1714 = vunpack.c.l.b16 %v1414
        %v1715 = vunpack.c.l.b16 %v1415
        %v1716 = vpack.c.b16 %v1713, %v1712
        %v1717 = vpack.c.b16 %v1715, %v1714
        %v1720 = vmul.bf16 %v1706, %v1716
        %v1721 = vmul.bf16 %v1707, %v1717
        %v1722 = vpack.c.bf16 %v1483, %v1483
        %v1724 = vsel %vm1435, %v1722, 0
        %1726 = vmatprep.subr.bf16.mxu0 0
        %1727 = vmatpush1.bf16.msra.mxu0 0
        %1728 = vmatprep.subr.bf16.mxu0 0
        %1729 = vmatpush1.bf16.msra.mxu0 0
        %1730 = vmatprep.subr.bf16.mxu0 0
        %1731 = vmatpush1.bf16.msra.mxu0 0
        %1732 = vmatprep.subr.bf16.mxu0 0
        %1733 = vmatpush1.bf16.msra.mxu0 0
        %1734 = vmatprep.subr.bf16.mxu0 0
        %1735 = vmatpush1.bf16.msra.mxu0 0
        %1736 = vmatprep.subr.bf16.mxu0 0
        %1737 = vmatpush1.bf16.msra.mxu0 0
        %1738 = vmatprep.subr.bf16.mxu0 0
        %1739 = vmatpush1.bf16.msra.mxu0 %v1721
        %1740 = vmatprep.subr.bf16.mxu0 0
        %1741 = vmatpush1.bf16.msra.mxu0 %v1720
        %1742 = vmatprep.subr.bf16.mxu0 0
        %1743 = vmatpush2.bf16.msra.mxu0 0
        %1744 = vmatprep.subr.bf16.mxu0 0
        %1745 = vmatpush2.bf16.msra.mxu0 0
        %1746 = vmatprep.subr.bf16.mxu0 0
        %1747 = vmatpush2.bf16.msra.mxu0 0
        %1748 = vmatprep.subr.bf16.mxu0 0
        %1749 = vmatpush2.bf16.msra.mxu0 0
        %1750 = vmatprep.subr.bf16.mxu0 0
        %1751 = vmatpush2.bf16.msra.mxu0 0
        %1752 = vmatprep.subr.bf16.mxu0 0
        %1753 = vmatpush2.bf16.msra.mxu0 0
        %1754 = vmatprep.subr.bf16.mxu0 0
        %1755 = vmatpush2.bf16.msra.mxu0 0
        %1756 = vmatprep.subr.bf16.mxu0 0
        %1757 = vmatpush2.bf16.msra.mxu0 0
        %1758 = vmatprep.mubr.bf16.mxu0 0
        %1759 = vmatmul.mubr.bf16.gmra.mxu0 %v1724
        %v1760 = vpop.f32.mrf.mxu0
        %v1761 = vadd.f32 0.0, %v1760
        %v1762 = vpop.f32.mrf.mxu0
        %v1763 = vpop.f32.mrf.mxu0
        %v1764 = vpop.f32.mrf.mxu0
        %1765 = vdwg.mxu0
        %v1766 = vsel %vm1435, %v1552, 0.0
        %v1767 = vrot.slane %v1766, 4
        %v1768 = vadd.f32 %v1766, %v1767
        %v1769 = vrot.slane %v1768, 2
        %v1770 = vadd.f32 %v1768, %v1769
        %v1771 = vrot.slane %v1770, 1
        %v1772 = vadd.f32 %v1770, %v1771
        %v1773 = vmul.f32 %v1483, %v1772
        %v1774 = vpack.c.bf16 %v1773, %v1773
        %v1776 = vsel %vm1435, %v1774, 0
        %1778 = vmatprep.subr.bf16.mxu0 0
        %1779 = vmatpush1.bf16.msra.mxu0 0
        %1780 = vmatprep.subr.bf16.mxu0 0
        %1781 = vmatpush1.bf16.msra.mxu0 0
        %1782 = vmatprep.subr.bf16.mxu0 0
        %1783 = vmatpush1.bf16.msra.mxu0 0
        %1784 = vmatprep.subr.bf16.mxu0 0
        %1785 = vmatpush1.bf16.msra.mxu0 0
        %1786 = vmatprep.subr.bf16.mxu0 0
        %1787 = vmatpush1.bf16.msra.mxu0 0
        %1788 = vmatprep.subr.bf16.mxu0 0
        %1789 = vmatpush1.bf16.msra.mxu0 0
        %1790 = vmatprep.subr.bf16.mxu0 0
        %1791 = vmatpush1.bf16.msra.mxu0 %v1717
        %1792 = vmatprep.subr.bf16.mxu0 0
        %1793 = vmatpush1.bf16.msra.mxu0 %v1716
        %1794 = vmatprep.subr.bf16.mxu0 0
        %1795 = vmatpush2.bf16.msra.mxu0 0
        %1796 = vmatprep.subr.bf16.mxu0 0
        %1797 = vmatpush2.bf16.msra.mxu0 0
        %1798 = vmatprep.subr.bf16.mxu0 0
        %1799 = vmatpush2.bf16.msra.mxu0 0
        %1800 = vmatprep.subr.bf16.mxu0 0
        %1801 = vmatpush2.bf16.msra.mxu0 0
        %1802 = vmatprep.subr.bf16.mxu0 0
        %1803 = vmatpush2.bf16.msra.mxu0 0
        %1804 = vmatprep.subr.bf16.mxu0 0
        %1805 = vmatpush2.bf16.msra.mxu0 0
        %1806 = vmatprep.subr.bf16.mxu0 0
        %1807 = vmatpush2.bf16.msra.mxu0 0
        %1808 = vmatprep.subr.bf16.mxu0 0
        %1809 = vmatpush2.bf16.msra.mxu0 0
        %1810 = vmatprep.mubr.bf16.mxu0 0
        %1811 = vmatmul.mubr.bf16.gmra.mxu0 %v1776
        %v1812 = vpop.f32.mrf.mxu0
        %v1813 = vadd.f32 1e-06, %v1812
        %v1814 = vpop.f32.mrf.mxu0
        %v1815 = vpop.f32.mrf.mxu0
        %v1816 = vpop.f32.mrf.mxu0
        %1817 = vdwg.mxu0
        %v1818 = vrcp.pop %v1813
        %v1819 = vmul.f32 %v1761, %v1818
        %v1820 = vpack.c.bf16 %v1819, %v1819
        %v1822 = vlaneseq
        %v1823 = vshrl.u32 %v1822, 7
        %v1824 = vsub.s32 0, %v1823
        %v1825 = vrot.slane %v1351, %v1824
        %v1831 = vunpack.c.l.b16 %v1347
        %v1832 = vunpack.c.l.b16 %v1348
        %v1833 = vunpack.c.l.b16 %v1349
        %v1834 = vunpack.c.l.b16 %v1350
        %v1835 = vpack.c.b16 %v1832, %v1831
        %v1836 = vpack.c.b16 %v1834, %v1833
        %v1840 = vsel %vm1435, %v1820, 0
        %1842 = vmatprep.subr.bf16.mxu0 0
        %1843 = vmatpush1.bf16.msra.mxu0 0
        %1844 = vmatprep.subr.bf16.mxu0 0
        %1845 = vmatpush1.bf16.msra.mxu0 0
        %1846 = vmatprep.subr.bf16.mxu0 0
        %1847 = vmatpush1.bf16.msra.mxu0 0
        %1848 = vmatprep.subr.bf16.mxu0 0
        %1849 = vmatpush1.bf16.msra.mxu0 0
        %1850 = vmatprep.subr.bf16.mxu0 0
        %1851 = vmatpush1.bf16.msra.mxu0 0
        %1852 = vmatprep.subr.bf16.mxu0 0
        %1853 = vmatpush1.bf16.msra.mxu0 0
        %1854 = vmatprep.subr.bf16.mxu0 0
        %1855 = vmatpush1.bf16.msra.mxu0 %v1836
        %1856 = vmatprep.subr.bf16.mxu0 0
        %1857 = vmatpush1.bf16.msra.mxu0 %v1835
        %1858 = vmatprep.subr.bf16.mxu0 0
        %1859 = vmatpush2.bf16.msra.mxu0 0
        %1860 = vmatprep.subr.bf16.mxu0 0
        %1861 = vmatpush2.bf16.msra.mxu0 0
        %1862 = vmatprep.subr.bf16.mxu0 0
        %1863 = vmatpush2.bf16.msra.mxu0 0
        %1864 = vmatprep.subr.bf16.mxu0 0
        %1865 = vmatpush2.bf16.msra.mxu0 0
        %1866 = vmatprep.subr.bf16.mxu0 0
        %1867 = vmatpush2.bf16.msra.mxu0 0
        %1868 = vmatprep.subr.bf16.mxu0 0
        %1869 = vmatpush2.bf16.msra.mxu0 0
        %1870 = vmatprep.subr.bf16.mxu0 0
        %1871 = vmatpush2.bf16.msra.mxu0 0
        %1872 = vmatprep.subr.bf16.mxu0 0
        %1873 = vmatpush2.bf16.msra.mxu0 0
        %1874 = vmatprep.mubr.bf16.mxu0 0
        %1875 = vmatmul.mubr.bf16.gmra.mxu0 %v1840
        %v1876 = vpop.f32.mrf.mxu0
        %v1877 = vadd.f32 %v1825, %v1876
        %v1878 = vpop.f32.mrf.mxu0
        %v1879 = vpop.f32.mrf.mxu0
        %v1880 = vpop.f32.mrf.mxu0
        %1881 = vdwg.mxu0
        %v1882 = vadd.f32 %v1410, %v1877
        %v1883 = vsel %vm1435, %v1882, 0.0
        %1884 = vadd.xlane.f32.xlu0 %v1883
        %v1885 = vpop.xlane.xlu0 %1884
        %v1886 = vmul.f32 %v1882, %v1882
        %v1887 = vsel %vm1435, %v1886, 0.0
        %1888 = vadd.xlane.f32.xlu0 %v1887
        %v1889 = vpop.xlane.xlu0 %1888
        %v1890 = vrcp.pop 32.0
        %v1891 = vmul.f32 %v1885, %v1890
        %v1892 = vmul.f32 %v1889, %v1890
        %v1893 = vmul.f32 %v1891, %v1891
        %v1894 = vsub.f32 %v1892, %v1893
        %v1895 = vadd.f32 %v1894, 1e-05
        %v1896 = vrsqrt.pop %v1895
        %v1897 = vsub.f32 %v1882, %v1891
        %v1898 = vmul.f32 %v1897, %v1896
        %v1900 = vlaneseq
        %v1901 = vshrl.u32 %v1900, 7
        %v1902 = vsub.s32 0, %v1901
        %v1903 = vrot.slane %v1352, %v1902
        %v1905 = vmul.f32 %v1898, %v1903
        %v1907 = vlaneseq
        %v1908 = vshrl.u32 %v1907, 7
        %v1909 = vsub.s32 0, %v1908
        %v1910 = vrot.slane %v1353, %v1909
        %v1912 = vadd.f32 %v1905, %v1910
        %v1913 = vpack.c.bf16 %v1912, %v1912
        %v1915 = vlaneseq
        %v1916 = vshrl.u32 %v1915, 7
        %v1917 = vsub.s32 0, %v1916
        %v1918 = vrot.slane %v1358, %v1917
        %v1924 = vunpack.c.l.b16 %v1354
        %v1925 = vunpack.c.l.b16 %v1355
        %v1926 = vunpack.c.l.b16 %v1356
        %v1927 = vunpack.c.l.b16 %v1357
        %v1928 = vpack.c.b16 %v1925, %v1924
        %v1929 = vpack.c.b16 %v1927, %v1926
        %v1933 = vsel %vm1435, %v1913, 0
        %1935 = vmatprep.subr.bf16.mxu0 0
        %1936 = vmatpush1.bf16.msra.mxu0 0
        %1937 = vmatprep.subr.bf16.mxu0 0
        %1938 = vmatpush1.bf16.msra.mxu0 0
        %1939 = vmatprep.subr.bf16.mxu0 0
        %1940 = vmatpush1.bf16.msra.mxu0 0
        %1941 = vmatprep.subr.bf16.mxu0 0
        %1942 = vmatpush1.bf16.msra.mxu0 0
        %1943 = vmatprep.subr.bf16.mxu0 0
        %1944 = vmatpush1.bf16.msra.mxu0 0
        %1945 = vmatprep.subr.bf16.mxu0 0
        %1946 = vmatpush1.bf16.msra.mxu0 0
        %1947 = vmatprep.subr.bf16.mxu0 0
        %1948 = vmatpush1.bf16.msra.mxu0 %v1929
        %1949 = vmatprep.subr.bf16.mxu0 0
        %1950 = vmatpush1.bf16.msra.mxu0 %v1928
        %1951 = vmatprep.subr.bf16.mxu0 0
        %1952 = vmatpush2.bf16.msra.mxu0 0
        %1953 = vmatprep.subr.bf16.mxu0 0
        %1954 = vmatpush2.bf16.msra.mxu0 0
        %1955 = vmatprep.subr.bf16.mxu0 0
        %1956 = vmatpush2.bf16.msra.mxu0 0
        %1957 = vmatprep.subr.bf16.mxu0 0
        %1958 = vmatpush2.bf16.msra.mxu0 0
        %1959 = vmatprep.subr.bf16.mxu0 0
        %1960 = vmatpush2.bf16.msra.mxu0 0
        %1961 = vmatprep.subr.bf16.mxu0 0
        %1962 = vmatpush2.bf16.msra.mxu0 0
        %1963 = vmatprep.subr.bf16.mxu0 0
        %1964 = vmatpush2.bf16.msra.mxu0 0
        %1965 = vmatprep.subr.bf16.mxu0 0
        %1966 = vmatpush2.bf16.msra.mxu0 0
        %1967 = vmatprep.mubr.bf16.mxu0 0
        %1968 = vmatmul.mubr.bf16.gmra.mxu0 %v1933
        %v1969 = vpop.f32.mrf.mxu0
        %v1970 = vadd.f32 %v1918, %v1969
        %v1971 = vpop.f32.mrf.mxu0
        %v1972 = vpop.f32.mrf.mxu0
        %v1973 = vpop.f32.mrf.mxu0
        %1974 = vdwg.mxu0
        %v1975 = vmul.f32 %v1970, 0.5
        %v1976 = vmul.f32 %v1970, 0.044715
        %v1977 = vmul.f32 %v1976, %v1970
        %v1978 = vmul.f32 %v1977, %v1970
        %v1979 = vadd.f32 %v1970, %v1978
        %v1980 = vmul.f32 %v1979, 0.7978846
        %v1981 = vtanh.pop %v1980
        %v1982 = vadd.f32 %v1981, 1.0
        %v1983 = vmul.f32 %v1975, %v1982
        %v1984 = vpack.c.bf16 %v1983, %v1983
        %v1986 = vlaneseq
        %v1987 = vshrl.u32 %v1986, 7
        %v1988 = vsub.s32 0, %v1987
        %v1989 = vrot.slane %v1367, %v1988
        %v1999 = vunpack.c.l.b16 %v1359
        %v2000 = vunpack.c.l.b16 %v1360
        %v2001 = vunpack.c.l.b16 %v1361
        %v2002 = vunpack.c.l.b16 %v1362
        %v2003 = vunpack.c.l.b16 %v1363
        %v2004 = vunpack.c.l.b16 %v1364
        %v2005 = vunpack.c.l.b16 %v1365
        %v2006 = vunpack.c.l.b16 %v1366
        %v2007 = vpack.c.b16 %v2000, %v1999
        %v2008 = vpack.c.b16 %v2002, %v2001
        %v2009 = vpack.c.b16 %v2004, %v2003
        %v2010 = vpack.c.b16 %v2006, %v2005
        %vm2015 = vcmask 523264
        %v2017 = vsel %vm2015, %v1984, 0
        %2019 = vmatprep.subr.bf16.mxu0 0
        %2020 = vmatpush1.bf16.msra.mxu0 0
        %2021 = vmatprep.subr.bf16.mxu0 0
        %2022 = vmatpush1.bf16.msra.mxu0 0
        %2023 = vmatprep.subr.bf16.mxu0 0
        %2024 = vmatpush1.bf16.msra.mxu0 0
        %2025 = vmatprep.subr.bf16.mxu0 0
        %2026 = vmatpush1.bf16.msra.mxu0 0
        %2027 = vmatprep.subr.bf16.mxu0 0
        %2028 = vmatpush1.bf16.msra.mxu0 %v2010
        %2029 = vmatprep.subr.bf16.mxu0 0
        %2030 = vmatpush1.bf16.msra.mxu0 %v2009
        %2031 = vmatprep.subr.bf16.mxu0 0
        %2032 = vmatpush1.bf16.msra.mxu0 %v2008
        %2033 = vmatprep.subr.bf16.mxu0 0
        %2034 = vmatpush1.bf16.msra.mxu0 %v2007
        %2035 = vmatprep.subr.bf16.mxu0 0
        %2036 = vmatpush2.bf16.msra.mxu0 0
        %2037 = vmatprep.subr.bf16.mxu0 0
        %2038 = vmatpush2.bf16.msra.mxu0 0
        %2039 = vmatprep.subr.bf16.mxu0 0
        %2040 = vmatpush2.bf16.msra.mxu0 0
        %2041 = vmatprep.subr.bf16.mxu0 0
        %2042 = vmatpush2.bf16.msra.mxu0 0
        %2043 = vmatprep.subr.bf16.mxu0 0
        %2044 = vmatpush2.bf16.msra.mxu0 0
        %2045 = vmatprep.subr.bf16.mxu0 0
        %2046 = vmatpush2.bf16.msra.mxu0 0
        %2047 = vmatprep.subr.bf16.mxu0 0
        %2048 = vmatpush2.bf16.msra.mxu0 0
        %2049 = vmatprep.subr.bf16.mxu0 0
        %2050 = vmatpush2.bf16.msra.mxu0 0
        %2051 = vmatprep.mubr.bf16.mxu0 0
        %2052 = vmatmul.mubr.bf16.gmra.mxu0 %v2017
        %v2053 = vpop.f32.mrf.mxu0
        %v2054 = vadd.f32 %v1989, %v2053
        %v2055 = vpop.f32.mrf.mxu0
        %v2056 = vpop.f32.mrf.mxu0
        %v2057 = vpop.f32.mrf.mxu0
        %2058 = vdwg.mxu0
        %v2059 = vadd.f32 %v1912, %v2054
        %v2060 = vsel %vm1435, %v2059, 0.0
        %2061 = vadd.xlane.f32.xlu0 %v2060
        %v2062 = vpop.xlane.xlu0 %2061
        %v2063 = vmul.f32 %v2059, %v2059
        %v2064 = vsel %vm1435, %v2063, 0.0
        %2065 = vadd.xlane.f32.xlu0 %v2064
        %v2066 = vpop.xlane.xlu0 %2065
        %v2067 = vmul.f32 %v2062, %v1890
        %v2068 = vmul.f32 %v2066, %v1890
        %v2069 = vmul.f32 %v2067, %v2067
        %v2070 = vsub.f32 %v2068, %v2069
        %v2071 = vadd.f32 %v2070, 1e-05
        %v2072 = vrsqrt.pop %v2071
        %v2073 = vsub.f32 %v2059, %v2067
        %v2074 = vmul.f32 %v2073, %v2072
        %v2076 = vlaneseq
        %v2077 = vshrl.u32 %v2076, 7
        %v2078 = vsub.s32 0, %v2077
        %v2079 = vrot.slane %v1368, %v2078
        %v2081 = vmul.f32 %v2074, %v2079
        %v2083 = vlaneseq
        %v2084 = vshrl.u32 %v2083, 7
        %v2085 = vsub.s32 0, %v2084
        %v2086 = vrot.slane %v1369, %v2085
        %v2088 = vadd.f32 %v2081, %v2086
        %v2089 = vpack.c.bf16 %v2088, %v2088
        %v2091 = vlaneseq
        %v2092 = vshrl.u32 %v2091, 7
        %v2093 = vsub.s32 0, %v2092
        %v2094 = vrot.slane %v1374, %v2093
        %v2100 = vunpack.c.l.b16 %v1370
        %v2101 = vunpack.c.l.b16 %v1371
        %v2102 = vunpack.c.l.b16 %v1372
        %v2103 = vunpack.c.l.b16 %v1373
        %v2104 = vpack.c.b16 %v2101, %v2100
        %v2105 = vpack.c.b16 %v2103, %v2102
        %v2109 = vsel %vm1435, %v2089, 0
        %2111 = vmatprep.subr.bf16.mxu0 0
        %2112 = vmatpush1.bf16.msra.mxu0 0
        %2113 = vmatprep.subr.bf16.mxu0 0
        %2114 = vmatpush1.bf16.msra.mxu0 0
        %2115 = vmatprep.subr.bf16.mxu0 0
        %2116 = vmatpush1.bf16.msra.mxu0 0
        %2117 = vmatprep.subr.bf16.mxu0 0
        %2118 = vmatpush1.bf16.msra.mxu0 0
        %2119 = vmatprep.subr.bf16.mxu0 0
        %2120 = vmatpush1.bf16.msra.mxu0 0
        %2121 = vmatprep.subr.bf16.mxu0 0
        %2122 = vmatpush1.bf16.msra.mxu0 0
        %2123 = vmatprep.subr.bf16.mxu0 0
        %2124 = vmatpush1.bf16.msra.mxu0 %v2105
        %2125 = vmatprep.subr.bf16.mxu0 0
        %2126 = vmatpush1.bf16.msra.mxu0 %v2104
        %2127 = vmatprep.subr.bf16.mxu0 0
        %2128 = vmatpush2.bf16.msra.mxu0 0
        %2129 = vmatprep.subr.bf16.mxu0 0
        %2130 = vmatpush2.bf16.msra.mxu0 0
        %2131 = vmatprep.subr.bf16.mxu0 0
        %2132 = vmatpush2.bf16.msra.mxu0 0
        %2133 = vmatprep.subr.bf16.mxu0 0
        %2134 = vmatpush2.bf16.msra.mxu0 0
        %2135 = vmatprep.subr.bf16.mxu0 0
        %2136 = vmatpush2.bf16.msra.mxu0 0
        %2137 = vmatprep.subr.bf16.mxu0 0
        %2138 = vmatpush2.bf16.msra.mxu0 0
        %2139 = vmatprep.subr.bf16.mxu0 0
        %2140 = vmatpush2.bf16.msra.mxu0 0
        %2141 = vmatprep.subr.bf16.mxu0 0
        %2142 = vmatpush2.bf16.msra.mxu0 0
        %2143 = vmatprep.mubr.bf16.mxu0 0
        %2144 = vmatmul.mubr.bf16.gmra.mxu0 %v2109
        %v2145 = vpop.f32.mrf.mxu0
        %v2146 = vadd.f32 %v2094, %v2145
        %v2147 = vpop.f32.mrf.mxu0
        %v2148 = vpop.f32.mrf.mxu0
        %v2149 = vpop.f32.mrf.mxu0
        %2150 = vdwg.mxu0
        %vm2151 = vcmp.gt.f32.partialorder %v2146, 0.0
        %v2152 = vadd.f32 %v2146, 1.0
        %v2153 = vmul.f32 %v2146, 1.442695
        %v2154 = vpow.pop %v2153
        %v2155 = vsel %vm2151, %v2152, %v2154
        %v2157 = vlaneseq
        %v2158 = vshrl.u32 %v2157, 7
        %v2159 = vsub.s32 0, %v2158
        %v2160 = vrot.slane %v1379, %v2159
        %v2166 = vunpack.c.l.b16 %v1375
        %v2167 = vunpack.c.l.b16 %v1376
        %v2168 = vunpack.c.l.b16 %v1377
        %v2169 = vunpack.c.l.b16 %v1378
        %v2170 = vpack.c.b16 %v2167, %v2166
        %v2171 = vpack.c.b16 %v2169, %v2168
        %2174 = vmatprep.subr.bf16.mxu0 0
        %2175 = vmatpush1.bf16.msra.mxu0 0
        %2176 = vmatprep.subr.bf16.mxu0 0
        %2177 = vmatpush1.bf16.msra.mxu0 0
        %2178 = vmatprep.subr.bf16.mxu0 0
        %2179 = vmatpush1.bf16.msra.mxu0 0
        %2180 = vmatprep.subr.bf16.mxu0 0
        %2181 = vmatpush1.bf16.msra.mxu0 0
        %2182 = vmatprep.subr.bf16.mxu0 0
        %2183 = vmatpush1.bf16.msra.mxu0 0
        %2184 = vmatprep.subr.bf16.mxu0 0
        %2185 = vmatpush1.bf16.msra.mxu0 0
        %2186 = vmatprep.subr.bf16.mxu0 0
        %2187 = vmatpush1.bf16.msra.mxu0 %v2171
        %2188 = vmatprep.subr.bf16.mxu0 0
        %2189 = vmatpush1.bf16.msra.mxu0 %v2170
        %2190 = vmatprep.subr.bf16.mxu0 0
        %2191 = vmatpush2.bf16.msra.mxu0 0
        %2192 = vmatprep.subr.bf16.mxu0 0
        %2193 = vmatpush2.bf16.msra.mxu0 0
        %2194 = vmatprep.subr.bf16.mxu0 0
        %2195 = vmatpush2.bf16.msra.mxu0 0
        %2196 = vmatprep.subr.bf16.mxu0 0
        %2197 = vmatpush2.bf16.msra.mxu0 0
        %2198 = vmatprep.subr.bf16.mxu0 0
        %2199 = vmatpush2.bf16.msra.mxu0 0
        %2200 = vmatprep.subr.bf16.mxu0 0
        %2201 = vmatpush2.bf16.msra.mxu0 0
        %2202 = vmatprep.subr.bf16.mxu0 0
        %2203 = vmatpush2.bf16.msra.mxu0 0
        %2204 = vmatprep.subr.bf16.mxu0 0
        %2205 = vmatpush2.bf16.msra.mxu0 0
        %2206 = vmatprep.mubr.bf16.mxu0 0
        %2207 = vmatmul.mubr.bf16.gmra.mxu0 %v2109
        %v2208 = vpop.f32.mrf.mxu0
        %v2209 = vadd.f32 %v2160, %v2208
        %v2210 = vpop.f32.mrf.mxu0
        %v2211 = vpop.f32.mrf.mxu0
        %v2212 = vpop.f32.mrf.mxu0
        %2213 = vdwg.mxu0
        %vm2214 = vcmp.gt.f32.partialorder %v2209, 0.0
        %v2215 = vadd.f32 %v2209, 1.0
        %v2216 = vmul.f32 %v2209, 1.442695
        %v2217 = vpow.pop %v2216
        %v2218 = vsel %vm2214, %v2215, %v2217
        %v2219 = vmul.f32 %v2218, %v1550
        %v2221 = vlaneseq
        %v2222 = vshrl.u32 %v2221, 7
        %v2223 = vsub.s32 0, %v2222
        %v2224 = vrot.slane %v1384, %v2223
        %v2230 = vunpack.c.l.b16 %v1380
        %v2231 = vunpack.c.l.b16 %v1381
        %v2232 = vunpack.c.l.b16 %v1382
        %v2233 = vunpack.c.l.b16 %v1383
        %v2234 = vpack.c.b16 %v2231, %v2230
        %v2235 = vpack.c.b16 %v2233, %v2232
        %2238 = vmatprep.subr.bf16.mxu0 0
        %2239 = vmatpush1.bf16.msra.mxu0 0
        %2240 = vmatprep.subr.bf16.mxu0 0
        %2241 = vmatpush1.bf16.msra.mxu0 0
        %2242 = vmatprep.subr.bf16.mxu0 0
        %2243 = vmatpush1.bf16.msra.mxu0 0
        %2244 = vmatprep.subr.bf16.mxu0 0
        %2245 = vmatpush1.bf16.msra.mxu0 0
        %2246 = vmatprep.subr.bf16.mxu0 0
        %2247 = vmatpush1.bf16.msra.mxu0 0
        %2248 = vmatprep.subr.bf16.mxu0 0
        %2249 = vmatpush1.bf16.msra.mxu0 0
        %2250 = vmatprep.subr.bf16.mxu0 0
        %2251 = vmatpush1.bf16.msra.mxu0 %v2235
        %2252 = vmatprep.subr.bf16.mxu0 0
        %2253 = vmatpush1.bf16.msra.mxu0 %v2234
        %2254 = vmatprep.subr.bf16.mxu0 0
        %2255 = vmatpush2.bf16.msra.mxu0 0
        %2256 = vmatprep.subr.bf16.mxu0 0
        %2257 = vmatpush2.bf16.msra.mxu0 0
        %2258 = vmatprep.subr.bf16.mxu0 0
        %2259 = vmatpush2.bf16.msra.mxu0 0
        %2260 = vmatprep.subr.bf16.mxu0 0
        %2261 = vmatpush2.bf16.msra.mxu0 0
        %2262 = vmatprep.subr.bf16.mxu0 0
        %2263 = vmatpush2.bf16.msra.mxu0 0
        %2264 = vmatprep.subr.bf16.mxu0 0
        %2265 = vmatpush2.bf16.msra.mxu0 0
        %2266 = vmatprep.subr.bf16.mxu0 0
        %2267 = vmatpush2.bf16.msra.mxu0 0
        %2268 = vmatprep.subr.bf16.mxu0 0
        %2269 = vmatpush2.bf16.msra.mxu0 0
        %2270 = vmatprep.mubr.bf16.mxu0 0
        %2271 = vmatmul.mubr.bf16.gmra.mxu0 %v2109
        %v2272 = vpop.f32.mrf.mxu0
        %v2273 = vadd.f32 %v2224, %v2272
        %v2274 = vpop.f32.mrf.mxu0
        %v2275 = vpop.f32.mrf.mxu0
        %v2276 = vpop.f32.mrf.mxu0
        %2277 = vdwg.mxu0
        %2278 = vxpose.xlu0.b32.start [1/16] %v2219, 128
        %2279 = vxpose.xlu0.b32.cont [2/16] 0.0, 128
        %2280 = vxpose.xlu0.b32.cont [3/16] 0.0, 128
        %2281 = vxpose.xlu0.b32.cont [4/16] 0.0, 128
        %2282 = vxpose.xlu0.b32.cont [5/16] 0.0, 128
        %2283 = vxpose.xlu0.b32.cont [6/16] 0.0, 128
        %2284 = vxpose.xlu0.b32.cont [7/16] 0.0, 128
        %2285 = vxpose.xlu0.b32.cont [8/16] 0.0, 128
        %2286 = vxpose.xlu0.b32.cont [9/16] 0.0, 128
        %2287 = vxpose.xlu0.b32.cont [10/16] 0.0, 128
        %2288 = vxpose.xlu0.b32.cont [11/16] 0.0, 128
        %2289 = vxpose.xlu0.b32.cont [12/16] 0.0, 128
        %2290 = vxpose.xlu0.b32.cont [13/16] 0.0, 128
        %2291 = vxpose.xlu0.b32.cont [14/16] 0.0, 128
        %2292 = vxpose.xlu0.b32.cont [15/16] 0.0, 128
        %2293 = vxpose.xlu0.b32.end [16/16] 0.0, 128
        %v2294 = vpop.trf.xlu0
        %v2295 = vpop.trf.xlu0
        %v2296 = vpop.trf.xlu0
        %v2297 = vpop.trf.xlu0
        %v2298 = vpop.trf.xlu0
        %v2299 = vpop.trf.xlu0
        %v2300 = vpop.trf.xlu0
        %v2301 = vpop.trf.xlu0
        %v2302 = vpop.trf.xlu0
        %v2303 = vpop.trf.xlu0
        %v2304 = vpop.trf.xlu0
        %v2305 = vpop.trf.xlu0
        %v2306 = vpop.trf.xlu0
        %v2307 = vpop.trf.xlu0
        %v2308 = vpop.trf.xlu0
        %v2309 = vpop.trf.xlu0
        %v2310 = vpack.c.bf16 %v2295, %v2294
        %v2311 = vpack.c.bf16 %v2297, %v2296
        %v2312 = vpack.c.bf16 %v2273, %v2273
        %v2314 = vsel %vm1646, %v2310, 0
        %v2317 = vsel %vm1646, %v2311, 0
        %v2320 = vsel %vm1653, %v2312, 0
        %2322 = vmatprep.subr.bf16.mxu0 0
        %2323 = vmatpush1.bf16.msra.mxu0 0
        %2324 = vmatprep.subr.bf16.mxu0 0
        %2325 = vmatpush1.bf16.msra.mxu0 0
        %2326 = vmatprep.subr.bf16.mxu0 0
        %2327 = vmatpush1.bf16.msra.mxu0 0
        %2328 = vmatprep.subr.bf16.mxu0 0
        %2329 = vmatpush1.bf16.msra.mxu0 0
        %2330 = vmatprep.subr.bf16.mxu0 0
        %2331 = vmatpush1.bf16.msra.mxu0 0
        %2332 = vmatprep.subr.bf16.mxu0 0
        %2333 = vmatpush1.bf16.msra.mxu0 0
        %2334 = vmatprep.subr.bf16.mxu0 0
        %2335 = vmatpush1.bf16.msra.mxu0 0
        %2336 = vmatprep.subr.bf16.mxu0 0
        %2337 = vmatpush1.bf16.msra.mxu0 %v2320
        %2338 = vmatprep.subr.bf16.mxu0 0
        %2339 = vmatpush2.bf16.msra.mxu0 0
        %2340 = vmatprep.subr.bf16.mxu0 0
        %2341 = vmatpush2.bf16.msra.mxu0 0
        %2342 = vmatprep.subr.bf16.mxu0 0
        %2343 = vmatpush2.bf16.msra.mxu0 0
        %2344 = vmatprep.subr.bf16.mxu0 0
        %2345 = vmatpush2.bf16.msra.mxu0 0
        %2346 = vmatprep.subr.bf16.mxu0 0
        %2347 = vmatpush2.bf16.msra.mxu0 0
        %2348 = vmatprep.subr.bf16.mxu0 0
        %2349 = vmatpush2.bf16.msra.mxu0 0
        %2350 = vmatprep.subr.bf16.mxu0 0
        %2351 = vmatpush2.bf16.msra.mxu0 0
        %2352 = vmatprep.subr.bf16.mxu0 0
        %2353 = vmatpush2.bf16.msra.mxu0 0
        %2354 = vmatprep.mubr.bf16.mxu0 0
        %2355 = vmatmul.mubr.bf16.gmra.mxu0 %v2314
        %v2356 = vpop.f32.mrf.mxu0
        %v2357 = vadd.f32 0.0, %v2356
        %v2358 = vpop.f32.mrf.mxu0
        %v2359 = vpop.f32.mrf.mxu0
        %v2360 = vadd.f32 0.0, %v2359
        %v2361 = vpop.f32.mrf.mxu0
        %2362 = vmatprep.mubr.bf16.mxu0 0
        %2363 = vmatmul.mubr.bf16.gmra.mxu0 %v2317
        %v2364 = vpop.f32.mrf.mxu0
        %v2365 = vadd.f32 0.0, %v2364
        %v2366 = vpop.f32.mrf.mxu0
        %v2367 = vpop.f32.mrf.mxu0
        %v2368 = vadd.f32 0.0, %v2367
        %v2369 = vpop.f32.mrf.mxu0
        %2370 = vdwg.mxu0
        %v2371 = vpack.c.bf16 %v2360, %v2357
        %v2372 = vpack.c.bf16 %v2368, %v2365
        %v2373 = vmul.bf16 %v2371, %v1716
        %v2374 = vmul.bf16 %v2372, %v1717
        %v2375 = vpack.c.bf16 %v2155, %v2155
        %v2377 = vsel %vm1435, %v2375, 0
        %2379 = vmatprep.subr.bf16.mxu0 0
        %2380 = vmatpush1.bf16.msra.mxu0 0
        %2381 = vmatprep.subr.bf16.mxu0 0
        %2382 = vmatpush1.bf16.msra.mxu0 0
        %2383 = vmatprep.subr.bf16.mxu0 0
        %2384 = vmatpush1.bf16.msra.mxu0 0
        %2385 = vmatprep.subr.bf16.mxu0 0
        %2386 = vmatpush1.bf16.msra.mxu0 0
        %2387 = vmatprep.subr.bf16.mxu0 0
        %2388 = vmatpush1.bf16.msra.mxu0 0
        %2389 = vmatprep.subr.bf16.mxu0 0
        %2390 = vmatpush1.bf16.msra.mxu0 0
        %2391 = vmatprep.subr.bf16.mxu0 0
        %2392 = vmatpush1.bf16.msra.mxu0 %v2374
        %2393 = vmatprep.subr.bf16.mxu0 0
        %2394 = vmatpush1.bf16.msra.mxu0 %v2373
        %2395 = vmatprep.subr.bf16.mxu0 0
        %2396 = vmatpush2.bf16.msra.mxu0 0
        %2397 = vmatprep.subr.bf16.mxu0 0
        %2398 = vmatpush2.bf16.msra.mxu0 0
        %2399 = vmatprep.subr.bf16.mxu0 0
        %2400 = vmatpush2.bf16.msra.mxu0 0
        %2401 = vmatprep.subr.bf16.mxu0 0
        %2402 = vmatpush2.bf16.msra.mxu0 0
        %2403 = vmatprep.subr.bf16.mxu0 0
        %2404 = vmatpush2.bf16.msra.mxu0 0
        %2405 = vmatprep.subr.bf16.mxu0 0
        %2406 = vmatpush2.bf16.msra.mxu0 0
        %2407 = vmatprep.subr.bf16.mxu0 0
        %2408 = vmatpush2.bf16.msra.mxu0 0
        %2409 = vmatprep.subr.bf16.mxu0 0
        %2410 = vmatpush2.bf16.msra.mxu0 0
        %2411 = vmatprep.mubr.bf16.mxu0 0
        %2412 = vmatmul.mubr.bf16.gmra.mxu0 %v2377
        %v2413 = vpop.f32.mrf.mxu0
        %v2414 = vadd.f32 0.0, %v2413
        %v2415 = vpop.f32.mrf.mxu0
        %v2416 = vpop.f32.mrf.mxu0
        %v2417 = vpop.f32.mrf.mxu0
        %2418 = vdwg.mxu0
        %v2419 = vsel %vm1435, %v2219, 0.0
        %v2420 = vrot.slane %v2419, 4
        %v2421 = vadd.f32 %v2419, %v2420
        %v2422 = vrot.slane %v2421, 2
        %v2423 = vadd.f32 %v2421, %v2422
        %v2424 = vrot.slane %v2423, 1
        %v2425 = vadd.f32 %v2423, %v2424
        %v2426 = vmul.f32 %v2155, %v2425
        %v2427 = vpack.c.bf16 %v2426, %v2426
        %v2429 = vsel %vm1435, %v2427, 0
        %2431 = vmatprep.subr.bf16.mxu0 0
        %2432 = vmatpush1.bf16.msra.mxu0 0
        %2433 = vmatprep.subr.bf16.mxu0 0
        %2434 = vmatpush1.bf16.msra.mxu0 0
        %2435 = vmatprep.subr.bf16.mxu0 0
        %2436 = vmatpush1.bf16.msra.mxu0 0
        %2437 = vmatprep.subr.bf16.mxu0 0
        %2438 = vmatpush1.bf16.msra.mxu0 0
        %2439 = vmatprep.subr.bf16.mxu0 0
        %2440 = vmatpush1.bf16.msra.mxu0 0
        %2441 = vmatprep.subr.bf16.mxu0 0
        %2442 = vmatpush1.bf16.msra.mxu0 0
        %2443 = vmatprep.subr.bf16.mxu0 0
        %2444 = vmatpush1.bf16.msra.mxu0 %v1717
        %2445 = vmatprep.subr.bf16.mxu0 0
        %2446 = vmatpush1.bf16.msra.mxu0 %v1716
        %2447 = vmatprep.subr.bf16.mxu0 0
        %2448 = vmatpush2.bf16.msra.mxu0 0
        %2449 = vmatprep.subr.bf16.mxu0 0
        %2450 = vmatpush2.bf16.msra.mxu0 0
        %2451 = vmatprep.subr.bf16.mxu0 0
        %2452 = vmatpush2.bf16.msra.mxu0 0
        %2453 = vmatprep.subr.bf16.mxu0 0
        %2454 = vmatpush2.bf16.msra.mxu0 0
        %2455 = vmatprep.subr.bf16.mxu0 0
        %2456 = vmatpush2.bf16.msra.mxu0 0
        %2457 = vmatprep.subr.bf16.mxu0 0
        %2458 = vmatpush2.bf16.msra.mxu0 0
        %2459 = vmatprep.subr.bf16.mxu0 0
        %2460 = vmatpush2.bf16.msra.mxu0 0
        %2461 = vmatprep.subr.bf16.mxu0 0
        %2462 = vmatpush2.bf16.msra.mxu0 0
        %2463 = vmatprep.mubr.bf16.mxu0 0
        %2464 = vmatmul.mubr.bf16.gmra.mxu0 %v2429
        %v2465 = vpop.f32.mrf.mxu0
        %v2466 = vadd.f32 1e-06, %v2465
        %v2467 = vpop.f32.mrf.mxu0
        %v2468 = vpop.f32.mrf.mxu0
        %v2469 = vpop.f32.mrf.mxu0
        %2470 = vdwg.mxu0
        %v2471 = vrcp.pop %v2466
        %v2472 = vmul.f32 %v2414, %v2471
        %v2473 = vpack.c.bf16 %v2472, %v2472
        %v2475 = vlaneseq
        %v2476 = vshrl.u32 %v2475, 7
        %v2477 = vsub.s32 0, %v2476
        %v2478 = vrot.slane %v1389, %v2477
        %v2484 = vunpack.c.l.b16 %v1385
        %v2485 = vunpack.c.l.b16 %v1386
        %v2486 = vunpack.c.l.b16 %v1387
        %v2487 = vunpack.c.l.b16 %v1388
        %v2488 = vpack.c.b16 %v2485, %v2484
        %v2489 = vpack.c.b16 %v2487, %v2486
        %v2493 = vsel %vm1435, %v2473, 0
        %2495 = vmatprep.subr.bf16.mxu0 0
        %2496 = vmatpush1.bf16.msra.mxu0 0
        %2497 = vmatprep.subr.bf16.mxu0 0
        %2498 = vmatpush1.bf16.msra.mxu0 0
        %2499 = vmatprep.subr.bf16.mxu0 0
        %2500 = vmatpush1.bf16.msra.mxu0 0
        %2501 = vmatprep.subr.bf16.mxu0 0
        %2502 = vmatpush1.bf16.msra.mxu0 0
        %2503 = vmatprep.subr.bf16.mxu0 0
        %2504 = vmatpush1.bf16.msra.mxu0 0
        %2505 = vmatprep.subr.bf16.mxu0 0
        %2506 = vmatpush1.bf16.msra.mxu0 0
        %2507 = vmatprep.subr.bf16.mxu0 0
        %2508 = vmatpush1.bf16.msra.mxu0 %v2489
        %2509 = vmatprep.subr.bf16.mxu0 0
        %2510 = vmatpush1.bf16.msra.mxu0 %v2488
        %2511 = vmatprep.subr.bf16.mxu0 0
        %2512 = vmatpush2.bf16.msra.mxu0 0
        %2513 = vmatprep.subr.bf16.mxu0 0
        %2514 = vmatpush2.bf16.msra.mxu0 0
        %2515 = vmatprep.subr.bf16.mxu0 0
        %2516 = vmatpush2.bf16.msra.mxu0 0
        %2517 = vmatprep.subr.bf16.mxu0 0
        %2518 = vmatpush2.bf16.msra.mxu0 0
        %2519 = vmatprep.subr.bf16.mxu0 0
        %2520 = vmatpush2.bf16.msra.mxu0 0
        %2521 = vmatprep.subr.bf16.mxu0 0
        %2522 = vmatpush2.bf16.msra.mxu0 0
        %2523 = vmatprep.subr.bf16.mxu0 0
        %2524 = vmatpush2.bf16.msra.mxu0 0
        %2525 = vmatprep.subr.bf16.mxu0 0
        %2526 = vmatpush2.bf16.msra.mxu0 0
        %2527 = vmatprep.mubr.bf16.mxu0 0
        %2528 = vmatmul.mubr.bf16.gmra.mxu0 %v2493
        %v2529 = vpop.f32.mrf.mxu0
        %v2530 = vadd.f32 %v2478, %v2529
        %v2531 = vpop.f32.mrf.mxu0
        %v2532 = vpop.f32.mrf.mxu0
        %v2533 = vpop.f32.mrf.mxu0
        %2534 = vdwg.mxu0
        %v2535 = vadd.f32 %v2088, %v2530
        %v2536 = vsel %vm1435, %v2535, 0.0
        %2537 = vadd.xlane.f32.xlu0 %v2536
        %v2538 = vpop.xlane.xlu0 %2537
        %v2539 = vmul.f32 %v2535, %v2535
        %v2540 = vsel %vm1435, %v2539, 0.0
        %2541 = vadd.xlane.f32.xlu0 %v2540
        %v2542 = vpop.xlane.xlu0 %2541
        %v2543 = vmul.f32 %v2538, %v1890
        %v2544 = vmul.f32 %v2542, %v1890
        %v2545 = vmul.f32 %v2543, %v2543
        %v2546 = vsub.f32 %v2544, %v2545
        %v2547 = vadd.f32 %v2546, 1e-05
        %v2548 = vrsqrt.pop %v2547
        %v2549 = vsub.f32 %v2535, %v2543
        %v2550 = vmul.f32 %v2549, %v2548
        %v2552 = vlaneseq
        %v2553 = vshrl.u32 %v2552, 7
        %v2554 = vsub.s32 0, %v2553
        %v2555 = vrot.slane %v1390, %v2554
        %v2557 = vmul.f32 %v2550, %v2555
        %v2559 = vlaneseq
        %v2560 = vshrl.u32 %v2559, 7
        %v2561 = vsub.s32 0, %v2560
        %v2562 = vrot.slane %v1391, %v2561
        %v2564 = vadd.f32 %v2557, %v2562
        %v2565 = vpack.c.bf16 %v2564, %v2564
        %v2567 = vlaneseq
        %v2568 = vshrl.u32 %v2567, 7
        %v2569 = vsub.s32 0, %v2568
        %v2570 = vrot.slane %v1396, %v2569
        %v2576 = vunpack.c.l.b16 %v1392
        %v2577 = vunpack.c.l.b16 %v1393
        %v2578 = vunpack.c.l.b16 %v1394
        %v2579 = vunpack.c.l.b16 %v1395
        %v2580 = vpack.c.b16 %v2577, %v2576
        %v2581 = vpack.c.b16 %v2579, %v2578
        %v2585 = vsel %vm1435, %v2565, 0
        %2587 = vmatprep.subr.bf16.mxu0 0
        %2588 = vmatpush1.bf16.msra.mxu0 0
        %2589 = vmatprep.subr.bf16.mxu0 0
        %2590 = vmatpush1.bf16.msra.mxu0 0
        %2591 = vmatprep.subr.bf16.mxu0 0
        %2592 = vmatpush1.bf16.msra.mxu0 0
        %2593 = vmatprep.subr.bf16.mxu0 0
        %2594 = vmatpush1.bf16.msra.mxu0 0
        %2595 = vmatprep.subr.bf16.mxu0 0
        %2596 = vmatpush1.bf16.msra.mxu0 0
        %2597 = vmatprep.subr.bf16.mxu0 0
        %2598 = vmatpush1.bf16.msra.mxu0 0
        %2599 = vmatprep.subr.bf16.mxu0 0
        %2600 = vmatpush1.bf16.msra.mxu0 %v2581
        %2601 = vmatprep.subr.bf16.mxu0 0
        %2602 = vmatpush1.bf16.msra.mxu0 %v2580
        %2603 = vmatprep.subr.bf16.mxu0 0
        %2604 = vmatpush2.bf16.msra.mxu0 0
        %2605 = vmatprep.subr.bf16.mxu0 0
        %2606 = vmatpush2.bf16.msra.mxu0 0
        %2607 = vmatprep.subr.bf16.mxu0 0
        %2608 = vmatpush2.bf16.msra.mxu0 0
        %2609 = vmatprep.subr.bf16.mxu0 0
        %2610 = vmatpush2.bf16.msra.mxu0 0
        %2611 = vmatprep.subr.bf16.mxu0 0
        %2612 = vmatpush2.bf16.msra.mxu0 0
        %2613 = vmatprep.subr.bf16.mxu0 0
        %2614 = vmatpush2.bf16.msra.mxu0 0
        %2615 = vmatprep.subr.bf16.mxu0 0
        %2616 = vmatpush2.bf16.msra.mxu0 0
        %2617 = vmatprep.subr.bf16.mxu0 0
        %2618 = vmatpush2.bf16.msra.mxu0 0
        %2619 = vmatprep.mubr.bf16.mxu0 0
        %2620 = vmatmul.mubr.bf16.gmra.mxu0 %v2585
        %v2621 = vpop.f32.mrf.mxu0
        %v2622 = vadd.f32 %v2570, %v2621
        %v2623 = vpop.f32.mrf.mxu0
        %v2624 = vpop.f32.mrf.mxu0
        %v2625 = vpop.f32.mrf.mxu0
        %2626 = vdwg.mxu0
        %v2627 = vmul.f32 %v2622, 0.5
        %v2628 = vmul.f32 %v2622, 0.044715
        %v2629 = vmul.f32 %v2628, %v2622
        %v2630 = vmul.f32 %v2629, %v2622
        %v2631 = vadd.f32 %v2622, %v2630
        %v2632 = vmul.f32 %v2631, 0.7978846
        %v2633 = vtanh.pop %v2632
        %v2634 = vadd.f32 %v2633, 1.0
        %v2635 = vmul.f32 %v2627, %v2634
        %v2636 = vpack.c.bf16 %v2635, %v2635
        %v2638 = vlaneseq
        %v2639 = vshrl.u32 %v2638, 7
        %v2640 = vsub.s32 0, %v2639
        %v2641 = vrot.slane %v1405, %v2640
        %v2651 = vunpack.c.l.b16 %v1397
        %v2652 = vunpack.c.l.b16 %v1398
        %v2653 = vunpack.c.l.b16 %v1399
        %v2654 = vunpack.c.l.b16 %v1400
        %v2655 = vunpack.c.l.b16 %v1401
        %v2656 = vunpack.c.l.b16 %v1402
        %v2657 = vunpack.c.l.b16 %v1403
        %v2658 = vunpack.c.l.b16 %v1404
        %v2659 = vpack.c.b16 %v2652, %v2651
        %v2660 = vpack.c.b16 %v2654, %v2653
        %v2661 = vpack.c.b16 %v2656, %v2655
        %v2662 = vpack.c.b16 %v2658, %v2657
        %v2668 = vsel %vm2015, %v2636, 0
        %2670 = vmatprep.subr.bf16.mxu0 0
        %2671 = vmatpush1.bf16.msra.mxu0 0
        %2672 = vmatprep.subr.bf16.mxu0 0
        %2673 = vmatpush1.bf16.msra.mxu0 0
        %2674 = vmatprep.subr.bf16.mxu0 0
        %2675 = vmatpush1.bf16.msra.mxu0 0
        %2676 = vmatprep.subr.bf16.mxu0 0
        %2677 = vmatpush1.bf16.msra.mxu0 0
        %2678 = vmatprep.subr.bf16.mxu0 0
        %2679 = vmatpush1.bf16.msra.mxu0 %v2662
        %2680 = vmatprep.subr.bf16.mxu0 0
        %2681 = vmatpush1.bf16.msra.mxu0 %v2661
        %2682 = vmatprep.subr.bf16.mxu0 0
        %2683 = vmatpush1.bf16.msra.mxu0 %v2660
        %2684 = vmatprep.subr.bf16.mxu0 0
        %2685 = vmatpush1.bf16.msra.mxu0 %v2659
        %2686 = vmatprep.subr.bf16.mxu0 0
        %2687 = vmatpush2.bf16.msra.mxu0 0
        %2688 = vmatprep.subr.bf16.mxu0 0
        %2689 = vmatpush2.bf16.msra.mxu0 0
        %2690 = vmatprep.subr.bf16.mxu0 0
        %2691 = vmatpush2.bf16.msra.mxu0 0
        %2692 = vmatprep.subr.bf16.mxu0 0
        %2693 = vmatpush2.bf16.msra.mxu0 0
        %2694 = vmatprep.subr.bf16.mxu0 0
        %2695 = vmatpush2.bf16.msra.mxu0 0
        %2696 = vmatprep.subr.bf16.mxu0 0
        %2697 = vmatpush2.bf16.msra.mxu0 0
        %2698 = vmatprep.subr.bf16.mxu0 0
        %2699 = vmatpush2.bf16.msra.mxu0 0
        %2700 = vmatprep.subr.bf16.mxu0 0
        %2701 = vmatpush2.bf16.msra.mxu0 0
        %2702 = vmatprep.mubr.bf16.mxu0 0
        %2703 = vmatmul.mubr.bf16.gmra.mxu0 %v2668
        %v2704 = vpop.f32.mrf.mxu0
        %v2705 = vadd.f32 %v2641, %v2704
        %v2706 = vpop.f32.mrf.mxu0
        %v2707 = vpop.f32.mrf.mxu0
        %v2708 = vpop.f32.mrf.mxu0
        %2709 = vdwg.mxu0
        %v2710 = vadd.f32 %v2564, %v2705
        %v2711 = vsel %vm1435, %v2710, 0.0
        %2712 = vadd.xlane.f32.xlu0 %v2711
        %v2713 = vpop.xlane.xlu0 %2712
        %v2714 = vmul.f32 %v2710, %v2710
        %v2715 = vsel %vm1435, %v2714, 0.0
        %2716 = vadd.xlane.f32.xlu0 %v2715
        %v2717 = vpop.xlane.xlu0 %2716
        %v2718 = vmul.f32 %v2713, %v1890
        %v2719 = vmul.f32 %v2717, %v1890
        %v2720 = vmul.f32 %v2718, %v2718
        %v2721 = vsub.f32 %v2719, %v2720
        %v2722 = vadd.f32 %v2721, 1e-05
        %v2723 = vrsqrt.pop %v2722
        %v2724 = vsub.f32 %v2710, %v2718
        %v2725 = vmul.f32 %v2724, %v2723
        %v2727 = vlaneseq
        %v2728 = vshrl.u32 %v2727, 7
        %v2729 = vsub.s32 0, %v2728
        %v2730 = vrot.slane %v1406, %v2729
        %v2732 = vmul.f32 %v2725, %v2730
        %v2734 = vlaneseq
        %v2735 = vshrl.u32 %v2734, 7
        %v2736 = vsub.s32 0, %v2735
        %v2737 = vrot.slane %v1407, %v2736
        %v2739 = vadd.f32 %v2732, %v2737
        %v2740 = vsel %vm1435, %v2739, 0.0
        %2741 = vadd.xlane.f32.xlu0 %v2740
        %v2742 = vpop.xlane.xlu0 %2741
        %v2743 = vmul.f32 %v2739, %v2739
        %v2744 = vsel %vm1435, %v2743, 0.0
        %2745 = vadd.xlane.f32.xlu0 %v2744
        %v2746 = vpop.xlane.xlu0 %2745
        %v2747 = vmul.f32 %v2742, %v1890
        %v2748 = vmul.f32 %v2746, %v1890
        %v2749 = vmul.f32 %v2747, %v2747
        %v2750 = vsub.f32 %v2748, %v2749
        %v2751 = vadd.f32 %v2750, 1e-05
        %v2752 = vrsqrt.pop %v2751
        %v2753 = vsub.f32 %v2739, %v2747
        %v2754 = vmul.f32 %v2753, %v2752
        %v2756 = vlaneseq
        %v2757 = vshrl.u32 %v2756, 7
        %v2758 = vsub.s32 0, %v2757
        %v2759 = vrot.slane %v1408, %v2758
        %v2761 = vmul.f32 %v2754, %v2759
        %v2763 = vlaneseq
        %v2764 = vshrl.u32 %v2763, 7
        %v2765 = vsub.s32 0, %v2764
        %v2766 = vrot.slane %v1409, %v2765
        %v2768 = vadd.f32 %v2761, %v2766
        %2769 = vst.msk [vmem:[%s1322] sm:$0xff] %vm1435, %v2768
        %s2770 = sand.u32 %s892, 1
        %s2771 = scalar_lea.sflag [#allocation4], %s2770
        %s2772 = sand.u32 %s892, 1
        %s2773 = smul.addr %s2772, 8
        %s2774 = scalar_lea.vmem [#allocation26], %s2773
        // Predicated region
        $region229: #{tpu_custom_call.1} parent=167 // pred_check
          %p2775 = pneg %p902
        $region230: #{tpu_custom_call.1} parent=167 // pred_check_branch
          %2777 = sbr.rel (%p2775) target = $region232
        $region231: #{tpu_custom_call.1} parent=167 // pred_region
          %s2779 = ssub.s32 128, 128
          %2780 = vsyncadd %s2771, %s2779
          %s2781 = smul.addr %s97, 128
          %s2782 = scalar_lea.hbm %s75, %s2781
          %s2784 = sshll.u32 %s2774, 4
          %s2785 = int_to_ptr.vmem [resolvable:$true] %s2784
          %2787 = dma.vmem_to_hbm [thread:$0]  %s2785, 128, %s2782, %s2771
        $region232: #{tpu_custom_call.1} parent=167 // pred_fallthru
          _
      $region168: #{tpu_custom_call.1} parent=5 // pred_fallthru
        _
      %p2788 = scmp.le.s32.totalorder 2, %s92
      // Predicated region
      $region233: #{tpu_custom_call.1} parent=5 // pred_check
        %p2789 = pneg %p2788
      $region234: #{tpu_custom_call.1} parent=5 // pred_check_branch
        %2791 = sbr.rel (%p2789) target = $region236
      $region235: #{tpu_custom_call.1} parent=5 // pred_region
        %s2792 = ssub.s32 %s92, 2
        // Predicated region
        $region237: #{tpu_custom_call.1} parent=235 // pred_check
          %p2793 = pneg %p908
        $region238: #{tpu_custom_call.1} parent=235 // pred_check_branch
          %2795 = sbr.rel (%p2793) target = $region240
        $region239: #{tpu_custom_call.1} parent=235 // pred_region
          %s2796 = sand.u32 %s893, 1
          %s2797 = scalar_lea.sflag [#allocation4], %s2796
          %s2798 = sand.u32 %s893, 1
          %s2799 = smul.addr %s2798, 8
          %s2800 = scalar_lea.vmem [#allocation26], %s2799
          %2801 = dma.done %s2797, 128
        $region240: #{tpu_custom_call.1} parent=235 // pred_fallthru
          _
      $region236: #{tpu_custom_call.1} parent=5 // pred_fallthru
        _
    $region6: #{tpu_custom_call.1} parent=1 // loop_footer
      %s96 = sadd.s32 1, %s92
    $region7: #{tpu_custom_call.1} parent=1 // loop_footer_branch
      %91 = sbr.rel target = $region3
    $region8: #{tpu_custom_call.1} parent=1 // loop_exit
      _
    %2802 = vsyncpa [#allocation3], 1
    %s2803 = scalar_lea.sflag [#allocation3], 1
    %2804 = vsyncpa %s2803, 1
    %2805 = vsyncpa [#allocation6], 1
    %2806 = vsyncpa [#allocation9], 1
    %2807 = vsyncpa [#allocation12], 1
    %2808 = vsyncpa [#allocation15], 1
    %2809 = vsyncpa [#allocation18], 1
    %2810 = vsyncpa [#allocation21], 1
    %2811 = vsyncpa [#allocation24], 1
    %2812 = vsyncpa [#allocation4], 1
    %s2813 = scalar_lea.sflag [#allocation4], 1
    %2814 = vsyncpa %s2813, 1

</llo_original>
